<compile_context>
chip_gen: v5e
topology: v5e:2x2
jax: 0.10.0
libtpu: 0.0.40
codegen_flags: <defaults>
</compile_context>

<pallas_src>
import functools

import jax
import jax.numpy as jnp
from jax.experimental import pallas as pl
from jax.experimental.pallas import tpu as pltpu


# ------------------------------ Model config -------------------------------- #
# Synthetic small config; every lane dimension is a multiple of 128.
CFG = dict(
    vocab_size=100,
    hidden=256,        # H  = 2 * 128
    n_heads=2,
    head_dim=128,      # Dh = 128 (lane-dense per-head slices)
    intermediate=512,  # I  = 4 * 128
    n_layers=2,
    max_pos=16,
    type_vocab=2,
    n_class=1,
    n_class_pad=128,   # classifier output padded to a full lane tile
)


# ------------------------------ helper math --------------------------------- #

def _ln(x, g, b):
    mu = jnp.mean(x, axis=-1, keepdims=True)
    var = jnp.mean(jnp.square(x - mu), axis=-1, keepdims=True)
    return (x - mu) * jax.lax.rsqrt(var + 1e-12) * g + b


def _gelu(x):
    # TODO(synk): exact erf-based GELU (HF RoBERTa); tanh approximation keeps
    #             the elementwise path on guaranteed Mosaic lowerings.
    c = jnp.float32(0.7978845608028654)  # sqrt(2/pi)
    return 0.5 * x * (1.0 + jnp.tanh(c * (x + 0.044715 * x * x * x)))


# ------------------------------ fused kernel -------------------------------- #

def fused_stack_kernel(emb_ref, mask_ref, embg_ref, embb_ref,
                       wqkv_ref, bqkv_ref, wo_ref, bo_ref, ln1g_ref, ln1b_ref,
                       w1_ref, b1_ref, w2_ref, b2_ref, ln2g_ref, ln2b_ref,
                       poolw_ref, poolb_ref, clfw_ref, clfb_ref,
                       logits_ref, x_sc,
                       *, n_heads, head_dim, batch, seq, scale):
    """One grid step == one transformer layer; activations resident in x_sc.

    emb_ref:    [BS, H]   f32 embedding sum (word+pos+type), pre-LayerNorm
    mask_ref:   [BS, BS]  f32 additive mask (block-diag batch isolation + pad)
    per-layer weight refs: leading L axis squeezed out by BlockSpec(None,...)
    logits_ref: [B, Npad] f32, written only on the last layer
    x_sc:       [BS, H]   f32 VMEM scratch, persists across the layer grid
    """
    l = pl.program_id(0)
    last = pl.num_programs(0) - 1
    H = n_heads * head_dim

    # ---- prologue: embedding LayerNorm (only once) ----
    @pl.when(l == 0)
    def _():
        x_sc[...] = _ln(emb_ref[...], embg_ref[...], embb_ref[...])

    x_f32 = x_sc[...]                             # [BS, H] f32 residual copy
    x_bf = x_f32.astype(jnp.bfloat16)             # MXU operand
    add_mask = mask_ref[...]                      # [BS, BS] f32

    # ---- fused QKV projection: [BS,H] @ [H,3H], bf16 MXU, f32 accumulate ----
    qkv = (jnp.dot(x_bf, wqkv_ref[...], preferred_element_type=jnp.float32)
           + bqkv_ref[...])                       # [BS, 3H] f32

    # ---- multi-head attention; heads are static lane-aligned 128-slices ----
    ctx_parts = []
    for h in range(n_heads):
        lo = h * head_dim
        qh = qkv[:, lo:lo + head_dim].astype(jnp.bfloat16)              # [BS,Dh]
        kh = qkv[:, H + lo:H + lo + head_dim].astype(jnp.bfloat16)
        vh = qkv[:, 2 * H + lo:2 * H + lo + head_dim].astype(jnp.bfloat16)

        s = jax.lax.dot_general(
            qh, kh, dimension_numbers=(((1,), (1,)), ((), ())),
            preferred_element_type=jnp.float32) * scale                 # [BS,BS]
        s = s + add_mask                          # batch isolation + key padding
        m = jnp.max(s, axis=-1, keepdims=True)
        p = jnp.exp(s - m)
        p = p / jnp.sum(p, axis=-1, keepdims=True)                      # exact

        ctx_parts.append(jnp.dot(p.astype(jnp.bfloat16), vh,
                                 preferred_element_type=jnp.float32))   # [BS,Dh]

    # Single output projection over concatenated heads (one MXU pass, K=H).
    ctx = jnp.concatenate(ctx_parts, axis=-1)                           # [BS,H]
    attn_out = (jnp.dot(ctx.astype(jnp.bfloat16), wo_ref[...],
                        preferred_element_type=jnp.float32) + bo_ref[...])

    # ---- residual add + LayerNorm 1 (f32) ----
    h1 = _ln(attn_out + x_f32, ln1g_ref[...], ln1b_ref[...])

    # ---- feed-forward: bf16 MXU matmuls, f32 GELU epilogue ----
    ff = (jnp.dot(h1.astype(jnp.bfloat16), w1_ref[...],
                  preferred_element_type=jnp.float32) + b1_ref[...])
    ff = _gelu(ff)
    ff_out = (jnp.dot(ff.astype(jnp.bfloat16), w2_ref[...],
                      preferred_element_type=jnp.float32) + b2_ref[...])

    # ---- residual add + LayerNorm 2 (f32); keep resident for next layer ----
    h2 = _ln(ff_out + h1, ln2g_ref[...], ln2b_ref[...])
    x_sc[...] = h2

    # ---- epilogue: pooler (tanh) + dropout(eval==identity) + classifier ----
    @pl.when(l == last)
    def _():
        # CLS row per batch element (rows 0, S, 2S, ... of the folded layout).
        cls = jnp.concatenate(
            [h2[b * seq:b * seq + 1, :] for b in range(batch)], axis=0)  # [B,H]
        pooled = jnp.tanh(
            jnp.dot(cls.astype(jnp.bfloat16), poolw_ref[...],
                    preferred_element_type=jnp.float32) + poolb_ref[...])
        logits_ref[...] = (
            jnp.dot(pooled.astype(jnp.bfloat16), clfw_ref[...],
                    preferred_element_type=jnp.float32) + clfb_ref[...])


# ----------------------------- Pallas wrapper -------------------------------- #

def pallas_fused_forward(emb2d, add_mask, p, *, batch, seq, cfg):
    BS, H = emb2d.shape
    L = cfg["n_layers"]
    I = cfg["intermediate"]
    Npad = cfg["n_class_pad"]

    kern = functools.partial(
        fused_stack_kernel,
        n_heads=cfg["n_heads"], head_dim=cfg["head_dim"],
        batch=batch, seq=seq, scale=1.0 / (cfg["head_dim"] ** 0.5))

    c2 = lambda l: (0, 0)        # resident constants (fetched once)
    w3 = lambda l: (l, 0, 0)     # per-layer stacked weights (prefetched)

    in_specs = [
        pl.BlockSpec((BS, H), c2),             # emb (pre-LN sum)
        pl.BlockSpec((BS, BS), c2),            # additive attention mask
        pl.BlockSpec((1, H), c2),              # emb_ln_g
        pl.BlockSpec((1, H), c2),              # emb_ln_b
        pl.BlockSpec((None, H, 3 * H), w3),    # wqkv
        pl.BlockSpec((None, 1, 3 * H), w3),    # bqkv
        pl.BlockSpec((None, H, H), w3),        # wo
        pl.BlockSpec((None, 1, H), w3),        # bo
        pl.BlockSpec((None, 1, H), w3),        # ln1_g
        pl.BlockSpec((None, 1, H), w3),        # ln1_b
        pl.BlockSpec((None, H, I), w3),        # w1
        pl.BlockSpec((None, 1, I), w3),        # b1
        pl.BlockSpec((None, I, H), w3),        # w2
        pl.BlockSpec((None, 1, H), w3),        # b2
        pl.BlockSpec((None, 1, H), w3),        # ln2_g
        pl.BlockSpec((None, 1, H), w3),        # ln2_b
        pl.BlockSpec((H, H), c2),              # pool_w
        pl.BlockSpec((1, H), c2),              # pool_b
        pl.BlockSpec((H, Npad), c2),           # clf_w_pad
        pl.BlockSpec((1, Npad), c2),           # clf_b_pad
    ]

    return pl.pallas_call(
        kern,
        out_shape=jax.ShapeDtypeStruct((batch, Npad), jnp.float32),
        grid=(L,),
        in_specs=in_specs,
        out_specs=pl.BlockSpec((batch, Npad), lambda l: (0, 0)),
        scratch_shapes=[pltpu.VMEM((BS, H), jnp.float32)],
        compiler_params=pltpu.CompilerParams(
            dimension_semantics=("arbitrary",)),
    )(emb2d, add_mask, p["emb_ln_g"], p["emb_ln_b"],
      p["wqkv"], p["bqkv"], p["wo"], p["bo"], p["ln1_g"], p["ln1_b"],
      p["w1"], p["b1"], p["w2"], p["b2"], p["ln2_g"], p["ln2_b"],
      p["pool_w"], p["pool_b"], p["clf_w_pad"], p["clf_b_pad"])


# ----------------------------- Parameter init ------------------------------- #

def init_params(key, cfg):
    H, I, L = cfg["hidden"], cfg["intermediate"], cfg["n_layers"]
    keys = iter(jax.random.split(key, 32))

    def w(shape):
        return jax.random.normal(next(keys), shape, jnp.float32) * 0.02

    def wb(shape):  # bf16 weights for MXU matmuls
        return w(shape).astype(jnp.bfloat16)

    params = {
        "word_emb": w((cfg["vocab_size"], H)),
        "pos_emb": w((cfg["max_pos"], H)),
        "type_emb": w((cfg["type_vocab"], H)),
        "emb_ln_g": jnp.ones((1, H), jnp.float32),
        "emb_ln_b": jnp.zeros((1, H), jnp.float32),
        # Per-layer weights stacked along a leading L axis (fused-stack grid).
        "wqkv": wb((L, H, 3 * H)),
        "bqkv": jnp.zeros((L, 1, 3 * H), jnp.float32),
        "wo": wb((L, H, H)),
        "bo": jnp.zeros((L, 1, H), jnp.float32),
        "ln1_g": jnp.ones((L, 1, H), jnp.float32),
        "ln1_b": jnp.zeros((L, 1, H), jnp.float32),
        "w1": wb((L, H, I)),
        "b1": jnp.zeros((L, 1, I), jnp.float32),
        "w2": wb((L, I, H)),
        "b2": jnp.zeros((L, 1, H), jnp.float32),
        "ln2_g": jnp.ones((L, 1, H), jnp.float32),
        "ln2_b": jnp.zeros((L, 1, H), jnp.float32),
        "pool_w": wb((H, H)),
        "pool_b": jnp.zeros((1, H), jnp.float32),
    }
    # Classifier padded to a full 128-lane tile; only column 0 is real.
    clf_w = w((H, cfg["n_class"]))
    clf_w_pad = jnp.zeros((H, cfg["n_class_pad"]), jnp.float32)
    clf_w_pad = clf_w_pad.at[:, : cfg["n_class"]].set(clf_w)
    params["clf_w_pad"] = clf_w_pad.astype(jnp.bfloat16)
    params["clf_b_pad"] = jnp.zeros((1, cfg["n_class_pad"]), jnp.float32)
    return params


# ------------------------------ Forward pass -------------------------------- #

def roberta_classification_forward(params, input_ids, attention_mask=None,
                                   token_type_ids=None, cfg=CFG):
    B, S = input_ids.shape
    H = cfg["hidden"]

    if attention_mask is None:
        attention_mask = jnp.ones((B, S), jnp.float32)
    if token_type_ids is None:
        token_type_ids = jnp.zeros((B, S), jnp.int32)

    # --- embeddings (tiny XLA gathers); everything else is the fused kernel ---
    # TODO(synk): HF RoBERTa offsets position ids by padding_idx+1; synthetic
    #             weights here, so positions simply start at 0.
    pos_ids = jnp.arange(S, dtype=jnp.int32)
    emb = (jnp.take(params["word_emb"], input_ids, axis=0)
           + jnp.take(params["pos_emb"], pos_ids, axis=0)[None, :, :]
           + jnp.take(params["type_emb"], token_type_ids, axis=0))   # [B,S,H] f32
    emb2d = emb.reshape(B * S, H)

    # Block-diagonal additive mask [BS, BS]: batch isolation + key padding.
    am_flat = attention_mask.astype(jnp.float32).reshape(B * S)
    batch_ids = jnp.arange(B * S, dtype=jnp.int32) // S
    same_batch = batch_ids[:, None] == batch_ids[None, :]
    add_mask = jnp.where(same_batch & (am_flat[None, :] > 0.5),
                         0.0, -1e9).astype(jnp.float32)

    # --- single fused Pallas kernel: embed-LN + L layers + pooler + classifier
    logits_pad = pallas_fused_forward(emb2d, add_mask, params,
                                      batch=B, seq=S, cfg=cfg)
    return logits_pad[:, : cfg["n_class"]]  # [B, n_class]


# ---------------------------------- main ------------------------------------ #

if __name__ == "__main__":
    key = jax.random.PRNGKey(0)
    pkey, dkey = jax.random.split(key)

    params = init_params(pkey, CFG)

    B, S = 2, 8
    input_ids = jax.random.randint(dkey, (B, S), 0, CFG["vocab_size"], jnp.int32)
    attention_mask = jnp.ones((B, S), jnp.float32)
    token_type_ids = jnp.zeros((B, S), jnp.int32)

    fwd = jax.jit(roberta_classification_forward)
    logits = fwd(params, input_ids, attention_mask, token_type_ids)
    logits = jax.block_until_ready(logits)

    assert logits.shape == (B, CFG["n_class"])
    assert bool(jnp.all(jnp.isfinite(logits)))
    print("KERNEL_OK")
</pallas_src>

<mosaic_0001>
module attributes {stable_mosaic.version = 11 : i64} {
  func.func @fused_stack_kernel(%arg0: i32, %arg1: memref<16x256xf32, #tpu.memory_space<vmem>>, %arg2: memref<16x16xf32, #tpu.memory_space<vmem>>, %arg3: memref<1x256xf32, #tpu.memory_space<vmem>>, %arg4: memref<1x256xf32, #tpu.memory_space<vmem>>, %arg5: memref<1x256x768xbf16, #tpu.memory_space<vmem>>, %arg6: memref<1x1x768xf32, #tpu.memory_space<vmem>>, %arg7: memref<1x256x256xbf16, #tpu.memory_space<vmem>>, %arg8: memref<1x1x256xf32, #tpu.memory_space<vmem>>, %arg9: memref<1x1x256xf32, #tpu.memory_space<vmem>>, %arg10: memref<1x1x256xf32, #tpu.memory_space<vmem>>, %arg11: memref<1x256x512xbf16, #tpu.memory_space<vmem>>, %arg12: memref<1x1x512xf32, #tpu.memory_space<vmem>>, %arg13: memref<1x512x256xbf16, #tpu.memory_space<vmem>>, %arg14: memref<1x1x256xf32, #tpu.memory_space<vmem>>, %arg15: memref<1x1x256xf32, #tpu.memory_space<vmem>>, %arg16: memref<1x1x256xf32, #tpu.memory_space<vmem>>, %arg17: memref<256x256xbf16, #tpu.memory_space<vmem>>, %arg18: memref<1x256xf32, #tpu.memory_space<vmem>>, %arg19: memref<256x128xbf16, #tpu.memory_space<vmem>>, %arg20: memref<1x128xf32, #tpu.memory_space<vmem>>, %arg21: memref<2x128xf32, #tpu.memory_space<vmem>>, %arg22: memref<16x256xf32, #tpu.memory_space<vmem>>) attributes {dimension_semantics = [#tpu.dimension_semantics<arbitrary>], iteration_bounds = array<i64: 2>, scalar_prefetch = 0 : i64, scratch_operands = 1 : i64, tpu.core_type = #tpu.core_type<tc>, window_params = [{pipeline_mode = #tpu.pipeline_mode<synchronous>, transform_indices = @transform_0, window_bounds = array<i64: 16, 256>}, {pipeline_mode = #tpu.pipeline_mode<synchronous>, transform_indices = @transform_1, window_bounds = array<i64: 16, 16>}, {pipeline_mode = #tpu.pipeline_mode<synchronous>, transform_indices = @transform_2, window_bounds = array<i64: 1, 256>}, {pipeline_mode = #tpu.pipeline_mode<synchronous>, transform_indices = @transform_3, window_bounds = array<i64: 1, 256>}, {transform_indices = @transform_4, window_bounds = array<i64: 1, 256, 768>}, {transform_indices = @transform_5, window_bounds = array<i64: 1, 1, 768>}, {transform_indices = @transform_6, window_bounds = array<i64: 1, 256, 256>}, {transform_indices = @transform_7, window_bounds = array<i64: 1, 1, 256>}, {transform_indices = @transform_8, window_bounds = array<i64: 1, 1, 256>}, {transform_indices = @transform_9, window_bounds = array<i64: 1, 1, 256>}, {transform_indices = @transform_10, window_bounds = array<i64: 1, 256, 512>}, {transform_indices = @transform_11, window_bounds = array<i64: 1, 1, 512>}, {transform_indices = @transform_12, window_bounds = array<i64: 1, 512, 256>}, {transform_indices = @transform_13, window_bounds = array<i64: 1, 1, 256>}, {transform_indices = @transform_14, window_bounds = array<i64: 1, 1, 256>}, {transform_indices = @transform_15, window_bounds = array<i64: 1, 1, 256>}, {pipeline_mode = #tpu.pipeline_mode<synchronous>, transform_indices = @transform_16, window_bounds = array<i64: 256, 256>}, {pipeline_mode = #tpu.pipeline_mode<synchronous>, transform_indices = @transform_17, window_bounds = array<i64: 1, 256>}, {pipeline_mode = #tpu.pipeline_mode<synchronous>, transform_indices = @transform_18, window_bounds = array<i64: 256, 128>}, {pipeline_mode = #tpu.pipeline_mode<synchronous>, transform_indices = @transform_19, window_bounds = array<i64: 1, 128>}, {pipeline_mode = #tpu.pipeline_mode<synchronous>, transform_indices = @transform_20, window_bounds = array<i64: 2, 128>}]} {
    %c0_i32 = arith.constant 0 : i32
    %0 = arith.cmpi eq, %arg0, %c0_i32 : i32
    %1 = arith.extui %0 : i1 to i32
    %c0_i32_0 = arith.constant 0 : i32
    %2 = arith.cmpi ne, %1, %c0_i32_0 : i32
    scf.if %2 {
      %c0_70 = arith.constant 0 : index
      %c0_71 = arith.constant 0 : index
      %151 = vector.load %arg1[%c0_70, %c0_71] : memref<16x256xf32, #tpu.memory_space<vmem>>, vector<16x256xf32>
      %c0_72 = arith.constant 0 : index
      %c0_73 = arith.constant 0 : index
      %152 = vector.load %arg3[%c0_72, %c0_73] : memref<1x256xf32, #tpu.memory_space<vmem>>, vector<1x256xf32>
      %c0_74 = arith.constant 0 : index
      %c0_75 = arith.constant 0 : index
      %153 = vector.load %arg4[%c0_74, %c0_75] : memref<1x256xf32, #tpu.memory_space<vmem>>, vector<1x256xf32>
      %cst_76 = arith.constant dense<0.000000e+00> : vector<16xf32>
      %154 = vector.multi_reduction <add>, %151, %cst_76 [1] : vector<16x256xf32> to vector<16xf32>
      %155 = vector.shape_cast %154 : vector<16xf32> to vector<16x1xf32>
      %cst_77 = arith.constant 2.560000e+02 : f32
      %156 = vector.broadcast %cst_77 : f32 to vector<16x1xf32>
      %157 = arith.divf %155, %156 : vector<16x1xf32>
      %158 = vector.broadcast %157 : vector<16x1xf32> to vector<16x256xf32>
      %159 = arith.subf %151, %158 : vector<16x256xf32>
      %160 = arith.mulf %159, %159 : vector<16x256xf32>
      %cst_78 = arith.constant dense<0.000000e+00> : vector<16xf32>
      %161 = vector.multi_reduction <add>, %160, %cst_78 [1] : vector<16x256xf32> to vector<16xf32>
      %162 = vector.shape_cast %161 : vector<16xf32> to vector<16x1xf32>
      %cst_79 = arith.constant 2.560000e+02 : f32
      %163 = vector.broadcast %cst_79 : f32 to vector<16x1xf32>
      %164 = arith.divf %162, %163 : vector<16x1xf32>
      %165 = vector.broadcast %157 : vector<16x1xf32> to vector<16x256xf32>
      %166 = arith.subf %151, %165 : vector<16x256xf32>
      %cst_80 = arith.constant 9.99999996E-13 : f32
      %167 = vector.broadcast %cst_80 : f32 to vector<16x1xf32>
      %168 = arith.addf %164, %167 : vector<16x1xf32>
      %169 = math.rsqrt %168 : vector<16x1xf32>
      %170 = vector.broadcast %169 : vector<16x1xf32> to vector<16x256xf32>
      %171 = arith.mulf %166, %170 : vector<16x256xf32>
      %172 = vector.broadcast %152 : vector<1x256xf32> to vector<16x256xf32>
      %173 = arith.mulf %171, %172 : vector<16x256xf32>
      %174 = vector.broadcast %153 : vector<1x256xf32> to vector<16x256xf32>
      %175 = arith.addf %173, %174 : vector<16x256xf32>
      %c0_81 = arith.constant 0 : index
      %c0_82 = arith.constant 0 : index
      %176 = vector.load %arg22[%c0_81, %c0_82] : memref<16x256xf32, #tpu.memory_space<vmem>>, vector<16x256xf32>
      tpu.vector_store %arg22[%c0_81, %c0_82], %175 {strides = array<i32>} : memref<16x256xf32, #tpu.memory_space<vmem>>, vector<16x256xf32>,
    } else {
    }
    %c0 = arith.constant 0 : index
    %c0_1 = arith.constant 0 : index
    %3 = vector.load %arg22[%c0, %c0_1] : memref<16x256xf32, #tpu.memory_space<vmem>>, vector<16x256xf32>
    %4 = arith.truncf %3 : vector<16x256xf32> to vector<16x256xbf16>
    %c0_2 = arith.constant 0 : index
    %c0_3 = arith.constant 0 : index
    %5 = vector.load %arg2[%c0_2, %c0_3] : memref<16x16xf32, #tpu.memory_space<vmem>>, vector<16x16xf32>
    %c0_4 = arith.constant 0 : index
    %c0_5 = arith.constant 0 : index
    %c0_6 = arith.constant 0 : index
    %6 = vector.load %arg5[%c0_4, %c0_5, %c0_6] : memref<1x256x768xbf16, #tpu.memory_space<vmem>>, vector<1x256x768xbf16>
    %7 = vector.shape_cast %6 : vector<1x256x768xbf16> to vector<256x768xbf16>
    %cst = arith.constant dense<0.000000e+00> : vector<16x768xf32>
    %8 = tpu.matmul %4, %7, %cst {dimension_numbers = #tpu.dot_dimension_numbers<[1], [0], [0], [1], [0, 0, 1, 1], [], []>} : vector<16x256xbf16>, vector<256x768xbf16>, vector<16x768xf32> -> vector<16x768xf32>
    %c0_7 = arith.constant 0 : index
    %c0_8 = arith.constant 0 : index
    %c0_9 = arith.constant 0 : index
    %9 = vector.load %arg6[%c0_7, %c0_8, %c0_9] : memref<1x1x768xf32, #tpu.memory_space<vmem>>, vector<1x1x768xf32>
    %10 = vector.shape_cast %9 : vector<1x1x768xf32> to vector<1x768xf32>
    %11 = vector.broadcast %10 : vector<1x768xf32> to vector<16x768xf32>
    %12 = arith.addf %8, %11 : vector<16x768xf32>
    %13 = vector.extract_strided_slice %12 {offsets = [0, 0], sizes = [16, 128], strides = [1, 1]} : vector<16x768xf32> to vector<16x128xf32>
    %14 = arith.truncf %13 : vector<16x128xf32> to vector<16x128xbf16>
    %15 = vector.extract_strided_slice %12 {offsets = [0, 256], sizes = [16, 128], strides = [1, 1]} : vector<16x768xf32> to vector<16x128xf32>
    %16 = arith.truncf %15 : vector<16x128xf32> to vector<16x128xbf16>
    %17 = vector.extract_strided_slice %12 {offsets = [0, 512], sizes = [16, 128], strides = [1, 1]} : vector<16x768xf32> to vector<16x128xf32>
    %18 = arith.truncf %17 : vector<16x128xf32> to vector<16x128xbf16>
    %cst_10 = arith.constant dense<0.000000e+00> : vector<16x16xf32>
    %19 = tpu.matmul %14, %16, %cst_10 {dimension_numbers = #tpu.dot_dimension_numbers<[1], [1], [0], [0], [0, 0, 1, 0], [], []>} : vector<16x128xbf16>, vector<16x128xbf16>, vector<16x16xf32> -> vector<16x16xf32>
    %cst_11 = arith.constant 0.0883883461 : f32
    %20 = vector.broadcast %cst_11 : f32 to vector<16x16xf32>
    %21 = arith.mulf %19, %20 : vector<16x16xf32>
    %22 = arith.addf %21, %5 : vector<16x16xf32>
    %cst_12 = arith.constant dense<0xFF800000> : vector<16xf32>
    %23 = vector.multi_reduction <maximumf>, %22, %cst_12 [1] : vector<16x16xf32> to vector<16xf32>
    %24 = vector.shape_cast %23 : vector<16xf32> to vector<16x1xf32>
    %25 = vector.broadcast %24 : vector<16x1xf32> to vector<16x16xf32>
    %26 = arith.subf %22, %25 : vector<16x16xf32>
    %27 = math.exp %26 : vector<16x16xf32>
    %cst_13 = arith.constant dense<0.000000e+00> : vector<16xf32>
    %28 = vector.multi_reduction <add>, %27, %cst_13 [1] : vector<16x16xf32> to vector<16xf32>
    %29 = vector.shape_cast %28 : vector<16xf32> to vector<16x1xf32>
    %30 = vector.broadcast %29 : vector<16x1xf32> to vector<16x16xf32>
    %31 = arith.divf %27, %30 : vector<16x16xf32>
    %32 = arith.truncf %31 : vector<16x16xf32> to vector<16x16xbf16>
    %cst_14 = arith.constant dense<0.000000e+00> : vector<16x128xf32>
    %33 = tpu.matmul %32, %18, %cst_14 {dimension_numbers = #tpu.dot_dimension_numbers<[1], [0], [0], [1], [0, 0, 1, 1], [], []>} : vector<16x16xbf16>, vector<16x128xbf16>, vector<16x128xf32> -> vector<16x128xf32>
    %34 = vector.extract_strided_slice %12 {offsets = [0, 128], sizes = [16, 128], strides = [1, 1]} : vector<16x768xf32> to vector<16x128xf32>
    %35 = arith.truncf %34 : vector<16x128xf32> to vector<16x128xbf16>
    %36 = vector.extract_strided_slice %12 {offsets = [0, 384], sizes = [16, 128], strides = [1, 1]} : vector<16x768xf32> to vector<16x128xf32>
    %37 = arith.truncf %36 : vector<16x128xf32> to vector<16x128xbf16>
    %38 = vector.extract_strided_slice %12 {offsets = [0, 640], sizes = [16, 128], strides = [1, 1]} : vector<16x768xf32> to vector<16x128xf32>
    %39 = arith.truncf %38 : vector<16x128xf32> to vector<16x128xbf16>
    %cst_15 = arith.constant dense<0.000000e+00> : vector<16x16xf32>
    %40 = tpu.matmul %35, %37, %cst_15 {dimension_numbers = #tpu.dot_dimension_numbers<[1], [1], [0], [0], [0, 0, 1, 0], [], []>} : vector<16x128xbf16>, vector<16x128xbf16>, vector<16x16xf32> -> vector<16x16xf32>
    %cst_16 = arith.constant 0.0883883461 : f32
    %41 = vector.broadcast %cst_16 : f32 to vector<16x16xf32>
    %42 = arith.mulf %40, %41 : vector<16x16xf32>
    %43 = arith.addf %42, %5 : vector<16x16xf32>
    %cst_17 = arith.constant dense<0xFF800000> : vector<16xf32>
    %44 = vector.multi_reduction <maximumf>, %43, %cst_17 [1] : vector<16x16xf32> to vector<16xf32>
    %45 = vector.shape_cast %44 : vector<16xf32> to vector<16x1xf32>
    %46 = vector.broadcast %45 : vector<16x1xf32> to vector<16x16xf32>
    %47 = arith.subf %43, %46 : vector<16x16xf32>
    %48 = math.exp %47 : vector<16x16xf32>
    %cst_18 = arith.constant dense<0.000000e+00> : vector<16xf32>
    %49 = vector.multi_reduction <add>, %48, %cst_18 [1] : vector<16x16xf32> to vector<16xf32>
    %50 = vector.shape_cast %49 : vector<16xf32> to vector<16x1xf32>
    %51 = vector.broadcast %50 : vector<16x1xf32> to vector<16x16xf32>
    %52 = arith.divf %48, %51 : vector<16x16xf32>
    %53 = arith.truncf %52 : vector<16x16xf32> to vector<16x16xbf16>
    %cst_19 = arith.constant dense<0.000000e+00> : vector<16x128xf32>
    %54 = tpu.matmul %53, %39, %cst_19 {dimension_numbers = #tpu.dot_dimension_numbers<[1], [0], [0], [1], [0, 0, 1, 1], [], []>} : vector<16x16xbf16>, vector<16x128xbf16>, vector<16x128xf32> -> vector<16x128xf32>
    %55 = tpu.concatenate %33, %54 in 1 : vector<16x128xf32>, vector<16x128xf32> -> vector<16x256xf32>
    %56 = arith.truncf %55 : vector<16x256xf32> to vector<16x256xbf16>
    %c0_20 = arith.constant 0 : index
    %c0_21 = arith.constant 0 : index
    %c0_22 = arith.constant 0 : index
    %57 = vector.load %arg7[%c0_20, %c0_21, %c0_22] : memref<1x256x256xbf16, #tpu.memory_space<vmem>>, vector<1x256x256xbf16>
    %58 = vector.shape_cast %57 : vector<1x256x256xbf16> to vector<256x256xbf16>
    %cst_23 = arith.constant dense<0.000000e+00> : vector<16x256xf32>
    %59 = tpu.matmul %56, %58, %cst_23 {dimension_numbers = #tpu.dot_dimension_numbers<[1], [0], [0], [1], [0, 0, 1, 1], [], []>} : vector<16x256xbf16>, vector<256x256xbf16>, vector<16x256xf32> -> vector<16x256xf32>
    %c0_24 = arith.constant 0 : index
    %c0_25 = arith.constant 0 : index
    %c0_26 = arith.constant 0 : index
    %60 = vector.load %arg8[%c0_24, %c0_25, %c0_26] : memref<1x1x256xf32, #tpu.memory_space<vmem>>, vector<1x1x256xf32>
    %61 = vector.shape_cast %60 : vector<1x1x256xf32> to vector<1x256xf32>
    %62 = vector.broadcast %61 : vector<1x256xf32> to vector<16x256xf32>
    %63 = arith.addf %59, %62 : vector<16x256xf32>
    %64 = arith.addf %63, %3 : vector<16x256xf32>
    %c0_27 = arith.constant 0 : index
    %c0_28 = arith.constant 0 : index
    %c0_29 = arith.constant 0 : index
    %65 = vector.load %arg9[%c0_27, %c0_28, %c0_29] : memref<1x1x256xf32, #tpu.memory_space<vmem>>, vector<1x1x256xf32>
    %66 = vector.shape_cast %65 : vector<1x1x256xf32> to vector<1x256xf32>
    %c0_30 = arith.constant 0 : index
    %c0_31 = arith.constant 0 : index
    %c0_32 = arith.constant 0 : index
    %67 = vector.load %arg10[%c0_30, %c0_31, %c0_32] : memref<1x1x256xf32, #tpu.memory_space<vmem>>, vector<1x1x256xf32>
    %68 = vector.shape_cast %67 : vector<1x1x256xf32> to vector<1x256xf32>
    %cst_33 = arith.constant dense<0.000000e+00> : vector<16xf32>
    %69 = vector.multi_reduction <add>, %64, %cst_33 [1] : vector<16x256xf32> to vector<16xf32>
    %70 = vector.shape_cast %69 : vector<16xf32> to vector<16x1xf32>
    %cst_34 = arith.constant 2.560000e+02 : f32
    %71 = vector.broadcast %cst_34 : f32 to vector<16x1xf32>
    %72 = arith.divf %70, %71 : vector<16x1xf32>
    %73 = vector.broadcast %72 : vector<16x1xf32> to vector<16x256xf32>
    %74 = arith.subf %64, %73 : vector<16x256xf32>
    %75 = arith.mulf %74, %74 : vector<16x256xf32>
    %cst_35 = arith.constant dense<0.000000e+00> : vector<16xf32>
    %76 = vector.multi_reduction <add>, %75, %cst_35 [1] : vector<16x256xf32> to vector<16xf32>
    %77 = vector.shape_cast %76 : vector<16xf32> to vector<16x1xf32>
    %cst_36 = arith.constant 2.560000e+02 : f32
    %78 = vector.broadcast %cst_36 : f32 to vector<16x1xf32>
    %79 = arith.divf %77, %78 : vector<16x1xf32>
    %80 = vector.broadcast %72 : vector<16x1xf32> to vector<16x256xf32>
    %81 = arith.subf %64, %80 : vector<16x256xf32>
    %cst_37 = arith.constant 9.99999996E-13 : f32
    %82 = vector.broadcast %cst_37 : f32 to vector<16x1xf32>
    %83 = arith.addf %79, %82 : vector<16x1xf32>
    %84 = math.rsqrt %83 : vector<16x1xf32>
    %85 = vector.broadcast %84 : vector<16x1xf32> to vector<16x256xf32>
    %86 = arith.mulf %81, %85 : vector<16x256xf32>
    %87 = vector.broadcast %66 : vector<1x256xf32> to vector<16x256xf32>
    %88 = arith.mulf %86, %87 : vector<16x256xf32>
    %89 = vector.broadcast %68 : vector<1x256xf32> to vector<16x256xf32>
    %90 = arith.addf %88, %89 : vector<16x256xf32>
    %91 = arith.truncf %90 : vector<16x256xf32> to vector<16x256xbf16>
    %c0_38 = arith.constant 0 : index
    %c0_39 = arith.constant 0 : index
    %c0_40 = arith.constant 0 : index
    %92 = vector.load %arg11[%c0_38, %c0_39, %c0_40] : memref<1x256x512xbf16, #tpu.memory_space<vmem>>, vector<1x256x512xbf16>
    %93 = vector.shape_cast %92 : vector<1x256x512xbf16> to vector<256x512xbf16>
    %cst_41 = arith.constant dense<0.000000e+00> : vector<16x512xf32>
    %94 = tpu.matmul %91, %93, %cst_41 {dimension_numbers = #tpu.dot_dimension_numbers<[1], [0], [0], [1], [0, 0, 1, 1], [], []>} : vector<16x256xbf16>, vector<256x512xbf16>, vector<16x512xf32> -> vector<16x512xf32>
    %c0_42 = arith.constant 0 : index
    %c0_43 = arith.constant 0 : index
    %c0_44 = arith.constant 0 : index
    %95 = vector.load %arg12[%c0_42, %c0_43, %c0_44] : memref<1x1x512xf32, #tpu.memory_space<vmem>>, vector<1x1x512xf32>
    %96 = vector.shape_cast %95 : vector<1x1x512xf32> to vector<1x512xf32>
    %97 = vector.broadcast %96 : vector<1x512xf32> to vector<16x512xf32>
    %98 = arith.addf %94, %97 : vector<16x512xf32>
    %cst_45 = arith.constant 5.000000e-01 : f32
    %99 = vector.broadcast %cst_45 : f32 to vector<16x512xf32>
    %100 = arith.mulf %99, %98 : vector<16x512xf32>
    %cst_46 = arith.constant 4.471500e-02 : f32
    %101 = vector.broadcast %cst_46 : f32 to vector<16x512xf32>
    %102 = arith.mulf %101, %98 : vector<16x512xf32>
    %103 = arith.mulf %102, %98 : vector<16x512xf32>
    %104 = arith.mulf %103, %98 : vector<16x512xf32>
    %105 = arith.addf %98, %104 : vector<16x512xf32>
    %cst_47 = arith.constant 0.797884583 : f32
    %106 = vector.broadcast %cst_47 : f32 to vector<16x512xf32>
    %107 = arith.mulf %106, %105 : vector<16x512xf32>
    %108 = math.tanh %107 : vector<16x512xf32>
    %cst_48 = arith.constant 1.000000e+00 : f32
    %109 = vector.broadcast %cst_48 : f32 to vector<16x512xf32>
    %110 = arith.addf %109, %108 : vector<16x512xf32>
    %111 = arith.mulf %100, %110 : vector<16x512xf32>
    %112 = arith.truncf %111 : vector<16x512xf32> to vector<16x512xbf16>
    %c0_49 = arith.constant 0 : index
    %c0_50 = arith.constant 0 : index
    %c0_51 = arith.constant 0 : index
    %113 = vector.load %arg13[%c0_49, %c0_50, %c0_51] : memref<1x512x256xbf16, #tpu.memory_space<vmem>>, vector<1x512x256xbf16>
    %114 = vector.shape_cast %113 : vector<1x512x256xbf16> to vector<512x256xbf16>
    %cst_52 = arith.constant dense<0.000000e+00> : vector<16x256xf32>
    %115 = tpu.matmul %112, %114, %cst_52 {dimension_numbers = #tpu.dot_dimension_numbers<[1], [0], [0], [1], [0, 0, 1, 1], [], []>} : vector<16x512xbf16>, vector<512x256xbf16>, vector<16x256xf32> -> vector<16x256xf32>
    %c0_53 = arith.constant 0 : index
    %c0_54 = arith.constant 0 : index
    %c0_55 = arith.constant 0 : index
    %116 = vector.load %arg14[%c0_53, %c0_54, %c0_55] : memref<1x1x256xf32, #tpu.memory_space<vmem>>, vector<1x1x256xf32>
    %117 = vector.shape_cast %116 : vector<1x1x256xf32> to vector<1x256xf32>
    %118 = vector.broadcast %117 : vector<1x256xf32> to vector<16x256xf32>
    %119 = arith.addf %115, %118 : vector<16x256xf32>
    %120 = arith.addf %119, %90 : vector<16x256xf32>
    %c0_56 = arith.constant 0 : index
    %c0_57 = arith.constant 0 : index
    %c0_58 = arith.constant 0 : index
    %121 = vector.load %arg15[%c0_56, %c0_57, %c0_58] : memref<1x1x256xf32, #tpu.memory_space<vmem>>, vector<1x1x256xf32>
    %122 = vector.shape_cast %121 : vector<1x1x256xf32> to vector<1x256xf32>
    %c0_59 = arith.constant 0 : index
    %c0_60 = arith.constant 0 : index
    %c0_61 = arith.constant 0 : index
    %123 = vector.load %arg16[%c0_59, %c0_60, %c0_61] : memref<1x1x256xf32, #tpu.memory_space<vmem>>, vector<1x1x256xf32>
    %124 = vector.shape_cast %123 : vector<1x1x256xf32> to vector<1x256xf32>
    %cst_62 = arith.constant dense<0.000000e+00> : vector<16xf32>
    %125 = vector.multi_reduction <add>, %120, %cst_62 [1] : vector<16x256xf32> to vector<16xf32>
    %126 = vector.shape_cast %125 : vector<16xf32> to vector<16x1xf32>
    %cst_63 = arith.constant 2.560000e+02 : f32
    %127 = vector.broadcast %cst_63 : f32 to vector<16x1xf32>
    %128 = arith.divf %126, %127 : vector<16x1xf32>
    %129 = vector.broadcast %128 : vector<16x1xf32> to vector<16x256xf32>
    %130 = arith.subf %120, %129 : vector<16x256xf32>
    %131 = arith.mulf %130, %130 : vector<16x256xf32>
    %cst_64 = arith.constant dense<0.000000e+00> : vector<16xf32>
    %132 = vector.multi_reduction <add>, %131, %cst_64 [1] : vector<16x256xf32> to vector<16xf32>
    %133 = vector.shape_cast %132 : vector<16xf32> to vector<16x1xf32>
    %cst_65 = arith.constant 2.560000e+02 : f32
    %134 = vector.broadcast %cst_65 : f32 to vector<16x1xf32>
    %135 = arith.divf %133, %134 : vector<16x1xf32>
    %136 = vector.broadcast %128 : vector<16x1xf32> to vector<16x256xf32>
    %137 = arith.subf %120, %136 : vector<16x256xf32>
    %cst_66 = arith.constant 9.99999996E-13 : f32
    %138 = vector.broadcast %cst_66 : f32 to vector<16x1xf32>
    %139 = arith.addf %135, %138 : vector<16x1xf32>
    %140 = math.rsqrt %139 : vector<16x1xf32>
    %141 = vector.broadcast %140 : vector<16x1xf32> to vector<16x256xf32>
    %142 = arith.mulf %137, %141 : vector<16x256xf32>
    %143 = vector.broadcast %122 : vector<1x256xf32> to vector<16x256xf32>
    %144 = arith.mulf %142, %143 : vector<16x256xf32>
    %145 = vector.broadcast %124 : vector<1x256xf32> to vector<16x256xf32>
    %146 = arith.addf %144, %145 : vector<16x256xf32>
    %c0_67 = arith.constant 0 : index
    %c0_68 = arith.constant 0 : index
    %147 = vector.load %arg22[%c0_67, %c0_68] : memref<16x256xf32, #tpu.memory_space<vmem>>, vector<16x256xf32>
    tpu.vector_store %arg22[%c0_67, %c0_68], %146 {strides = array<i32>} : memref<16x256xf32, #tpu.memory_space<vmem>>, vector<16x256xf32>,
    %c1_i32 = arith.constant 1 : i32
    %148 = arith.cmpi eq, %arg0, %c1_i32 : i32
    %149 = arith.extui %148 : i1 to i32
    %c0_i32_69 = arith.constant 0 : i32
    %150 = arith.cmpi ne, %149, %c0_i32_69 : i32
    scf.if %150 {
      %151 = vector.extract_strided_slice %146 {offsets = [0, 0], sizes = [1, 256], strides = [1, 1]} : vector<16x256xf32> to vector<1x256xf32>
      %152 = vector.extract_strided_slice %146 {offsets = [8, 0], sizes = [1, 256], strides = [1, 1]} : vector<16x256xf32> to vector<1x256xf32>
      %153 = tpu.concatenate %151, %152 in 0 : vector<1x256xf32>, vector<1x256xf32> -> vector<2x256xf32>
      %154 = arith.truncf %153 : vector<2x256xf32> to vector<2x256xbf16>
      %c0_70 = arith.constant 0 : index
      %c0_71 = arith.constant 0 : index
      %155 = vector.load %arg17[%c0_70, %c0_71] : memref<256x256xbf16, #tpu.memory_space<vmem>>, vector<256x256xbf16>
      %cst_72 = arith.constant dense<0.000000e+00> : vector<2x256xf32>
      %156 = tpu.matmul %154, %155, %cst_72 {dimension_numbers = #tpu.dot_dimension_numbers<[1], [0], [0], [1], [0, 0, 1, 1], [], []>} : vector<2x256xbf16>, vector<256x256xbf16>, vector<2x256xf32> -> vector<2x256xf32>
      %c0_73 = arith.constant 0 : index
      %c0_74 = arith.constant 0 : index
      %157 = vector.load %arg18[%c0_73, %c0_74] : memref<1x256xf32, #tpu.memory_space<vmem>>, vector<1x256xf32>
      %158 = vector.broadcast %157 : vector<1x256xf32> to vector<2x256xf32>
      %159 = arith.addf %156, %158 : vector<2x256xf32>
      %160 = math.tanh %159 : vector<2x256xf32>
      %161 = arith.truncf %160 : vector<2x256xf32> to vector<2x256xbf16>
      %c0_75 = arith.constant 0 : index
      %c0_76 = arith.constant 0 : index
      %162 = vector.load %arg19[%c0_75, %c0_76] : memref<256x128xbf16, #tpu.memory_space<vmem>>, vector<256x128xbf16>
      %cst_77 = arith.constant dense<0.000000e+00> : vector<2x128xf32>
      %163 = tpu.matmul %161, %162, %cst_77 {dimension_numbers = #tpu.dot_dimension_numbers<[1], [0], [0], [1], [0, 0, 1, 1], [], []>} : vector<2x256xbf16>, vector<256x128xbf16>, vector<2x128xf32> -> vector<2x128xf32>
      %c0_78 = arith.constant 0 : index
      %c0_79 = arith.constant 0 : index
      %164 = vector.load %arg20[%c0_78, %c0_79] : memref<1x128xf32, #tpu.memory_space<vmem>>, vector<1x128xf32>
      %165 = vector.broadcast %164 : vector<1x128xf32> to vector<2x128xf32>
      %166 = arith.addf %163, %165 : vector<2x128xf32>
      %c0_80 = arith.constant 0 : index
      %c0_81 = arith.constant 0 : index
      %167 = vector.load %arg21[%c0_80, %c0_81] : memref<2x128xf32, #tpu.memory_space<vmem>>, vector<2x128xf32>
      tpu.vector_store %arg21[%c0_80, %c0_81], %166 {strides = array<i32>} : memref<2x128xf32, #tpu.memory_space<vmem>>, vector<2x128xf32>,
    } else {
    }
    return
  }
  func.func @transform_0(%arg0: i32) -> (i32, i32) {
    %c0_i32 = arith.constant 0 : i32
    %c0_i32_0 = arith.constant 0 : i32
    %c0_i32_1 = arith.constant 0 : i32
    return %c0_i32, %c0_i32_0 : i32, i32
  }
  func.func @transform_1(%arg0: i32) -> (i32, i32) {
    %c0_i32 = arith.constant 0 : i32
    %c0_i32_0 = arith.constant 0 : i32
    %c0_i32_1 = arith.constant 0 : i32
    return %c0_i32, %c0_i32_0 : i32, i32
  }
  func.func @transform_2(%arg0: i32) -> (i32, i32) {
    %c0_i32 = arith.constant 0 : i32
    %c0_i32_0 = arith.constant 0 : i32
    %c0_i32_1 = arith.constant 0 : i32
    return %c0_i32, %c0_i32_0 : i32, i32
  }
  func.func @transform_3(%arg0: i32) -> (i32, i32) {
    %c0_i32 = arith.constant 0 : i32
    %c0_i32_0 = arith.constant 0 : i32
    %c0_i32_1 = arith.constant 0 : i32
    return %c0_i32, %c0_i32_0 : i32, i32
  }
  func.func @transform_4(%arg0: i32) -> (i32, i32, i32) {
    %c0_i32 = arith.constant 0 : i32
    %c0_i32_0 = arith.constant 0 : i32
    %c0_i32_1 = arith.constant 0 : i32
    return %arg0, %c0_i32, %c0_i32_0 : i32, i32, i32
  }
  func.func @transform_5(%arg0: i32) -> (i32, i32, i32) {
    %c0_i32 = arith.constant 0 : i32
    %c0_i32_0 = arith.constant 0 : i32
    %c0_i32_1 = arith.constant 0 : i32
    return %arg0, %c0_i32, %c0_i32_0 : i32, i32, i32
  }
  func.func @transform_6(%arg0: i32) -> (i32, i32, i32) {
    %c0_i32 = arith.constant 0 : i32
    %c0_i32_0 = arith.constant 0 : i32
    %c0_i32_1 = arith.constant 0 : i32
    return %arg0, %c0_i32, %c0_i32_0 : i32, i32, i32
  }
  func.func @transform_7(%arg0: i32) -> (i32, i32, i32) {
    %c0_i32 = arith.constant 0 : i32
    %c0_i32_0 = arith.constant 0 : i32
    %c0_i32_1 = arith.constant 0 : i32
    return %arg0, %c0_i32, %c0_i32_0 : i32, i32, i32
  }
  func.func @transform_8(%arg0: i32) -> (i32, i32, i32) {
    %c0_i32 = arith.constant 0 : i32
    %c0_i32_0 = arith.constant 0 : i32
    %c0_i32_1 = arith.constant 0 : i32
    return %arg0, %c0_i32, %c0_i32_0 : i32, i32, i32
  }
  func.func @transform_9(%arg0: i32) -> (i32, i32, i32) {
    %c0_i32 = arith.constant 0 : i32
    %c0_i32_0 = arith.constant 0 : i32
    %c0_i32_1 = arith.constant 0 : i32
    return %arg0, %c0_i32, %c0_i32_0 : i32, i32, i32
  }
  func.func @transform_10(%arg0: i32) -> (i32, i32, i32) {
    %c0_i32 = arith.constant 0 : i32
    %c0_i32_0 = arith.constant 0 : i32
    %c0_i32_1 = arith.constant 0 : i32
    return %arg0, %c0_i32, %c0_i32_0 : i32, i32, i32
  }
  func.func @transform_11(%arg0: i32) -> (i32, i32, i32) {
    %c0_i32 = arith.constant 0 : i32
    %c0_i32_0 = arith.constant 0 : i32
    %c0_i32_1 = arith.constant 0 : i32
    return %arg0, %c0_i32, %c0_i32_0 : i32, i32, i32
  }
  func.func @transform_12(%arg0: i32) -> (i32, i32, i32) {
    %c0_i32 = arith.constant 0 : i32
    %c0_i32_0 = arith.constant 0 : i32
    %c0_i32_1 = arith.constant 0 : i32
    return %arg0, %c0_i32, %c0_i32_0 : i32, i32, i32
  }
  func.func @transform_13(%arg0: i32) -> (i32, i32, i32) {
    %c0_i32 = arith.constant 0 : i32
    %c0_i32_0 = arith.constant 0 : i32
    %c0_i32_1 = arith.constant 0 : i32
    return %arg0, %c0_i32, %c0_i32_0 : i32, i32, i32
  }
  func.func @transform_14(%arg0: i32) -> (i32, i32, i32) {
    %c0_i32 = arith.constant 0 : i32
    %c0_i32_0 = arith.constant 0 : i32
    %c0_i32_1 = arith.constant 0 : i32
    return %arg0, %c0_i32, %c0_i32_0 : i32, i32, i32
  }
  func.func @transform_15(%arg0: i32) -> (i32, i32, i32) {
    %c0_i32 = arith.constant 0 : i32
    %c0_i32_0 = arith.constant 0 : i32
    %c0_i32_1 = arith.constant 0 : i32
    return %arg0, %c0_i32, %c0_i32_0 : i32, i32, i32
  }
  func.func @transform_16(%arg0: i32) -> (i32, i32) {
    %c0_i32 = arith.constant 0 : i32
    %c0_i32_0 = arith.constant 0 : i32
    %c0_i32_1 = arith.constant 0 : i32
    return %c0_i32, %c0_i32_0 : i32, i32
  }
  func.func @transform_17(%arg0: i32) -> (i32, i32) {
    %c0_i32 = arith.constant 0 : i32
    %c0_i32_0 = arith.constant 0 : i32
    %c0_i32_1 = arith.constant 0 : i32
    return %c0_i32, %c0_i32_0 : i32, i32
  }
  func.func @transform_18(%arg0: i32) -> (i32, i32) {
    %c0_i32 = arith.constant 0 : i32
    %c0_i32_0 = arith.constant 0 : i32
    %c0_i32_1 = arith.constant 0 : i32
    return %c0_i32, %c0_i32_0 : i32, i32
  }
  func.func @transform_19(%arg0: i32) -> (i32, i32) {
    %c0_i32 = arith.constant 0 : i32
    %c0_i32_0 = arith.constant 0 : i32
    %c0_i32_1 = arith.constant 0 : i32
    return %c0_i32, %c0_i32_0 : i32, i32
  }
  func.func @transform_20(%arg0: i32) -> (i32, i32) {
    %c0_i32 = arith.constant 0 : i32
    %c0_i32_0 = arith.constant 0 : i32
    %c0_i32_1 = arith.constant 0 : i32
    return %c0_i32, %c0_i32_0 : i32, i32
  }
}

</mosaic_0001>

<llo_original>
// kernel: roberta_classification_forward.1
$region0: #{roberta_classification_forward.1}
  #allocation0 [shape = 'u32[]', space=smem, size = 0x4, offset = 0x4, fixed_abs, tag = 'smem constant byte address 0x4 - core index']
  #allocation1 [shape = 'u32[72,128]{1,0:T(1,128)}', space=vmem, size = 0x9000, scoped, tag = 'internal scratch']
  #allocation2 [shape = 'f32[16,256]{1,0:T(8,128)}', space=vmem, size = 0x4000, scoped, tag = 'scratch operand']
  %s0 = inlined_call_operand.vmem [shape: f32[16,256], index: 0, kind: input, shape index: {}]
  %s1 = inlined_call_operand.vmem [shape: f32[16,16], index: 1, kind: input, shape index: {}]
  %s2 = inlined_call_operand.vmem [shape: f32[1,256], index: 2, kind: input, shape index: {}]
  %s3 = inlined_call_operand.vmem [shape: f32[1,256], index: 3, kind: input, shape index: {}]
  %s4 = inlined_call_operand.hbm [shape: bf16[2,256,768], index: 4, kind: input, shape index: {}]
  %s5 = inlined_call_operand.vmem [shape: f32[2,1,768], index: 5, kind: input, shape index: {}]
  %s6 = inlined_call_operand.vmem [shape: bf16[2,256,256], index: 6, kind: input, shape index: {}]
  %s7 = inlined_call_operand.vmem [shape: f32[2,1,256], index: 7, kind: input, shape index: {}]
  %s8 = inlined_call_operand.vmem [shape: f32[2,1,256], index: 8, kind: input, shape index: {}]
  %s9 = inlined_call_operand.vmem [shape: f32[2,1,256], index: 9, kind: input, shape index: {}]
  %s10 = inlined_call_operand.hbm [shape: bf16[2,256,512], index: 10, kind: input, shape index: {}]
  %s11 = inlined_call_operand.vmem [shape: f32[2,1,512], index: 11, kind: input, shape index: {}]
  %s12 = inlined_call_operand.hbm [shape: bf16[2,512,256], index: 12, kind: input, shape index: {}]
  %s13 = inlined_call_operand.vmem [shape: f32[2,1,256], index: 13, kind: input, shape index: {}]
  %s14 = inlined_call_operand.vmem [shape: f32[2,1,256], index: 14, kind: input, shape index: {}]
  %s15 = inlined_call_operand.vmem [shape: f32[2,1,256], index: 15, kind: input, shape index: {}]
  %s16 = inlined_call_operand.vmem [shape: bf16[256,256], index: 16, kind: input, shape index: {}]
  %s17 = inlined_call_operand.vmem [shape: f32[1,256], index: 17, kind: input, shape index: {}]
  %s18 = inlined_call_operand.hbm [shape: bf16[256,128], index: 18, kind: input, shape index: {}]
  %s19 = inlined_call_operand.vmem [shape: f32[1,128], index: 19, kind: input, shape index: {}]
  %s20 = inlined_call_operand.vmem [shape: f32[2,128], index: 20, kind: output, shape index: {}]
  %s21 = sld [smem:[#allocation0]]
  $region137: #{roberta_classification_forward.1} parent=0
    _
  %s23 = ssub.s32 1, %s21
  %s24 = scalar_select 0, %s23, %s21
  $region1: #{roberta_classification_forward.1} parent=0
    #allocation3 [shape = 'u8[786432]{0}', space=vmem, size = 0xc0000, scoped, tag = 'input window, operand 4']
    #allocation4 [shape = 's32[2]{0}', space=sflag, size = 0x8, scoped, tag = 'scoped memory for roberta_classification_forward.1']
    #allocation5 [shape = 'u8[524288]{0}', space=vmem, size = 0x80000, scoped, tag = 'input window, operand 10']
    #allocation6 [shape = 's32[2]{0}', space=sflag, size = 0x8, scoped, tag = 'scoped memory for roberta_classification_forward.1']
    #allocation7 [shape = 'u8[524288]{0}', space=vmem, size = 0x80000, scoped, tag = 'input window, operand 12']
    #allocation8 [shape = 'u8[65536]{0}', space=vmem, size = 0x10000, scoped, tag = 'input window, operand 18, single buffered']
    #allocation9 [shape = 's32[1]{0}', space=sflag, size = 0x4, scoped, tag = 'scoped memory for roberta_classification_forward.1']
    %25 = vsyncpa [#allocation4], 0
    %s26 = scalar_lea.sflag [#allocation4], 1
    %27 = vsyncpa %s26, 0
    %28 = vsyncpa [#allocation6], 0
    %s29 = scalar_lea.sflag [#allocation6], 1
    %30 = vsyncpa %s29, 0
    %31 = vsyncpa [#allocation9], 0
    loop: start=0, step=1, limit=4
    $region2: #{roberta_classification_forward.1} parent=1 // loop_pre_header
      _
    $region3: #{roberta_classification_forward.1} parent=1 // loop_header
      %s33 = sphi 0, %s37
      %p34 = scmp.ge.s32.totalorder %s33, 4
      %s41 = sphi 0, %s41
      %s43 = sphi 0, %s41
      %s44 = sphi 0, %s43
      %s58 = sphi 0, %s44
      %s62 = sphi 0, %s62
      %s64 = sphi 0, %s62
      %s65 = sphi 0, %s64
      %s79 = sphi 0, %s65
      %s83 = sphi 0, %s83
      %s85 = sphi 0, %s83
      %s86 = sphi 0, %s85
      %s100 = sphi 0, %s86
      %s104 = sphi 0, %s104
      %s106 = sphi 0, %s104
      %s107 = sphi 0, %s106
      %s121 = sphi 0, %s107
      %s127 = sphi 0, %s129
      %s130 = sphi 0, %s127
      %s131 = sphi 0, %s130
      %s147 = sphi 0, %s131
      %s153 = sphi 0, %s155
      %s156 = sphi 0, %s153
      %s157 = sphi 0, %s156
      %s173 = sphi 0, %s157
      %s179 = sphi 0, %s181
      %s182 = sphi 0, %s179
      %s183 = sphi 0, %s182
      %s199 = sphi 0, %s183
      %s205 = sphi 0, %s207
      %s208 = sphi 0, %s205
      %s209 = sphi 0, %s208
      %s225 = sphi 0, %s209
      %s231 = sphi 0, %s233
      %s234 = sphi 0, %s231
      %s235 = sphi 0, %s234
      %s251 = sphi 0, %s235
      %s257 = sphi 0, %s259
      %s260 = sphi 0, %s257
      %s261 = sphi 0, %s260
      %s277 = sphi 0, %s261
      %s283 = sphi 0, %s285
      %s286 = sphi 0, %s283
      %s287 = sphi 0, %s286
      %s303 = sphi 0, %s287
      %s309 = sphi 0, %s311
      %s312 = sphi 0, %s309
      %s313 = sphi 0, %s312
      %s329 = sphi 0, %s313
      %s335 = sphi 0, %s337
      %s338 = sphi 0, %s335
      %s339 = sphi 0, %s338
      %s355 = sphi 0, %s339
      %s361 = sphi 0, %s363
      %s364 = sphi 0, %s361
      %s365 = sphi 0, %s364
      %s381 = sphi 0, %s365
      %s387 = sphi 0, %s389
      %s390 = sphi 0, %s387
      %s391 = sphi 0, %s390
      %s407 = sphi 0, %s391
      %s413 = sphi 0, %s415
      %s416 = sphi 0, %s413
      %s417 = sphi 0, %s416
      %s433 = sphi 0, %s417
      %s437 = sphi 0, %s437
      %s439 = sphi 0, %s437
      %s440 = sphi 0, %s439
      %s454 = sphi 0, %s440
      %s458 = sphi 0, %s458
      %s460 = sphi 0, %s458
      %s461 = sphi 0, %s460
      %s475 = sphi 0, %s461
      %s479 = sphi 0, %s479
      %s481 = sphi 0, %s479
      %s482 = sphi 0, %s481
      %s496 = sphi 0, %s482
      %s500 = sphi 0, %s500
      %s502 = sphi 0, %s500
      %s503 = sphi 0, %s502
      %s517 = sphi 0, %s503
      %s521 = sphi 0, %s521
      %s523 = sphi 0, %s521
      %s524 = sphi 0, %s523
      %s538 = sphi 0, %s524
    $region4: #{roberta_classification_forward.1} parent=1 // loop_header_branch
      %36 = sbr.rel (%p34) target = $region8
    $region5: #{roberta_classification_forward.1} parent=1 // loop_body
      %s38 = ssub.s32 %s33, 1
      %s39 = ssub.s32 %s33, 2
      %s40 = sadd.s32 %s33, 1
      %s42 = sadd.s32 %s41, 1
      %p45 = scmp.eq.s32.totalorder %s33, 1
      %p46 = scmp.ne.s32.totalorder %s41, %s43
      %p47 = scmp.eq.s32.totalorder %s33, 0
      %p48 = por %p46, %p47
      %p49 = scmp.ne.s32.totalorder %s41, %s43
      %p50 = scmp.eq.s32.totalorder %s38, 1
      %p51 = por %p49, %p50
      %p52 = scmp.ne.s32.totalorder %s43, %s44
      %p53 = scmp.eq.s32.totalorder %s38, 0
      %p54 = por %p52, %p53
      %p55 = scmp.ne.s32.totalorder %s43, %s44
      %p56 = scmp.eq.s32.totalorder %s39, 1
      %p57 = por %p55, %p56
      %p59 = scmp.ne.s32.totalorder %s44, %s58
      %p60 = scmp.eq.s32.totalorder %s39, 0
      %p61 = por %p59, %p60
      %s63 = sadd.s32 %s62, 1
      %p66 = scmp.eq.s32.totalorder %s33, 1
      %p67 = scmp.ne.s32.totalorder %s62, %s64
      %p68 = scmp.eq.s32.totalorder %s33, 0
      %p69 = por %p67, %p68
      %p70 = scmp.ne.s32.totalorder %s62, %s64
      %p71 = scmp.eq.s32.totalorder %s38, 1
      %p72 = por %p70, %p71
      %p73 = scmp.ne.s32.totalorder %s64, %s65
      %p74 = scmp.eq.s32.totalorder %s38, 0
      %p75 = por %p73, %p74
      %p76 = scmp.ne.s32.totalorder %s64, %s65
      %p77 = scmp.eq.s32.totalorder %s39, 1
      %p78 = por %p76, %p77
      %p80 = scmp.ne.s32.totalorder %s65, %s79
      %p81 = scmp.eq.s32.totalorder %s39, 0
      %p82 = por %p80, %p81
      %s84 = sadd.s32 %s83, 1
      %p87 = scmp.eq.s32.totalorder %s33, 1
      %p88 = scmp.ne.s32.totalorder %s83, %s85
      %p89 = scmp.eq.s32.totalorder %s33, 0
      %p90 = por %p88, %p89
      %p91 = scmp.ne.s32.totalorder %s83, %s85
      %p92 = scmp.eq.s32.totalorder %s38, 1
      %p93 = por %p91, %p92
      %p94 = scmp.ne.s32.totalorder %s85, %s86
      %p95 = scmp.eq.s32.totalorder %s38, 0
      %p96 = por %p94, %p95
      %p97 = scmp.ne.s32.totalorder %s85, %s86
      %p98 = scmp.eq.s32.totalorder %s39, 1
      %p99 = por %p97, %p98
      %p101 = scmp.ne.s32.totalorder %s86, %s100
      %p102 = scmp.eq.s32.totalorder %s39, 0
      %p103 = por %p101, %p102
      %s105 = sadd.s32 %s104, 1
      %p108 = scmp.eq.s32.totalorder %s33, 1
      %p109 = scmp.ne.s32.totalorder %s104, %s106
      %p110 = scmp.eq.s32.totalorder %s33, 0
      %p111 = por %p109, %p110
      %p112 = scmp.ne.s32.totalorder %s104, %s106
      %p113 = scmp.eq.s32.totalorder %s38, 1
      %p114 = por %p112, %p113
      %p115 = scmp.ne.s32.totalorder %s106, %s107
      %p116 = scmp.eq.s32.totalorder %s38, 0
      %p117 = por %p115, %p116
      %p118 = scmp.ne.s32.totalorder %s106, %s107
      %p119 = scmp.eq.s32.totalorder %s39, 1
      %p120 = por %p118, %p119
      %p122 = scmp.ne.s32.totalorder %s107, %s121
      %p123 = scmp.eq.s32.totalorder %s39, 0
      %p124 = por %p122, %p123
      %s125 = ssub.s32 %s33, %s40
      %p126 = scmp.eq.s32.totalorder %s125, 0
      %s128 = sadd.s32 %s127, 1
      %s129 = scalar_select %p126, %s127, %s128
      %p132 = pneg %p126
      %p133 = scmp.eq.s32.totalorder %s33, 1
      %p134 = por %p132, %p133
      %p135 = scmp.ne.s32.totalorder %s127, %s130
      %p136 = scmp.eq.s32.totalorder %s33, 0
      %p137 = por %p135, %p136
      %p138 = scmp.ne.s32.totalorder %s127, %s130
      %p139 = scmp.eq.s32.totalorder %s38, 1
      %p140 = por %p138, %p139
      %p141 = scmp.ne.s32.totalorder %s130, %s131
      %p142 = scmp.eq.s32.totalorder %s38, 0
      %p143 = por %p141, %p142
      %p144 = scmp.ne.s32.totalorder %s130, %s131
      %p145 = scmp.eq.s32.totalorder %s39, 1
      %p146 = por %p144, %p145
      %p148 = scmp.ne.s32.totalorder %s131, %s147
      %p149 = scmp.eq.s32.totalorder %s39, 0
      %p150 = por %p148, %p149
      %s151 = ssub.s32 %s33, %s40
      %p152 = scmp.eq.s32.totalorder %s151, 0
      %s154 = sadd.s32 %s153, 1
      %s155 = scalar_select %p152, %s153, %s154
      %p158 = pneg %p152
      %p159 = scmp.eq.s32.totalorder %s33, 1
      %p160 = por %p158, %p159
      %p161 = scmp.ne.s32.totalorder %s153, %s156
      %p162 = scmp.eq.s32.totalorder %s33, 0
      %p163 = por %p161, %p162
      %p164 = scmp.ne.s32.totalorder %s153, %s156
      %p165 = scmp.eq.s32.totalorder %s38, 1
      %p166 = por %p164, %p165
      %p167 = scmp.ne.s32.totalorder %s156, %s157
      %p168 = scmp.eq.s32.totalorder %s38, 0
      %p169 = por %p167, %p168
      %p170 = scmp.ne.s32.totalorder %s156, %s157
      %p171 = scmp.eq.s32.totalorder %s39, 1
      %p172 = por %p170, %p171
      %p174 = scmp.ne.s32.totalorder %s157, %s173
      %p175 = scmp.eq.s32.totalorder %s39, 0
      %p176 = por %p174, %p175
      %s177 = ssub.s32 %s33, %s40
      %p178 = scmp.eq.s32.totalorder %s177, 0
      %s180 = sadd.s32 %s179, 1
      %s181 = scalar_select %p178, %s179, %s180
      %p184 = pneg %p178
      %p185 = scmp.eq.s32.totalorder %s33, 1
      %p186 = por %p184, %p185
      %p187 = scmp.ne.s32.totalorder %s179, %s182
      %p188 = scmp.eq.s32.totalorder %s33, 0
      %p189 = por %p187, %p188
      %p190 = scmp.ne.s32.totalorder %s179, %s182
      %p191 = scmp.eq.s32.totalorder %s38, 1
      %p192 = por %p190, %p191
      %p193 = scmp.ne.s32.totalorder %s182, %s183
      %p194 = scmp.eq.s32.totalorder %s38, 0
      %p195 = por %p193, %p194
      %p196 = scmp.ne.s32.totalorder %s182, %s183
      %p197 = scmp.eq.s32.totalorder %s39, 1
      %p198 = por %p196, %p197
      %p200 = scmp.ne.s32.totalorder %s183, %s199
      %p201 = scmp.eq.s32.totalorder %s39, 0
      %p202 = por %p200, %p201
      %s203 = ssub.s32 %s33, %s40
      %p204 = scmp.eq.s32.totalorder %s203, 0
      %s206 = sadd.s32 %s205, 1
      %s207 = scalar_select %p204, %s205, %s206
      %p210 = pneg %p204
      %p211 = scmp.eq.s32.totalorder %s33, 1
      %p212 = por %p210, %p211
      %p213 = scmp.ne.s32.totalorder %s205, %s208
      %p214 = scmp.eq.s32.totalorder %s33, 0
      %p215 = por %p213, %p214
      %p216 = scmp.ne.s32.totalorder %s205, %s208
      %p217 = scmp.eq.s32.totalorder %s38, 1
      %p218 = por %p216, %p217
      %p219 = scmp.ne.s32.totalorder %s208, %s209
      %p220 = scmp.eq.s32.totalorder %s38, 0
      %p221 = por %p219, %p220
      %p222 = scmp.ne.s32.totalorder %s208, %s209
      %p223 = scmp.eq.s32.totalorder %s39, 1
      %p224 = por %p222, %p223
      %p226 = scmp.ne.s32.totalorder %s209, %s225
      %p227 = scmp.eq.s32.totalorder %s39, 0
      %p228 = por %p226, %p227
      %s229 = ssub.s32 %s33, %s40
      %p230 = scmp.eq.s32.totalorder %s229, 0
      %s232 = sadd.s32 %s231, 1
      %s233 = scalar_select %p230, %s231, %s232
      %p236 = pneg %p230
      %p237 = scmp.eq.s32.totalorder %s33, 1
      %p238 = por %p236, %p237
      %p239 = scmp.ne.s32.totalorder %s231, %s234
      %p240 = scmp.eq.s32.totalorder %s33, 0
      %p241 = por %p239, %p240
      %p242 = scmp.ne.s32.totalorder %s231, %s234
      %p243 = scmp.eq.s32.totalorder %s38, 1
      %p244 = por %p242, %p243
      %p245 = scmp.ne.s32.totalorder %s234, %s235
      %p246 = scmp.eq.s32.totalorder %s38, 0
      %p247 = por %p245, %p246
      %p248 = scmp.ne.s32.totalorder %s234, %s235
      %p249 = scmp.eq.s32.totalorder %s39, 1
      %p250 = por %p248, %p249
      %p252 = scmp.ne.s32.totalorder %s235, %s251
      %p253 = scmp.eq.s32.totalorder %s39, 0
      %p254 = por %p252, %p253
      %s255 = ssub.s32 %s33, %s40
      %p256 = scmp.eq.s32.totalorder %s255, 0
      %s258 = sadd.s32 %s257, 1
      %s259 = scalar_select %p256, %s257, %s258
      %p262 = pneg %p256
      %p263 = scmp.eq.s32.totalorder %s33, 1
      %p264 = por %p262, %p263
      %p265 = scmp.ne.s32.totalorder %s257, %s260
      %p266 = scmp.eq.s32.totalorder %s33, 0
      %p267 = por %p265, %p266
      %p268 = scmp.ne.s32.totalorder %s257, %s260
      %p269 = scmp.eq.s32.totalorder %s38, 1
      %p270 = por %p268, %p269
      %p271 = scmp.ne.s32.totalorder %s260, %s261
      %p272 = scmp.eq.s32.totalorder %s38, 0
      %p273 = por %p271, %p272
      %p274 = scmp.ne.s32.totalorder %s260, %s261
      %p275 = scmp.eq.s32.totalorder %s39, 1
      %p276 = por %p274, %p275
      %p278 = scmp.ne.s32.totalorder %s261, %s277
      %p279 = scmp.eq.s32.totalorder %s39, 0
      %p280 = por %p278, %p279
      %s281 = ssub.s32 %s33, %s40
      %p282 = scmp.eq.s32.totalorder %s281, 0
      %s284 = sadd.s32 %s283, 1
      %s285 = scalar_select %p282, %s283, %s284
      %p288 = pneg %p282
      %p289 = scmp.eq.s32.totalorder %s33, 1
      %p290 = por %p288, %p289
      %p291 = scmp.ne.s32.totalorder %s283, %s286
      %p292 = scmp.eq.s32.totalorder %s33, 0
      %p293 = por %p291, %p292
      %p294 = scmp.ne.s32.totalorder %s283, %s286
      %p295 = scmp.eq.s32.totalorder %s38, 1
      %p296 = por %p294, %p295
      %p297 = scmp.ne.s32.totalorder %s286, %s287
      %p298 = scmp.eq.s32.totalorder %s38, 0
      %p299 = por %p297, %p298
      %p300 = scmp.ne.s32.totalorder %s286, %s287
      %p301 = scmp.eq.s32.totalorder %s39, 1
      %p302 = por %p300, %p301
      %p304 = scmp.ne.s32.totalorder %s287, %s303
      %p305 = scmp.eq.s32.totalorder %s39, 0
      %p306 = por %p304, %p305
      %s307 = ssub.s32 %s33, %s40
      %p308 = scmp.eq.s32.totalorder %s307, 0
      %s310 = sadd.s32 %s309, 1
      %s311 = scalar_select %p308, %s309, %s310
      %p314 = pneg %p308
      %p315 = scmp.eq.s32.totalorder %s33, 1
      %p316 = por %p314, %p315
      %p317 = scmp.ne.s32.totalorder %s309, %s312
      %p318 = scmp.eq.s32.totalorder %s33, 0
      %p319 = por %p317, %p318
      %p320 = scmp.ne.s32.totalorder %s309, %s312
      %p321 = scmp.eq.s32.totalorder %s38, 1
      %p322 = por %p320, %p321
      %p323 = scmp.ne.s32.totalorder %s312, %s313
      %p324 = scmp.eq.s32.totalorder %s38, 0
      %p325 = por %p323, %p324
      %p326 = scmp.ne.s32.totalorder %s312, %s313
      %p327 = scmp.eq.s32.totalorder %s39, 1
      %p328 = por %p326, %p327
      %p330 = scmp.ne.s32.totalorder %s313, %s329
      %p331 = scmp.eq.s32.totalorder %s39, 0
      %p332 = por %p330, %p331
      %s333 = ssub.s32 %s33, %s40
      %p334 = scmp.eq.s32.totalorder %s333, 0
      %s336 = sadd.s32 %s335, 1
      %s337 = scalar_select %p334, %s335, %s336
      %p340 = pneg %p334
      %p341 = scmp.eq.s32.totalorder %s33, 1
      %p342 = por %p340, %p341
      %p343 = scmp.ne.s32.totalorder %s335, %s338
      %p344 = scmp.eq.s32.totalorder %s33, 0
      %p345 = por %p343, %p344
      %p346 = scmp.ne.s32.totalorder %s335, %s338
      %p347 = scmp.eq.s32.totalorder %s38, 1
      %p348 = por %p346, %p347
      %p349 = scmp.ne.s32.totalorder %s338, %s339
      %p350 = scmp.eq.s32.totalorder %s38, 0
      %p351 = por %p349, %p350
      %p352 = scmp.ne.s32.totalorder %s338, %s339
      %p353 = scmp.eq.s32.totalorder %s39, 1
      %p354 = por %p352, %p353
      %p356 = scmp.ne.s32.totalorder %s339, %s355
      %p357 = scmp.eq.s32.totalorder %s39, 0
      %p358 = por %p356, %p357
      %s359 = ssub.s32 %s33, %s40
      %p360 = scmp.eq.s32.totalorder %s359, 0
      %s362 = sadd.s32 %s361, 1
      %s363 = scalar_select %p360, %s361, %s362
      %p366 = pneg %p360
      %p367 = scmp.eq.s32.totalorder %s33, 1
      %p368 = por %p366, %p367
      %p369 = scmp.ne.s32.totalorder %s361, %s364
      %p370 = scmp.eq.s32.totalorder %s33, 0
      %p371 = por %p369, %p370
      %p372 = scmp.ne.s32.totalorder %s361, %s364
      %p373 = scmp.eq.s32.totalorder %s38, 1
      %p374 = por %p372, %p373
      %p375 = scmp.ne.s32.totalorder %s364, %s365
      %p376 = scmp.eq.s32.totalorder %s38, 0
      %p377 = por %p375, %p376
      %p378 = scmp.ne.s32.totalorder %s364, %s365
      %p379 = scmp.eq.s32.totalorder %s39, 1
      %p380 = por %p378, %p379
      %p382 = scmp.ne.s32.totalorder %s365, %s381
      %p383 = scmp.eq.s32.totalorder %s39, 0
      %p384 = por %p382, %p383
      %s385 = ssub.s32 %s33, %s40
      %p386 = scmp.eq.s32.totalorder %s385, 0
      %s388 = sadd.s32 %s387, 1
      %s389 = scalar_select %p386, %s387, %s388
      %p392 = pneg %p386
      %p393 = scmp.eq.s32.totalorder %s33, 1
      %p394 = por %p392, %p393
      %p395 = scmp.ne.s32.totalorder %s387, %s390
      %p396 = scmp.eq.s32.totalorder %s33, 0
      %p397 = por %p395, %p396
      %p398 = scmp.ne.s32.totalorder %s387, %s390
      %p399 = scmp.eq.s32.totalorder %s38, 1
      %p400 = por %p398, %p399
      %p401 = scmp.ne.s32.totalorder %s390, %s391
      %p402 = scmp.eq.s32.totalorder %s38, 0
      %p403 = por %p401, %p402
      %p404 = scmp.ne.s32.totalorder %s390, %s391
      %p405 = scmp.eq.s32.totalorder %s39, 1
      %p406 = por %p404, %p405
      %p408 = scmp.ne.s32.totalorder %s391, %s407
      %p409 = scmp.eq.s32.totalorder %s39, 0
      %p410 = por %p408, %p409
      %s411 = ssub.s32 %s33, %s40
      %p412 = scmp.eq.s32.totalorder %s411, 0
      %s414 = sadd.s32 %s413, 1
      %s415 = scalar_select %p412, %s413, %s414
      %p418 = pneg %p412
      %p419 = scmp.eq.s32.totalorder %s33, 1
      %p420 = por %p418, %p419
      %p421 = scmp.ne.s32.totalorder %s413, %s416
      %p422 = scmp.eq.s32.totalorder %s33, 0
      %p423 = por %p421, %p422
      %p424 = scmp.ne.s32.totalorder %s413, %s416
      %p425 = scmp.eq.s32.totalorder %s38, 1
      %p426 = por %p424, %p425
      %p427 = scmp.ne.s32.totalorder %s416, %s417
      %p428 = scmp.eq.s32.totalorder %s38, 0
      %p429 = por %p427, %p428
      %p430 = scmp.ne.s32.totalorder %s416, %s417
      %p431 = scmp.eq.s32.totalorder %s39, 1
      %p432 = por %p430, %p431
      %p434 = scmp.ne.s32.totalorder %s417, %s433
      %p435 = scmp.eq.s32.totalorder %s39, 0
      %p436 = por %p434, %p435
      %s438 = sadd.s32 %s437, 1
      %p441 = scmp.eq.s32.totalorder %s33, 1
      %p442 = scmp.ne.s32.totalorder %s437, %s439
      %p443 = scmp.eq.s32.totalorder %s33, 0
      %p444 = por %p442, %p443
      %p445 = scmp.ne.s32.totalorder %s437, %s439
      %p446 = scmp.eq.s32.totalorder %s38, 1
      %p447 = por %p445, %p446
      %p448 = scmp.ne.s32.totalorder %s439, %s440
      %p449 = scmp.eq.s32.totalorder %s38, 0
      %p450 = por %p448, %p449
      %p451 = scmp.ne.s32.totalorder %s439, %s440
      %p452 = scmp.eq.s32.totalorder %s39, 1
      %p453 = por %p451, %p452
      %p455 = scmp.ne.s32.totalorder %s440, %s454
      %p456 = scmp.eq.s32.totalorder %s39, 0
      %p457 = por %p455, %p456
      %s459 = sadd.s32 %s458, 1
      %p462 = scmp.eq.s32.totalorder %s33, 1
      %p463 = scmp.ne.s32.totalorder %s458, %s460
      %p464 = scmp.eq.s32.totalorder %s33, 0
      %p465 = por %p463, %p464
      %p466 = scmp.ne.s32.totalorder %s458, %s460
      %p467 = scmp.eq.s32.totalorder %s38, 1
      %p468 = por %p466, %p467
      %p469 = scmp.ne.s32.totalorder %s460, %s461
      %p470 = scmp.eq.s32.totalorder %s38, 0
      %p471 = por %p469, %p470
      %p472 = scmp.ne.s32.totalorder %s460, %s461
      %p473 = scmp.eq.s32.totalorder %s39, 1
      %p474 = por %p472, %p473
      %p476 = scmp.ne.s32.totalorder %s461, %s475
      %p477 = scmp.eq.s32.totalorder %s39, 0
      %p478 = por %p476, %p477
      %s480 = sadd.s32 %s479, 1
      %p483 = scmp.eq.s32.totalorder %s33, 1
      %p484 = scmp.ne.s32.totalorder %s479, %s481
      %p485 = scmp.eq.s32.totalorder %s33, 0
      %p486 = por %p484, %p485
      %p487 = scmp.ne.s32.totalorder %s479, %s481
      %p488 = scmp.eq.s32.totalorder %s38, 1
      %p489 = por %p487, %p488
      %p490 = scmp.ne.s32.totalorder %s481, %s482
      %p491 = scmp.eq.s32.totalorder %s38, 0
      %p492 = por %p490, %p491
      %p493 = scmp.ne.s32.totalorder %s481, %s482
      %p494 = scmp.eq.s32.totalorder %s39, 1
      %p495 = por %p493, %p494
      %p497 = scmp.ne.s32.totalorder %s482, %s496
      %p498 = scmp.eq.s32.totalorder %s39, 0
      %p499 = por %p497, %p498
      %s501 = sadd.s32 %s500, 1
      %p504 = scmp.eq.s32.totalorder %s33, 1
      %p505 = scmp.ne.s32.totalorder %s500, %s502
      %p506 = scmp.eq.s32.totalorder %s33, 0
      %p507 = por %p505, %p506
      %p508 = scmp.ne.s32.totalorder %s500, %s502
      %p509 = scmp.eq.s32.totalorder %s38, 1
      %p510 = por %p508, %p509
      %p511 = scmp.ne.s32.totalorder %s502, %s503
      %p512 = scmp.eq.s32.totalorder %s38, 0
      %p513 = por %p511, %p512
      %p514 = scmp.ne.s32.totalorder %s502, %s503
      %p515 = scmp.eq.s32.totalorder %s39, 1
      %p516 = por %p514, %p515
      %p518 = scmp.ne.s32.totalorder %s503, %s517
      %p519 = scmp.eq.s32.totalorder %s39, 0
      %p520 = por %p518, %p519
      %s522 = sadd.s32 %s521, 1
      %p525 = scmp.eq.s32.totalorder %s33, 1
      %p526 = scmp.ne.s32.totalorder %s521, %s523
      %p527 = scmp.eq.s32.totalorder %s33, 0
      %p528 = por %p526, %p527
      %p529 = scmp.ne.s32.totalorder %s521, %s523
      %p530 = scmp.eq.s32.totalorder %s38, 1
      %p531 = por %p529, %p530
      %p532 = scmp.ne.s32.totalorder %s523, %s524
      %p533 = scmp.eq.s32.totalorder %s38, 0
      %p534 = por %p532, %p533
      %p535 = scmp.ne.s32.totalorder %s523, %s524
      %p536 = scmp.eq.s32.totalorder %s39, 1
      %p537 = por %p535, %p536
      %p539 = scmp.ne.s32.totalorder %s524, %s538
      %p540 = scmp.eq.s32.totalorder %s39, 0
      %p541 = por %p539, %p540
      %p542 = scmp.le.s32.totalorder 1, %s33
      %p543 = scmp.lt.s32.totalorder %s33, 3
      %p544 = pnand %p542, %p543
      %p545 = pneg %p544
      // Predicated region
      $region9: #{roberta_classification_forward.1} parent=5 // pred_check
        _
      $region10: #{roberta_classification_forward.1} parent=5 // pred_check_branch
        %547 = sbr.rel (%p544) target = $region12
      $region11: #{roberta_classification_forward.1} parent=5 // pred_region
        %s548 = ssub.s32 %s33, 1
        // Predicated region
        $region13: #{roberta_classification_forward.1} parent=11 // pred_check
          %p549 = pneg %p54
        $region14: #{roberta_classification_forward.1} parent=11 // pred_check_branch
          %551 = sbr.rel (%p549) target = $region16
        $region15: #{roberta_classification_forward.1} parent=11 // pred_region
          _
        $region16: #{roberta_classification_forward.1} parent=11 // pred_fallthru
          _
        // Predicated region
        $region17: #{roberta_classification_forward.1} parent=11 // pred_check
          %p552 = pneg %p75
        $region18: #{roberta_classification_forward.1} parent=11 // pred_check_branch
          %554 = sbr.rel (%p552) target = $region20
        $region19: #{roberta_classification_forward.1} parent=11 // pred_region
          _
        $region20: #{roberta_classification_forward.1} parent=11 // pred_fallthru
          _
        // Predicated region
        $region21: #{roberta_classification_forward.1} parent=11 // pred_check
          %p555 = pneg %p96
        $region22: #{roberta_classification_forward.1} parent=11 // pred_check_branch
          %557 = sbr.rel (%p555) target = $region24
        $region23: #{roberta_classification_forward.1} parent=11 // pred_region
          _
        $region24: #{roberta_classification_forward.1} parent=11 // pred_fallthru
          _
        // Predicated region
        $region25: #{roberta_classification_forward.1} parent=11 // pred_check
          %p558 = pneg %p117
        $region26: #{roberta_classification_forward.1} parent=11 // pred_check_branch
          %560 = sbr.rel (%p558) target = $region28
        $region27: #{roberta_classification_forward.1} parent=11 // pred_region
          _
        $region28: #{roberta_classification_forward.1} parent=11 // pred_fallthru
          _
        // Predicated region
        $region29: #{roberta_classification_forward.1} parent=11 // pred_check
          %p561 = pneg %p450
        $region30: #{roberta_classification_forward.1} parent=11 // pred_check_branch
          %563 = sbr.rel (%p561) target = $region32
        $region31: #{roberta_classification_forward.1} parent=11 // pred_region
          _
        $region32: #{roberta_classification_forward.1} parent=11 // pred_fallthru
          _
        // Predicated region
        $region33: #{roberta_classification_forward.1} parent=11 // pred_check
          %p564 = pneg %p471
        $region34: #{roberta_classification_forward.1} parent=11 // pred_check_branch
          %566 = sbr.rel (%p564) target = $region36
        $region35: #{roberta_classification_forward.1} parent=11 // pred_region
          _
        $region36: #{roberta_classification_forward.1} parent=11 // pred_fallthru
          _
        // Predicated region
        $region37: #{roberta_classification_forward.1} parent=11 // pred_check
          %p567 = pneg %p492
        $region38: #{roberta_classification_forward.1} parent=11 // pred_check_branch
          %569 = sbr.rel (%p567) target = $region40
        $region39: #{roberta_classification_forward.1} parent=11 // pred_region
          %571 = vsyncadd [#allocation9], 0
          %s572 = sshll.u32 %s18, 4
          %s573 = int_to_ptr.hbm [resolvable:$true] %s572
          %s574 = sshll.u32 [#allocation8], 4
          %s575 = int_to_ptr.vmem [resolvable:$true] %s574
          %580 = dma.hbm_to_vmem [thread:$0]  %s573, 2048, %s575, [#allocation9], 64, 64, 4
        $region40: #{roberta_classification_forward.1} parent=11 // pred_fallthru
          _
        // Predicated region
        $region41: #{roberta_classification_forward.1} parent=11 // pred_check
          %p581 = pneg %p513
        $region42: #{roberta_classification_forward.1} parent=11 // pred_check_branch
          %583 = sbr.rel (%p581) target = $region44
        $region43: #{roberta_classification_forward.1} parent=11 // pred_region
          _
        $region44: #{roberta_classification_forward.1} parent=11 // pred_fallthru
          _
      $region12: #{roberta_classification_forward.1} parent=5 // pred_fallthru
        _
      %p584 = scmp.lt.s32.totalorder %s33, 2
      // Predicated region
      $region45: #{roberta_classification_forward.1} parent=5 // pred_check
        %p585 = pneg %p584
      $region46: #{roberta_classification_forward.1} parent=5 // pred_check_branch
        %587 = sbr.rel (%p585) target = $region48
      $region47: #{roberta_classification_forward.1} parent=5 // pred_region
        // Predicated region
        $region49: #{roberta_classification_forward.1} parent=47 // pred_check
          %p588 = pneg %p137
        $region50: #{roberta_classification_forward.1} parent=47 // pred_check_branch
          %590 = sbr.rel (%p588) target = $region52
        $region51: #{roberta_classification_forward.1} parent=47 // pred_region
          %s591 = sand.u32 %s127, 1
          %s592 = scalar_lea.sflag [#allocation4], %s591
          %s593 = sand.u32 %s127, 1
          %s594 = smul.addr %s593, 768
          %s595 = scalar_lea.vmem [#allocation3], %s594
          %597 = vsyncadd %s592, 0
          %s598 = smul.addr %s33, 192
          %s599 = smul.addr %s598, 4
          %s600 = scalar_lea.hbm %s4, %s599
          %s601 = sshll.u32 %s600, 4
          %s602 = int_to_ptr.hbm [resolvable:$true] %s601
          %s603 = sshll.u32 %s595, 4
          %s604 = int_to_ptr.vmem [resolvable:$true] %s603
          %609 = dma.hbm_to_vmem [thread:$0]  %s602, 12288, %s604, %s592, 384, 384, 24
        $region52: #{roberta_classification_forward.1} parent=47 // pred_fallthru
          _
        // Predicated region
        $region53: #{roberta_classification_forward.1} parent=47 // pred_check
          %p610 = pneg %p163
        $region54: #{roberta_classification_forward.1} parent=47 // pred_check_branch
          %612 = sbr.rel (%p610) target = $region56
        $region55: #{roberta_classification_forward.1} parent=47 // pred_region
          %p613 = scmp.lt.s32.totalorder %s33, 1
          %s614 = scalar_select %p613, %s33, 1
          %s615 = smul.addr %s614, 6
          %s616 = scalar_lea.vmem %s5, %s615
        $region56: #{roberta_classification_forward.1} parent=47 // pred_fallthru
          _
        // Predicated region
        $region57: #{roberta_classification_forward.1} parent=47 // pred_check
          %p617 = pneg %p189
        $region58: #{roberta_classification_forward.1} parent=47 // pred_check_branch
          %619 = sbr.rel (%p617) target = $region60
        $region59: #{roberta_classification_forward.1} parent=47 // pred_region
          %p620 = scmp.lt.s32.totalorder %s33, 1
          %s621 = scalar_select %p620, %s33, 1
          %s622 = smul.addr %s621, 64
          %s623 = smul.addr %s622, 4
          %s624 = scalar_lea.vmem %s6, %s623
        $region60: #{roberta_classification_forward.1} parent=47 // pred_fallthru
          _
        // Predicated region
        $region61: #{roberta_classification_forward.1} parent=47 // pred_check
          %p625 = pneg %p215
        $region62: #{roberta_classification_forward.1} parent=47 // pred_check_branch
          %627 = sbr.rel (%p625) target = $region64
        $region63: #{roberta_classification_forward.1} parent=47 // pred_region
          %p628 = scmp.lt.s32.totalorder %s33, 1
          %s629 = scalar_select %p628, %s33, 1
          %s630 = smul.addr %s629, 2
          %s631 = scalar_lea.vmem %s7, %s630
        $region64: #{roberta_classification_forward.1} parent=47 // pred_fallthru
          _
        // Predicated region
        $region65: #{roberta_classification_forward.1} parent=47 // pred_check
          %p632 = pneg %p241
        $region66: #{roberta_classification_forward.1} parent=47 // pred_check_branch
          %634 = sbr.rel (%p632) target = $region68
        $region67: #{roberta_classification_forward.1} parent=47 // pred_region
          %p635 = scmp.lt.s32.totalorder %s33, 1
          %s636 = scalar_select %p635, %s33, 1
          %s637 = smul.addr %s636, 2
          %s638 = scalar_lea.vmem %s8, %s637
        $region68: #{roberta_classification_forward.1} parent=47 // pred_fallthru
          _
        // Predicated region
        $region69: #{roberta_classification_forward.1} parent=47 // pred_check
          %p639 = pneg %p267
        $region70: #{roberta_classification_forward.1} parent=47 // pred_check_branch
          %641 = sbr.rel (%p639) target = $region72
        $region71: #{roberta_classification_forward.1} parent=47 // pred_region
          %p642 = scmp.lt.s32.totalorder %s33, 1
          %s643 = scalar_select %p642, %s33, 1
          %s644 = smul.addr %s643, 2
          %s645 = scalar_lea.vmem %s9, %s644
        $region72: #{roberta_classification_forward.1} parent=47 // pred_fallthru
          _
        // Predicated region
        $region73: #{roberta_classification_forward.1} parent=47 // pred_check
          %p646 = pneg %p293
        $region74: #{roberta_classification_forward.1} parent=47 // pred_check_branch
          %648 = sbr.rel (%p646) target = $region76
        $region75: #{roberta_classification_forward.1} parent=47 // pred_region
          %s649 = sand.u32 %s33, 1
          %s650 = scalar_lea.sflag [#allocation6], %s649
          %s651 = sand.u32 %s283, 1
          %s652 = smul.addr %s651, 512
          %s653 = scalar_lea.vmem [#allocation5], %s652
          %655 = vsyncadd %s650, 0
          %s656 = smul.addr %s33, 128
          %s657 = smul.addr %s656, 4
          %s658 = scalar_lea.hbm %s10, %s657
          %s659 = sshll.u32 %s658, 4
          %s660 = int_to_ptr.hbm [resolvable:$true] %s659
          %s661 = sshll.u32 %s653, 4
          %s662 = int_to_ptr.vmem [resolvable:$true] %s661
          %667 = dma.hbm_to_vmem [thread:$0]  %s660, 8192, %s662, %s650, 256, 256, 16
        $region76: #{roberta_classification_forward.1} parent=47 // pred_fallthru
          _
        // Predicated region
        $region77: #{roberta_classification_forward.1} parent=47 // pred_check
          %p668 = pneg %p319
        $region78: #{roberta_classification_forward.1} parent=47 // pred_check_branch
          %670 = sbr.rel (%p668) target = $region80
        $region79: #{roberta_classification_forward.1} parent=47 // pred_region
          %p671 = scmp.lt.s32.totalorder %s33, 1
          %s672 = scalar_select %p671, %s33, 1
          %s673 = smul.addr %s672, 4
          %s674 = scalar_lea.vmem %s11, %s673
        $region80: #{roberta_classification_forward.1} parent=47 // pred_fallthru
          _
        // Predicated region
        $region81: #{roberta_classification_forward.1} parent=47 // pred_check
          %p675 = pneg %p345
        $region82: #{roberta_classification_forward.1} parent=47 // pred_check_branch
          %677 = sbr.rel (%p675) target = $region84
        $region83: #{roberta_classification_forward.1} parent=47 // pred_region
          %s678 = sand.u32 %s33, 1
          %s679 = scalar_lea.sflag [#allocation6], %s678
          %s680 = sand.u32 %s335, 1
          %s681 = smul.addr %s680, 512
          %s682 = scalar_lea.vmem [#allocation7], %s681
          %684 = vsyncadd %s679, 0
          %s685 = smul.addr %s33, 128
          %s686 = smul.addr %s685, 4
          %s687 = scalar_lea.hbm %s12, %s686
          %s688 = sshll.u32 %s687, 4
          %s689 = int_to_ptr.hbm [resolvable:$true] %s688
          %s690 = sshll.u32 %s682, 4
          %s691 = int_to_ptr.vmem [resolvable:$true] %s690
          %696 = dma.hbm_to_vmem [thread:$0]  %s689, 8192, %s691, %s679, 128, 128, 8
        $region84: #{roberta_classification_forward.1} parent=47 // pred_fallthru
          _
        // Predicated region
        $region85: #{roberta_classification_forward.1} parent=47 // pred_check
          %p697 = pneg %p371
        $region86: #{roberta_classification_forward.1} parent=47 // pred_check_branch
          %699 = sbr.rel (%p697) target = $region88
        $region87: #{roberta_classification_forward.1} parent=47 // pred_region
          %p700 = scmp.lt.s32.totalorder %s33, 1
          %s701 = scalar_select %p700, %s33, 1
          %s702 = smul.addr %s701, 2
          %s703 = scalar_lea.vmem %s13, %s702
        $region88: #{roberta_classification_forward.1} parent=47 // pred_fallthru
          _
        // Predicated region
        $region89: #{roberta_classification_forward.1} parent=47 // pred_check
          %p704 = pneg %p397
        $region90: #{roberta_classification_forward.1} parent=47 // pred_check_branch
          %706 = sbr.rel (%p704) target = $region92
        $region91: #{roberta_classification_forward.1} parent=47 // pred_region
          %p707 = scmp.lt.s32.totalorder %s33, 1
          %s708 = scalar_select %p707, %s33, 1
          %s709 = smul.addr %s708, 2
          %s710 = scalar_lea.vmem %s14, %s709
        $region92: #{roberta_classification_forward.1} parent=47 // pred_fallthru
          _
        // Predicated region
        $region93: #{roberta_classification_forward.1} parent=47 // pred_check
          %p711 = pneg %p423
        $region94: #{roberta_classification_forward.1} parent=47 // pred_check_branch
          %713 = sbr.rel (%p711) target = $region96
        $region95: #{roberta_classification_forward.1} parent=47 // pred_region
          %p714 = scmp.lt.s32.totalorder %s33, 1
          %s715 = scalar_select %p714, %s33, 1
          %s716 = smul.addr %s715, 2
          %s717 = scalar_lea.vmem %s15, %s716
        $region96: #{roberta_classification_forward.1} parent=47 // pred_fallthru
          _
      $region48: #{roberta_classification_forward.1} parent=5 // pred_fallthru
        _
      %p718 = scmp.le.s32.totalorder 1, %s33
      %p719 = scmp.lt.s32.totalorder %s33, 3
      %p720 = pnand %p718, %p719
      %p721 = pneg %p720
      // Predicated region
      $region97: #{roberta_classification_forward.1} parent=5 // pred_check
        _
      $region98: #{roberta_classification_forward.1} parent=5 // pred_check_branch
        %723 = sbr.rel (%p720) target = $region100
      $region99: #{roberta_classification_forward.1} parent=5 // pred_region
        %s724 = ssub.s32 %s33, 1
        %s725 = sand.u32 %s130, 1
        %s726 = scalar_lea.sflag [#allocation4], %s725
        %s727 = sand.u32 %s130, 1
        %s728 = smul.addr %s727, 768
        %s729 = scalar_lea.vmem [#allocation3], %s728
        // Predicated region
        $region101: #{roberta_classification_forward.1} parent=99 // pred_check
          %p730 = pneg %p143
        $region102: #{roberta_classification_forward.1} parent=99 // pred_check_branch
          %732 = sbr.rel (%p730) target = $region104
        $region103: #{roberta_classification_forward.1} parent=99 // pred_region
          %734 = dma.done %s726, 12288
        $region104: #{roberta_classification_forward.1} parent=99 // pred_fallthru
          _
        %s735 = sand.u32 %s38, 1
        %s736 = scalar_lea.sflag [#allocation6], %s735
        %s737 = sand.u32 %s286, 1
        %s738 = smul.addr %s737, 512
        %s739 = scalar_lea.vmem [#allocation5], %s738
        // Predicated region
        $region105: #{roberta_classification_forward.1} parent=99 // pred_check
          %p740 = pneg %p299
        $region106: #{roberta_classification_forward.1} parent=99 // pred_check_branch
          %742 = sbr.rel (%p740) target = $region108
        $region107: #{roberta_classification_forward.1} parent=99 // pred_region
          %744 = dma.done %s736, 8192
        $region108: #{roberta_classification_forward.1} parent=99 // pred_fallthru
          _
        %s745 = sand.u32 %s38, 1
        %s746 = scalar_lea.sflag [#allocation6], %s745
        %s747 = sand.u32 %s338, 1
        %s748 = smul.addr %s747, 512
        %s749 = scalar_lea.vmem [#allocation7], %s748
        // Predicated region
        $region109: #{roberta_classification_forward.1} parent=99 // pred_check
          %p750 = pneg %p351
        $region110: #{roberta_classification_forward.1} parent=99 // pred_check_branch
          %752 = sbr.rel (%p750) target = $region112
        $region111: #{roberta_classification_forward.1} parent=99 // pred_region
          %754 = dma.done %s746, 8192
        $region112: #{roberta_classification_forward.1} parent=99 // pred_fallthru
          _
        // Predicated region
        $region113: #{roberta_classification_forward.1} parent=99 // pred_check
          %p755 = pneg %p492
        $region114: #{roberta_classification_forward.1} parent=99 // pred_check_branch
          %757 = sbr.rel (%p755) target = $region116
        $region115: #{roberta_classification_forward.1} parent=99 // pred_region
          %759 = dma.done [#allocation9], 2048
        $region116: #{roberta_classification_forward.1} parent=99 // pred_fallthru
          _
        %p760 = pneg %p54
        %p761 = pneg %p51
        %p762 = pneg %p75
        %p763 = pneg %p72
        %p764 = pneg %p96
        %p765 = pneg %p93
        %p766 = pneg %p117
        %p767 = pneg %p114
        %s768 = sand.u32 %s130, 1
        %s769 = scalar_lea.sflag [#allocation4], %s768
        %s770 = sand.u32 %s130, 1
        %s771 = smul.addr %s770, 768
        %s772 = scalar_lea.vmem [#allocation3], %s771
        %p773 = pneg %p143
        %p774 = pneg %p140
        %p775 = scmp.lt.s32.totalorder %s38, 1
        %s776 = scalar_select %p775, %s38, 1
        %s777 = smul.addr %s776, 6
        %s778 = scalar_lea.vmem %s5, %s777
        %p779 = pneg %p169
        %p780 = pneg %p166
        %p781 = scmp.lt.s32.totalorder %s38, 1
        %s782 = scalar_select %p781, %s38, 1
        %s783 = smul.addr %s782, 64
        %s784 = smul.addr %s783, 4
        %s785 = scalar_lea.vmem %s6, %s784
        %p786 = pneg %p195
        %p787 = pneg %p192
        %p788 = scmp.lt.s32.totalorder %s38, 1
        %s789 = scalar_select %p788, %s38, 1
        %s790 = smul.addr %s789, 2
        %s791 = scalar_lea.vmem %s7, %s790
        %p792 = pneg %p221
        %p793 = pneg %p218
        %p794 = scmp.lt.s32.totalorder %s38, 1
        %s795 = scalar_select %p794, %s38, 1
        %s796 = smul.addr %s795, 2
        %s797 = scalar_lea.vmem %s8, %s796
        %p798 = pneg %p247
        %p799 = pneg %p244
        %p800 = scmp.lt.s32.totalorder %s38, 1
        %s801 = scalar_select %p800, %s38, 1
        %s802 = smul.addr %s801, 2
        %s803 = scalar_lea.vmem %s9, %s802
        %p804 = pneg %p273
        %p805 = pneg %p270
        %s806 = sand.u32 %s38, 1
        %s807 = scalar_lea.sflag [#allocation6], %s806
        %s808 = sand.u32 %s286, 1
        %s809 = smul.addr %s808, 512
        %s810 = scalar_lea.vmem [#allocation5], %s809
        %p811 = pneg %p299
        %p812 = pneg %p296
        %p813 = scmp.lt.s32.totalorder %s38, 1
        %s814 = scalar_select %p813, %s38, 1
        %s815 = smul.addr %s814, 4
        %s816 = scalar_lea.vmem %s11, %s815
        %p817 = pneg %p325
        %p818 = pneg %p322
        %s819 = sand.u32 %s38, 1
        %s820 = scalar_lea.sflag [#allocation6], %s819
        %s821 = sand.u32 %s338, 1
        %s822 = smul.addr %s821, 512
        %s823 = scalar_lea.vmem [#allocation7], %s822
        %p824 = pneg %p351
        %p825 = pneg %p348
        %p826 = scmp.lt.s32.totalorder %s38, 1
        %s827 = scalar_select %p826, %s38, 1
        %s828 = smul.addr %s827, 2
        %s829 = scalar_lea.vmem %s13, %s828
        %p830 = pneg %p377
        %p831 = pneg %p374
        %p832 = scmp.lt.s32.totalorder %s38, 1
        %s833 = scalar_select %p832, %s38, 1
        %s834 = smul.addr %s833, 2
        %s835 = scalar_lea.vmem %s14, %s834
        %p836 = pneg %p403
        %p837 = pneg %p400
        %p838 = scmp.lt.s32.totalorder %s38, 1
        %s839 = scalar_select %p838, %s38, 1
        %s840 = smul.addr %s839, 2
        %s841 = scalar_lea.vmem %s15, %s840
        %p842 = pneg %p429
        %p843 = pneg %p426
        %p844 = pneg %p450
        %p845 = pneg %p447
        %p846 = pneg %p471
        %p847 = pneg %p468
        %p848 = pneg %p492
        %p849 = pneg %p489
        %p850 = pneg %p513
        %p851 = pneg %p510
        %p852 = pneg %p534
        %p853 = pneg %p531
        %p854 = scmp.lt.s32.totalorder %s38, 1
        %s855 = scalar_select %p854, %s38, 1
        %s856 = smul.addr %s855, 6
        %s857 = scalar_lea.vmem %s5, %s856
        %p858 = scmp.lt.s32.totalorder %s38, 1
        %s859 = scalar_select %p858, %s38, 1
        %s860 = smul.addr %s859, 64
        %s861 = smul.addr %s860, 4
        %s862 = scalar_lea.vmem %s6, %s861
        %p863 = scmp.lt.s32.totalorder %s38, 1
        %s864 = scalar_select %p863, %s38, 1
        %s865 = smul.addr %s864, 2
        %s866 = scalar_lea.vmem %s7, %s865
        %p867 = scmp.lt.s32.totalorder %s38, 1
        %s868 = scalar_select %p867, %s38, 1
        %s869 = smul.addr %s868, 2
        %s870 = scalar_lea.vmem %s8, %s869
        %p871 = scmp.lt.s32.totalorder %s38, 1
        %s872 = scalar_select %p871, %s38, 1
        %s873 = smul.addr %s872, 2
        %s874 = scalar_lea.vmem %s9, %s873
        %p875 = scmp.lt.s32.totalorder %s38, 1
        %s876 = scalar_select %p875, %s38, 1
        %s877 = smul.addr %s876, 4
        %s878 = scalar_lea.vmem %s11, %s877
        %p879 = scmp.lt.s32.totalorder %s38, 1
        %s880 = scalar_select %p879, %s38, 1
        %s881 = smul.addr %s880, 2
        %s882 = scalar_lea.vmem %s13, %s881
        %p883 = scmp.lt.s32.totalorder %s38, 1
        %s884 = scalar_select %p883, %s38, 1
        %s885 = smul.addr %s884, 2
        %s886 = scalar_lea.vmem %s14, %s885
        %p887 = scmp.lt.s32.totalorder %s38, 1
        %s888 = scalar_select %p887, %s38, 1
        %s889 = smul.addr %s888, 2
        %s890 = scalar_lea.vmem %s15, %s889
        %p892 = scmp.eq.s32.totalorder %s38, 0
        // Predicated region
        $region117: #{roberta_classification_forward.1} parent=99 // pred_check
          %p893 = pneg %p892
        $region118: #{roberta_classification_forward.1} parent=99 // pred_check_branch
          %895 = sbr.rel (%p893) target = $region120
        $region119: #{roberta_classification_forward.1} parent=99 // pred_region
          %v896 = vld [vmem:[%s0] sm:$0xff]
          %v897 = vld [vmem:[%s0 + $0x8] sm:$0xff]
          %v898 = vld [vmem:[%s0 + $0x10] sm:$0xff]
          %v899 = vld [vmem:[%s0 + $0x18] sm:$0xff]
          %v900 = vld [vmem:[%s2] sm:$0x3]
          %v901 = vld [vmem:[%s3] sm:$0x3]
          %v902 = vadd.f32 %v896, %v897
          %903 = vadd.xlane.f32.xlu0 %v902
          %v904 = vpop.xlane.xlu0 %903
          %v905 = vadd.f32 %v898, %v899
          %906 = vadd.xlane.f32.xlu0 %v905
          %v907 = vpop.xlane.xlu0 %906
          %v908 = vrcp.pop 256.0
          %v909 = vmul.f32 256.0, %v908
          %v910 = vsub.f32 1.0, %v909
          %v911 = vmul.f32 %v908, %v910
          %v912 = vadd.f32 %v908, %v911
          %vm913 = vweird.f32 %v908
          %v914 = vsel %vm913, %v908, %v912
          %v915 = vmul.f32 %v904, %v914
          %v916 = vmul.f32 %v907, %v914
          %v917 = vsub.f32 %v896, %v915
          %v918 = vsub.f32 %v897, %v915
          %v919 = vsub.f32 %v898, %v916
          %v920 = vsub.f32 %v899, %v916
          %v921 = vmul.f32 %v917, %v917
          %v922 = vmul.f32 %v918, %v918
          %v923 = vmul.f32 %v919, %v919
          %v924 = vmul.f32 %v920, %v920
          %v925 = vadd.f32 %v921, %v922
          %926 = vadd.xlane.f32.xlu0 %v925
          %v927 = vpop.xlane.xlu0 %926
          %v928 = vadd.f32 %v923, %v924
          %929 = vadd.xlane.f32.xlu0 %v928
          %v930 = vpop.xlane.xlu0 %929
          %v931 = vmul.f32 %v927, %v914
          %v932 = vmul.f32 %v930, %v914
          %v933 = vadd.f32 %v931, 1e-12
          %v934 = vadd.f32 %v932, 1e-12
          %v935 = vrsqrt.pop %v933
          %v936 = vmul.f32 %v935, %v933
          %v937 = vmul.f32 %v936, %v935
          %v938 = vmul.f32 0.5, %v937
          %v939 = vsub.f32 1.5, %v938
          %v940 = vmul.f32 %v935, %v939
          %vm941 = vweird.f32 %v933
          %vm942 = vweird.f32 %v935
          %vm943 = vmor %vm941, %vm942
          %v944 = vsel %vm943, %v935, %v940
          %v945 = vrsqrt.pop %v934
          %v946 = vmul.f32 %v945, %v934
          %v947 = vmul.f32 %v946, %v945
          %v948 = vmul.f32 0.5, %v947
          %v949 = vsub.f32 1.5, %v948
          %v950 = vmul.f32 %v945, %v949
          %vm951 = vweird.f32 %v934
          %vm952 = vweird.f32 %v945
          %vm953 = vmor %vm951, %vm952
          %v954 = vsel %vm953, %v945, %v950
          %v955 = vmul.f32 %v917, %v944
          %v956 = vmul.f32 %v918, %v944
          %v957 = vmul.f32 %v919, %v954
          %v958 = vmul.f32 %v920, %v954
          %v960 = vperm.slane %v900, 0
          %v961 = vperm.slane %v900, 1
          %v964 = vmul.f32 %v955, %v960
          %v965 = vmul.f32 %v956, %v961
          %v966 = vmul.f32 %v957, %v960
          %v967 = vmul.f32 %v958, %v961
          %v969 = vperm.slane %v901, 0
          %v970 = vperm.slane %v901, 1
          %v973 = vadd.f32 %v964, %v969
          %v974 = vadd.f32 %v965, %v970
          %v975 = vadd.f32 %v966, %v969
          %v976 = vadd.f32 %v967, %v970
          %977 = vst [vmem:[#allocation2] sm:$0xff] %v973
          %978 = vst [vmem:[#allocation2 + $0x8] sm:$0xff] %v974
          %979 = vst [vmem:[#allocation2 + $0x10] sm:$0xff] %v975
          %980 = vst [vmem:[#allocation2 + $0x18] sm:$0xff] %v976
        $region120: #{roberta_classification_forward.1} parent=99 // pred_fallthru
          _
        %v981 = vld [vmem:[#allocation2] sm:$0xff]
        %v982 = vld [vmem:[#allocation2 + $0x8] sm:$0xff]
        %v983 = vld [vmem:[#allocation2 + $0x10] sm:$0xff]
        %v984 = vld [vmem:[#allocation2 + $0x18] sm:$0xff]
        %v985 = vpack.c.bf16 %v983, %v981
        %v986 = vpack.c.bf16 %v984, %v982
        %v987 = vld [vmem:[%s1] sm:$0xff]
        %v988 = vld [vmem:[%s1 + $0x8] sm:$0xff]
        %v989 = vld [vmem:[%s729] sm:$0xff]
        %v990 = vld [vmem:[%s729 + $0x8] sm:$0xff]
        %v991 = vld [vmem:[%s729 + $0x10] sm:$0xff]
        %v992 = vld [vmem:[%s729 + $0x18] sm:$0xff]
        %v993 = vld [vmem:[%s729 + $0x20] sm:$0xff]
        %v994 = vld [vmem:[%s729 + $0x28] sm:$0xff]
        %v995 = vld [vmem:[%s729 + $0x30] sm:$0xff]
        %v996 = vld [vmem:[%s729 + $0x38] sm:$0xff]
        %v997 = vld [vmem:[%s729 + $0x40] sm:$0xff]
        %v998 = vld [vmem:[%s729 + $0x48] sm:$0xff]
        %v999 = vld [vmem:[%s729 + $0x50] sm:$0xff]
        %v1000 = vld [vmem:[%s729 + $0x58] sm:$0xff]
        %v1001 = vld [vmem:[%s729 + $0x60] sm:$0xff]
        %v1002 = vld [vmem:[%s729 + $0x68] sm:$0xff]
        %v1003 = vld [vmem:[%s729 + $0x70] sm:$0xff]
        %v1004 = vld [vmem:[%s729 + $0x78] sm:$0xff]
        %v1005 = vld [vmem:[%s729 + $0x80] sm:$0xff]
        %v1006 = vld [vmem:[%s729 + $0x88] sm:$0xff]
        %v1007 = vld [vmem:[%s729 + $0x90] sm:$0xff]
        %v1008 = vld [vmem:[%s729 + $0x98] sm:$0xff]
        %v1009 = vld [vmem:[%s729 + $0xa0] sm:$0xff]
        %v1010 = vld [vmem:[%s729 + $0xa8] sm:$0xff]
        %v1011 = vld [vmem:[%s729 + $0xb0] sm:$0xff]
        %v1012 = vld [vmem:[%s729 + $0xb8] sm:$0xff]
        %v1013 = vld [vmem:[%s729 + $0xc0] sm:$0xff]
        %v1014 = vld [vmem:[%s729 + $0xc8] sm:$0xff]
        %v1015 = vld [vmem:[%s729 + $0xd0] sm:$0xff]
        %v1016 = vld [vmem:[%s729 + $0xd8] sm:$0xff]
        %v1017 = vld [vmem:[%s729 + $0xe0] sm:$0xff]
        %v1018 = vld [vmem:[%s729 + $0xe8] sm:$0xff]
        %v1019 = vld [vmem:[%s729 + $0xf0] sm:$0xff]
        %v1020 = vld [vmem:[%s729 + $0xf8] sm:$0xff]
        %v1021 = vld [vmem:[%s729 + $0x100] sm:$0xff]
        %v1022 = vld [vmem:[%s729 + $0x108] sm:$0xff]
        %v1023 = vld [vmem:[%s729 + $0x110] sm:$0xff]
        %v1024 = vld [vmem:[%s729 + $0x118] sm:$0xff]
        %v1025 = vld [vmem:[%s729 + $0x120] sm:$0xff]
        %v1026 = vld [vmem:[%s729 + $0x128] sm:$0xff]
        %v1027 = vld [vmem:[%s729 + $0x130] sm:$0xff]
        %v1028 = vld [vmem:[%s729 + $0x138] sm:$0xff]
        %v1029 = vld [vmem:[%s729 + $0x140] sm:$0xff]
        %v1030 = vld [vmem:[%s729 + $0x148] sm:$0xff]
        %v1031 = vld [vmem:[%s729 + $0x150] sm:$0xff]
        %v1032 = vld [vmem:[%s729 + $0x158] sm:$0xff]
        %v1033 = vld [vmem:[%s729 + $0x160] sm:$0xff]
        %v1034 = vld [vmem:[%s729 + $0x168] sm:$0xff]
        %v1035 = vld [vmem:[%s729 + $0x170] sm:$0xff]
        %v1036 = vld [vmem:[%s729 + $0x178] sm:$0xff]
        %v1037 = vld [vmem:[%s729 + $0x180] sm:$0xff]
        %v1038 = vld [vmem:[%s729 + $0x188] sm:$0xff]
        %v1039 = vld [vmem:[%s729 + $0x190] sm:$0xff]
        %v1040 = vld [vmem:[%s729 + $0x198] sm:$0xff]
        %v1041 = vld [vmem:[%s729 + $0x1a0] sm:$0xff]
        %v1042 = vld [vmem:[%s729 + $0x1a8] sm:$0xff]
        %v1043 = vld [vmem:[%s729 + $0x1b0] sm:$0xff]
        %v1044 = vld [vmem:[%s729 + $0x1b8] sm:$0xff]
        %v1045 = vld [vmem:[%s729 + $0x1c0] sm:$0xff]
        %v1046 = vld [vmem:[%s729 + $0x1c8] sm:$0xff]
        %v1047 = vld [vmem:[%s729 + $0x1d0] sm:$0xff]
        %v1048 = vld [vmem:[%s729 + $0x1d8] sm:$0xff]
        %v1049 = vld [vmem:[%s729 + $0x1e0] sm:$0xff]
        %v1050 = vld [vmem:[%s729 + $0x1e8] sm:$0xff]
        %v1051 = vld [vmem:[%s729 + $0x1f0] sm:$0xff]
        %v1052 = vld [vmem:[%s729 + $0x1f8] sm:$0xff]
        %v1053 = vld [vmem:[%s729 + $0x200] sm:$0xff]
        %v1054 = vld [vmem:[%s729 + $0x208] sm:$0xff]
        %v1055 = vld [vmem:[%s729 + $0x210] sm:$0xff]
        %v1056 = vld [vmem:[%s729 + $0x218] sm:$0xff]
        %v1057 = vld [vmem:[%s729 + $0x220] sm:$0xff]
        %v1058 = vld [vmem:[%s729 + $0x228] sm:$0xff]
        %v1059 = vld [vmem:[%s729 + $0x230] sm:$0xff]
        %v1060 = vld [vmem:[%s729 + $0x238] sm:$0xff]
        %v1061 = vld [vmem:[%s729 + $0x240] sm:$0xff]
        %v1062 = vld [vmem:[%s729 + $0x248] sm:$0xff]
        %v1063 = vld [vmem:[%s729 + $0x250] sm:$0xff]
        %v1064 = vld [vmem:[%s729 + $0x258] sm:$0xff]
        %v1065 = vld [vmem:[%s729 + $0x260] sm:$0xff]
        %v1066 = vld [vmem:[%s729 + $0x268] sm:$0xff]
        %v1067 = vld [vmem:[%s729 + $0x270] sm:$0xff]
        %v1068 = vld [vmem:[%s729 + $0x278] sm:$0xff]
        %v1069 = vld [vmem:[%s729 + $0x280] sm:$0xff]
        %v1070 = vld [vmem:[%s729 + $0x288] sm:$0xff]
        %v1071 = vld [vmem:[%s729 + $0x290] sm:$0xff]
        %v1072 = vld [vmem:[%s729 + $0x298] sm:$0xff]
        %v1073 = vld [vmem:[%s729 + $0x2a0] sm:$0xff]
        %v1074 = vld [vmem:[%s729 + $0x2a8] sm:$0xff]
        %v1075 = vld [vmem:[%s729 + $0x2b0] sm:$0xff]
        %v1076 = vld [vmem:[%s729 + $0x2b8] sm:$0xff]
        %v1077 = vld [vmem:[%s729 + $0x2c0] sm:$0xff]
        %v1078 = vld [vmem:[%s729 + $0x2c8] sm:$0xff]
        %v1079 = vld [vmem:[%s729 + $0x2d0] sm:$0xff]
        %v1080 = vld [vmem:[%s729 + $0x2d8] sm:$0xff]
        %v1081 = vld [vmem:[%s729 + $0x2e0] sm:$0xff]
        %v1082 = vld [vmem:[%s729 + $0x2e8] sm:$0xff]
        %v1083 = vld [vmem:[%s729 + $0x2f0] sm:$0xff]
        %v1084 = vld [vmem:[%s729 + $0x2f8] sm:$0xff]
        %v1085 = vld [vmem:[%s857] sm:$0x3f]
        %v1087 = vperm.slane %v1085, 0
        %v1088 = vperm.slane %v1085, 1
        %v1089 = vperm.slane %v1085, 2
        %v1090 = vperm.slane %v1085, 3
        %v1091 = vperm.slane %v1085, 4
        %v1092 = vperm.slane %v1085, 5
        %v1195 = vunpack.c.l.b16 %v989
        %v1196 = vunpack.c.h.b16 %v989
        %v1197 = vunpack.c.l.b16 %v990
        %v1198 = vunpack.c.h.b16 %v990
        %v1199 = vunpack.c.l.b16 %v991
        %v1200 = vunpack.c.h.b16 %v991
        %v1201 = vunpack.c.l.b16 %v992
        %v1202 = vunpack.c.h.b16 %v992
        %v1203 = vunpack.c.l.b16 %v993
        %v1204 = vunpack.c.h.b16 %v993
        %v1205 = vunpack.c.l.b16 %v994
        %v1206 = vunpack.c.h.b16 %v994
        %v1207 = vunpack.c.l.b16 %v995
        %v1208 = vunpack.c.h.b16 %v995
        %v1209 = vunpack.c.l.b16 %v996
        %v1210 = vunpack.c.h.b16 %v996
        %v1211 = vunpack.c.l.b16 %v997
        %v1212 = vunpack.c.h.b16 %v997
        %v1213 = vunpack.c.l.b16 %v998
        %v1214 = vunpack.c.h.b16 %v998
        %v1215 = vunpack.c.l.b16 %v999
        %v1216 = vunpack.c.h.b16 %v999
        %v1217 = vunpack.c.l.b16 %v1000
        %v1218 = vunpack.c.h.b16 %v1000
        %v1219 = vunpack.c.l.b16 %v1001
        %v1220 = vunpack.c.h.b16 %v1001
        %v1221 = vunpack.c.l.b16 %v1002
        %v1222 = vunpack.c.h.b16 %v1002
        %v1223 = vunpack.c.l.b16 %v1003
        %v1224 = vunpack.c.h.b16 %v1003
        %v1225 = vunpack.c.l.b16 %v1004
        %v1226 = vunpack.c.h.b16 %v1004
        %v1227 = vunpack.c.l.b16 %v1005
        %v1228 = vunpack.c.h.b16 %v1005
        %v1229 = vunpack.c.l.b16 %v1006
        %v1230 = vunpack.c.h.b16 %v1006
        %v1231 = vunpack.c.l.b16 %v1007
        %v1232 = vunpack.c.h.b16 %v1007
        %v1233 = vunpack.c.l.b16 %v1008
        %v1234 = vunpack.c.h.b16 %v1008
        %v1235 = vunpack.c.l.b16 %v1009
        %v1236 = vunpack.c.h.b16 %v1009
        %v1237 = vunpack.c.l.b16 %v1010
        %v1238 = vunpack.c.h.b16 %v1010
        %v1239 = vunpack.c.l.b16 %v1011
        %v1240 = vunpack.c.h.b16 %v1011
        %v1241 = vunpack.c.l.b16 %v1012
        %v1242 = vunpack.c.h.b16 %v1012
        %v1243 = vunpack.c.l.b16 %v1013
        %v1244 = vunpack.c.h.b16 %v1013
        %v1245 = vunpack.c.l.b16 %v1014
        %v1246 = vunpack.c.h.b16 %v1014
        %v1247 = vunpack.c.l.b16 %v1015
        %v1248 = vunpack.c.h.b16 %v1015
        %v1249 = vunpack.c.l.b16 %v1016
        %v1250 = vunpack.c.h.b16 %v1016
        %v1251 = vunpack.c.l.b16 %v1017
        %v1252 = vunpack.c.h.b16 %v1017
        %v1253 = vunpack.c.l.b16 %v1018
        %v1254 = vunpack.c.h.b16 %v1018
        %v1255 = vunpack.c.l.b16 %v1019
        %v1256 = vunpack.c.h.b16 %v1019
        %v1257 = vunpack.c.l.b16 %v1020
        %v1258 = vunpack.c.h.b16 %v1020
        %v1259 = vunpack.c.l.b16 %v1021
        %v1260 = vunpack.c.h.b16 %v1021
        %v1261 = vunpack.c.l.b16 %v1022
        %v1262 = vunpack.c.h.b16 %v1022
        %v1263 = vunpack.c.l.b16 %v1023
        %v1264 = vunpack.c.h.b16 %v1023
        %v1265 = vunpack.c.l.b16 %v1024
        %v1266 = vunpack.c.h.b16 %v1024
        %v1267 = vunpack.c.l.b16 %v1025
        %v1268 = vunpack.c.h.b16 %v1025
        %v1269 = vunpack.c.l.b16 %v1026
        %v1270 = vunpack.c.h.b16 %v1026
        %v1271 = vunpack.c.l.b16 %v1027
        %v1272 = vunpack.c.h.b16 %v1027
        %v1273 = vunpack.c.l.b16 %v1028
        %v1274 = vunpack.c.h.b16 %v1028
        %v1275 = vunpack.c.l.b16 %v1029
        %v1276 = vunpack.c.h.b16 %v1029
        %v1277 = vunpack.c.l.b16 %v1030
        %v1278 = vunpack.c.h.b16 %v1030
        %v1279 = vunpack.c.l.b16 %v1031
        %v1280 = vunpack.c.h.b16 %v1031
        %v1281 = vunpack.c.l.b16 %v1032
        %v1282 = vunpack.c.h.b16 %v1032
        %v1283 = vunpack.c.l.b16 %v1033
        %v1284 = vunpack.c.h.b16 %v1033
        %v1285 = vunpack.c.l.b16 %v1034
        %v1286 = vunpack.c.h.b16 %v1034
        %v1287 = vunpack.c.l.b16 %v1035
        %v1288 = vunpack.c.h.b16 %v1035
        %v1289 = vunpack.c.l.b16 %v1036
        %v1290 = vunpack.c.h.b16 %v1036
        %v1291 = vunpack.c.l.b16 %v1037
        %v1292 = vunpack.c.h.b16 %v1037
        %v1293 = vunpack.c.l.b16 %v1038
        %v1294 = vunpack.c.h.b16 %v1038
        %v1295 = vunpack.c.l.b16 %v1039
        %v1296 = vunpack.c.h.b16 %v1039
        %v1297 = vunpack.c.l.b16 %v1040
        %v1298 = vunpack.c.h.b16 %v1040
        %v1299 = vunpack.c.l.b16 %v1041
        %v1300 = vunpack.c.h.b16 %v1041
        %v1301 = vunpack.c.l.b16 %v1042
        %v1302 = vunpack.c.h.b16 %v1042
        %v1303 = vunpack.c.l.b16 %v1043
        %v1304 = vunpack.c.h.b16 %v1043
        %v1305 = vunpack.c.l.b16 %v1044
        %v1306 = vunpack.c.h.b16 %v1044
        %v1307 = vunpack.c.l.b16 %v1045
        %v1308 = vunpack.c.h.b16 %v1045
        %v1309 = vunpack.c.l.b16 %v1046
        %v1310 = vunpack.c.h.b16 %v1046
        %v1311 = vunpack.c.l.b16 %v1047
        %v1312 = vunpack.c.h.b16 %v1047
        %v1313 = vunpack.c.l.b16 %v1048
        %v1314 = vunpack.c.h.b16 %v1048
        %v1315 = vunpack.c.l.b16 %v1049
        %v1316 = vunpack.c.h.b16 %v1049
        %v1317 = vunpack.c.l.b16 %v1050
        %v1318 = vunpack.c.h.b16 %v1050
        %v1319 = vunpack.c.l.b16 %v1051
        %v1320 = vunpack.c.h.b16 %v1051
        %v1321 = vunpack.c.l.b16 %v1052
        %v1322 = vunpack.c.h.b16 %v1052
        %v1323 = vunpack.c.l.b16 %v1053
        %v1324 = vunpack.c.h.b16 %v1053
        %v1325 = vunpack.c.l.b16 %v1054
        %v1326 = vunpack.c.h.b16 %v1054
        %v1327 = vunpack.c.l.b16 %v1055
        %v1328 = vunpack.c.h.b16 %v1055
        %v1329 = vunpack.c.l.b16 %v1056
        %v1330 = vunpack.c.h.b16 %v1056
        %v1331 = vunpack.c.l.b16 %v1057
        %v1332 = vunpack.c.h.b16 %v1057
        %v1333 = vunpack.c.l.b16 %v1058
        %v1334 = vunpack.c.h.b16 %v1058
        %v1335 = vunpack.c.l.b16 %v1059
        %v1336 = vunpack.c.h.b16 %v1059
        %v1337 = vunpack.c.l.b16 %v1060
        %v1338 = vunpack.c.h.b16 %v1060
        %v1339 = vunpack.c.l.b16 %v1061
        %v1340 = vunpack.c.h.b16 %v1061
        %v1341 = vunpack.c.l.b16 %v1062
        %v1342 = vunpack.c.h.b16 %v1062
        %v1343 = vunpack.c.l.b16 %v1063
        %v1344 = vunpack.c.h.b16 %v1063
        %v1345 = vunpack.c.l.b16 %v1064
        %v1346 = vunpack.c.h.b16 %v1064
        %v1347 = vunpack.c.l.b16 %v1065
        %v1348 = vunpack.c.h.b16 %v1065
        %v1349 = vunpack.c.l.b16 %v1066
        %v1350 = vunpack.c.h.b16 %v1066
        %v1351 = vunpack.c.l.b16 %v1067
        %v1352 = vunpack.c.h.b16 %v1067
        %v1353 = vunpack.c.l.b16 %v1068
        %v1354 = vunpack.c.h.b16 %v1068
        %v1355 = vunpack.c.l.b16 %v1069
        %v1356 = vunpack.c.h.b16 %v1069
        %v1357 = vunpack.c.l.b16 %v1070
        %v1358 = vunpack.c.h.b16 %v1070
        %v1359 = vunpack.c.l.b16 %v1071
        %v1360 = vunpack.c.h.b16 %v1071
        %v1361 = vunpack.c.l.b16 %v1072
        %v1362 = vunpack.c.h.b16 %v1072
        %v1363 = vunpack.c.l.b16 %v1073
        %v1364 = vunpack.c.h.b16 %v1073
        %v1365 = vunpack.c.l.b16 %v1074
        %v1366 = vunpack.c.h.b16 %v1074
        %v1367 = vunpack.c.l.b16 %v1075
        %v1368 = vunpack.c.h.b16 %v1075
        %v1369 = vunpack.c.l.b16 %v1076
        %v1370 = vunpack.c.h.b16 %v1076
        %v1371 = vunpack.c.l.b16 %v1077
        %v1372 = vunpack.c.h.b16 %v1077
        %v1373 = vunpack.c.l.b16 %v1078
        %v1374 = vunpack.c.h.b16 %v1078
        %v1375 = vunpack.c.l.b16 %v1079
        %v1376 = vunpack.c.h.b16 %v1079
        %v1377 = vunpack.c.l.b16 %v1080
        %v1378 = vunpack.c.h.b16 %v1080
        %v1379 = vunpack.c.l.b16 %v1081
        %v1380 = vunpack.c.h.b16 %v1081
        %v1381 = vunpack.c.l.b16 %v1082
        %v1382 = vunpack.c.h.b16 %v1082
        %v1383 = vunpack.c.l.b16 %v1083
        %v1384 = vunpack.c.h.b16 %v1083
        %v1385 = vunpack.c.l.b16 %v1084
        %v1386 = vunpack.c.h.b16 %v1084
        %v1387 = vpack.c.b16 %v1201, %v1195
        %v1388 = vpack.c.b16 %v1202, %v1196
        %v1389 = vpack.c.b16 %v1203, %v1197
        %v1390 = vpack.c.b16 %v1204, %v1198
        %v1391 = vpack.c.b16 %v1205, %v1199
        %v1392 = vpack.c.b16 %v1206, %v1200
        %v1393 = vpack.c.b16 %v1213, %v1207
        %v1394 = vpack.c.b16 %v1214, %v1208
        %v1395 = vpack.c.b16 %v1215, %v1209
        %v1396 = vpack.c.b16 %v1216, %v1210
        %v1397 = vpack.c.b16 %v1217, %v1211
        %v1398 = vpack.c.b16 %v1218, %v1212
        %v1399 = vpack.c.b16 %v1225, %v1219
        %v1400 = vpack.c.b16 %v1226, %v1220
        %v1401 = vpack.c.b16 %v1227, %v1221
        %v1402 = vpack.c.b16 %v1228, %v1222
        %v1403 = vpack.c.b16 %v1229, %v1223
        %v1404 = vpack.c.b16 %v1230, %v1224
        %v1405 = vpack.c.b16 %v1237, %v1231
        %v1406 = vpack.c.b16 %v1238, %v1232
        %v1407 = vpack.c.b16 %v1239, %v1233
        %v1408 = vpack.c.b16 %v1240, %v1234
        %v1409 = vpack.c.b16 %v1241, %v1235
        %v1410 = vpack.c.b16 %v1242, %v1236
        %v1411 = vpack.c.b16 %v1249, %v1243
        %v1412 = vpack.c.b16 %v1250, %v1244
        %v1413 = vpack.c.b16 %v1251, %v1245
        %v1414 = vpack.c.b16 %v1252, %v1246
        %v1415 = vpack.c.b16 %v1253, %v1247
        %v1416 = vpack.c.b16 %v1254, %v1248
        %v1417 = vpack.c.b16 %v1261, %v1255
        %v1418 = vpack.c.b16 %v1262, %v1256
        %v1419 = vpack.c.b16 %v1263, %v1257
        %v1420 = vpack.c.b16 %v1264, %v1258
        %v1421 = vpack.c.b16 %v1265, %v1259
        %v1422 = vpack.c.b16 %v1266, %v1260
        %v1423 = vpack.c.b16 %v1273, %v1267
        %v1424 = vpack.c.b16 %v1274, %v1268
        %v1425 = vpack.c.b16 %v1275, %v1269
        %v1426 = vpack.c.b16 %v1276, %v1270
        %v1427 = vpack.c.b16 %v1277, %v1271
        %v1428 = vpack.c.b16 %v1278, %v1272
        %v1429 = vpack.c.b16 %v1285, %v1279
        %v1430 = vpack.c.b16 %v1286, %v1280
        %v1431 = vpack.c.b16 %v1287, %v1281
        %v1432 = vpack.c.b16 %v1288, %v1282
        %v1433 = vpack.c.b16 %v1289, %v1283
        %v1434 = vpack.c.b16 %v1290, %v1284
        %v1435 = vpack.c.b16 %v1297, %v1291
        %v1436 = vpack.c.b16 %v1298, %v1292
        %v1437 = vpack.c.b16 %v1299, %v1293
        %v1438 = vpack.c.b16 %v1300, %v1294
        %v1439 = vpack.c.b16 %v1301, %v1295
        %v1440 = vpack.c.b16 %v1302, %v1296
        %v1441 = vpack.c.b16 %v1309, %v1303
        %v1442 = vpack.c.b16 %v1310, %v1304
        %v1443 = vpack.c.b16 %v1311, %v1305
        %v1444 = vpack.c.b16 %v1312, %v1306
        %v1445 = vpack.c.b16 %v1313, %v1307
        %v1446 = vpack.c.b16 %v1314, %v1308
        %v1447 = vpack.c.b16 %v1321, %v1315
        %v1448 = vpack.c.b16 %v1322, %v1316
        %v1449 = vpack.c.b16 %v1323, %v1317
        %v1450 = vpack.c.b16 %v1324, %v1318
        %v1451 = vpack.c.b16 %v1325, %v1319
        %v1452 = vpack.c.b16 %v1326, %v1320
        %v1453 = vpack.c.b16 %v1333, %v1327
        %v1454 = vpack.c.b16 %v1334, %v1328
        %v1455 = vpack.c.b16 %v1335, %v1329
        %v1456 = vpack.c.b16 %v1336, %v1330
        %v1457 = vpack.c.b16 %v1337, %v1331
        %v1458 = vpack.c.b16 %v1338, %v1332
        %v1459 = vpack.c.b16 %v1345, %v1339
        %v1460 = vpack.c.b16 %v1346, %v1340
        %v1461 = vpack.c.b16 %v1347, %v1341
        %v1462 = vpack.c.b16 %v1348, %v1342
        %v1463 = vpack.c.b16 %v1349, %v1343
        %v1464 = vpack.c.b16 %v1350, %v1344
        %v1465 = vpack.c.b16 %v1357, %v1351
        %v1466 = vpack.c.b16 %v1358, %v1352
        %v1467 = vpack.c.b16 %v1359, %v1353
        %v1468 = vpack.c.b16 %v1360, %v1354
        %v1469 = vpack.c.b16 %v1361, %v1355
        %v1470 = vpack.c.b16 %v1362, %v1356
        %v1471 = vpack.c.b16 %v1369, %v1363
        %v1472 = vpack.c.b16 %v1370, %v1364
        %v1473 = vpack.c.b16 %v1371, %v1365
        %v1474 = vpack.c.b16 %v1372, %v1366
        %v1475 = vpack.c.b16 %v1373, %v1367
        %v1476 = vpack.c.b16 %v1374, %v1368
        %v1477 = vpack.c.b16 %v1381, %v1375
        %v1478 = vpack.c.b16 %v1382, %v1376
        %v1479 = vpack.c.b16 %v1383, %v1377
        %v1480 = vpack.c.b16 %v1384, %v1378
        %v1481 = vpack.c.b16 %v1385, %v1379
        %v1482 = vpack.c.b16 %v1386, %v1380
        %1579 = vmatpush.bf16.msra.mxu0 %v1429
        %1580 = vmatpush.bf16.msra.mxu0 %v1423
        %1581 = vmatpush.bf16.msra.mxu0 %v1417
        %1582 = vmatpush.bf16.msra.mxu0 %v1411
        %1583 = vmatpush.bf16.msra.mxu0 %v1405
        %1584 = vmatpush.bf16.msra.mxu0 %v1399
        %1585 = vmatpush.bf16.msra.mxu0 %v1393
        %1586 = vmatpush.bf16.msra.mxu0 %v1387
        %1587 = vmatmul.bf16.gmra.mxu0 %v985
        %v1588 = vpop.f32.mrf.mxu0
        %v1589 = vadd.f32 %v1087, %v1588
        %v1590 = vpop.f32.mrf.mxu0
        %v1591 = vadd.f32 %v1087, %v1590
        %1592 = vdwg.mxu0
        %1593 = vmatpush.bf16.msra.mxu0 %v1477
        %1594 = vmatpush.bf16.msra.mxu0 %v1471
        %1595 = vmatpush.bf16.msra.mxu0 %v1465
        %1596 = vmatpush.bf16.msra.mxu0 %v1459
        %1597 = vmatpush.bf16.msra.mxu0 %v1453
        %1598 = vmatpush.bf16.msra.mxu0 %v1447
        %1599 = vmatpush.bf16.msra.mxu0 %v1441
        %1600 = vmatpush.bf16.msra.mxu0 %v1435
        %1601 = vmatmul.bf16.gmra.mxu0 %v986
        %v1602 = vpop.f32.mrf.mxu0
        %v1603 = vadd.f32 %v1589, %v1602
        %v1604 = vpop.f32.mrf.mxu0
        %v1605 = vadd.f32 %v1591, %v1604
        %1606 = vdwg.mxu0
        %1607 = vmatpush.bf16.msra.mxu0 %v1430
        %1608 = vmatpush.bf16.msra.mxu0 %v1424
        %1609 = vmatpush.bf16.msra.mxu0 %v1418
        %1610 = vmatpush.bf16.msra.mxu0 %v1412
        %1611 = vmatpush.bf16.msra.mxu0 %v1406
        %1612 = vmatpush.bf16.msra.mxu0 %v1400
        %1613 = vmatpush.bf16.msra.mxu0 %v1394
        %1614 = vmatpush.bf16.msra.mxu0 %v1388
        %1615 = vmatmul.bf16.gmra.mxu0 %v985
        %v1616 = vpop.f32.mrf.mxu0
        %v1617 = vadd.f32 %v1088, %v1616
        %v1618 = vpop.f32.mrf.mxu0
        %v1619 = vadd.f32 %v1088, %v1618
        %1620 = vdwg.mxu0
        %1621 = vmatpush.bf16.msra.mxu0 %v1478
        %1622 = vmatpush.bf16.msra.mxu0 %v1472
        %1623 = vmatpush.bf16.msra.mxu0 %v1466
        %1624 = vmatpush.bf16.msra.mxu0 %v1460
        %1625 = vmatpush.bf16.msra.mxu0 %v1454
        %1626 = vmatpush.bf16.msra.mxu0 %v1448
        %1627 = vmatpush.bf16.msra.mxu0 %v1442
        %1628 = vmatpush.bf16.msra.mxu0 %v1436
        %1629 = vmatmul.bf16.gmra.mxu0 %v986
        %v1630 = vpop.f32.mrf.mxu0
        %v1631 = vadd.f32 %v1617, %v1630
        %v1632 = vpop.f32.mrf.mxu0
        %v1633 = vadd.f32 %v1619, %v1632
        %1634 = vdwg.mxu0
        %1635 = vmatpush.bf16.msra.mxu0 %v1431
        %1636 = vmatpush.bf16.msra.mxu0 %v1425
        %1637 = vmatpush.bf16.msra.mxu0 %v1419
        %1638 = vmatpush.bf16.msra.mxu0 %v1413
        %1639 = vmatpush.bf16.msra.mxu0 %v1407
        %1640 = vmatpush.bf16.msra.mxu0 %v1401
        %1641 = vmatpush.bf16.msra.mxu0 %v1395
        %1642 = vmatpush.bf16.msra.mxu0 %v1389
        %1643 = vmatmul.bf16.gmra.mxu0 %v985
        %v1644 = vpop.f32.mrf.mxu0
        %v1645 = vadd.f32 %v1089, %v1644
        %v1646 = vpop.f32.mrf.mxu0
        %v1647 = vadd.f32 %v1089, %v1646
        %1648 = vdwg.mxu0
        %1649 = vmatpush.bf16.msra.mxu0 %v1479
        %1650 = vmatpush.bf16.msra.mxu0 %v1473
        %1651 = vmatpush.bf16.msra.mxu0 %v1467
        %1652 = vmatpush.bf16.msra.mxu0 %v1461
        %1653 = vmatpush.bf16.msra.mxu0 %v1455
        %1654 = vmatpush.bf16.msra.mxu0 %v1449
        %1655 = vmatpush.bf16.msra.mxu0 %v1443
        %1656 = vmatpush.bf16.msra.mxu0 %v1437
        %1657 = vmatmul.bf16.gmra.mxu0 %v986
        %v1658 = vpop.f32.mrf.mxu0
        %v1659 = vadd.f32 %v1645, %v1658
        %v1660 = vpop.f32.mrf.mxu0
        %v1661 = vadd.f32 %v1647, %v1660
        %1662 = vdwg.mxu0
        %1663 = vmatpush.bf16.msra.mxu0 %v1432
        %1664 = vmatpush.bf16.msra.mxu0 %v1426
        %1665 = vmatpush.bf16.msra.mxu0 %v1420
        %1666 = vmatpush.bf16.msra.mxu0 %v1414
        %1667 = vmatpush.bf16.msra.mxu0 %v1408
        %1668 = vmatpush.bf16.msra.mxu0 %v1402
        %1669 = vmatpush.bf16.msra.mxu0 %v1396
        %1670 = vmatpush.bf16.msra.mxu0 %v1390
        %1671 = vmatmul.bf16.gmra.mxu0 %v985
        %v1672 = vpop.f32.mrf.mxu0
        %v1673 = vadd.f32 %v1090, %v1672
        %v1674 = vpop.f32.mrf.mxu0
        %v1675 = vadd.f32 %v1090, %v1674
        %1676 = vdwg.mxu0
        %1677 = vmatpush.bf16.msra.mxu0 %v1480
        %1678 = vmatpush.bf16.msra.mxu0 %v1474
        %1679 = vmatpush.bf16.msra.mxu0 %v1468
        %1680 = vmatpush.bf16.msra.mxu0 %v1462
        %1681 = vmatpush.bf16.msra.mxu0 %v1456
        %1682 = vmatpush.bf16.msra.mxu0 %v1450
        %1683 = vmatpush.bf16.msra.mxu0 %v1444
        %1684 = vmatpush.bf16.msra.mxu0 %v1438
        %1685 = vmatmul.bf16.gmra.mxu0 %v986
        %v1686 = vpop.f32.mrf.mxu0
        %v1687 = vadd.f32 %v1673, %v1686
        %v1688 = vpop.f32.mrf.mxu0
        %v1689 = vadd.f32 %v1675, %v1688
        %1690 = vdwg.mxu0
        %1691 = vmatpush.bf16.msra.mxu0 %v1433
        %1692 = vmatpush.bf16.msra.mxu0 %v1427
        %1693 = vmatpush.bf16.msra.mxu0 %v1421
        %1694 = vmatpush.bf16.msra.mxu0 %v1415
        %1695 = vmatpush.bf16.msra.mxu0 %v1409
        %1696 = vmatpush.bf16.msra.mxu0 %v1403
        %1697 = vmatpush.bf16.msra.mxu0 %v1397
        %1698 = vmatpush.bf16.msra.mxu0 %v1391
        %1699 = vmatmul.bf16.gmra.mxu0 %v985
        %v1700 = vpop.f32.mrf.mxu0
        %v1701 = vadd.f32 %v1091, %v1700
        %v1702 = vpop.f32.mrf.mxu0
        %v1703 = vadd.f32 %v1091, %v1702
        %1704 = vdwg.mxu0
        %1705 = vmatpush.bf16.msra.mxu0 %v1481
        %1706 = vmatpush.bf16.msra.mxu0 %v1475
        %1707 = vmatpush.bf16.msra.mxu0 %v1469
        %1708 = vmatpush.bf16.msra.mxu0 %v1463
        %1709 = vmatpush.bf16.msra.mxu0 %v1457
        %1710 = vmatpush.bf16.msra.mxu0 %v1451
        %1711 = vmatpush.bf16.msra.mxu0 %v1445
        %1712 = vmatpush.bf16.msra.mxu0 %v1439
        %1713 = vmatmul.bf16.gmra.mxu0 %v986
        %v1714 = vpop.f32.mrf.mxu0
        %v1715 = vadd.f32 %v1701, %v1714
        %v1716 = vpop.f32.mrf.mxu0
        %v1717 = vadd.f32 %v1703, %v1716
        %1718 = vdwg.mxu0
        %1719 = vmatpush.bf16.msra.mxu0 %v1434
        %1720 = vmatpush.bf16.msra.mxu0 %v1428
        %1721 = vmatpush.bf16.msra.mxu0 %v1422
        %1722 = vmatpush.bf16.msra.mxu0 %v1416
        %1723 = vmatpush.bf16.msra.mxu0 %v1410
        %1724 = vmatpush.bf16.msra.mxu0 %v1404
        %1725 = vmatpush.bf16.msra.mxu0 %v1398
        %1726 = vmatpush.bf16.msra.mxu0 %v1392
        %1727 = vmatmul.bf16.gmra.mxu0 %v985
        %v1728 = vpop.f32.mrf.mxu0
        %v1729 = vadd.f32 %v1092, %v1728
        %v1730 = vpop.f32.mrf.mxu0
        %v1731 = vadd.f32 %v1092, %v1730
        %1732 = vdwg.mxu0
        %1733 = vmatpush.bf16.msra.mxu0 %v1482
        %1734 = vmatpush.bf16.msra.mxu0 %v1476
        %1735 = vmatpush.bf16.msra.mxu0 %v1470
        %1736 = vmatpush.bf16.msra.mxu0 %v1464
        %1737 = vmatpush.bf16.msra.mxu0 %v1458
        %1738 = vmatpush.bf16.msra.mxu0 %v1452
        %1739 = vmatpush.bf16.msra.mxu0 %v1446
        %1740 = vmatpush.bf16.msra.mxu0 %v1440
        %1741 = vmatmul.bf16.gmra.mxu0 %v986
        %v1742 = vpop.f32.mrf.mxu0
        %v1743 = vadd.f32 %v1729, %v1742
        %v1744 = vpop.f32.mrf.mxu0
        %v1745 = vadd.f32 %v1731, %v1744
        %1746 = vdwg.mxu0
        %v1747 = vpack.c.bf16 %v1605, %v1603
        %v1748 = vpack.c.bf16 %v1661, %v1659
        %v1749 = vpack.c.bf16 %v1717, %v1715
        %1750 = vmatpush.bf16.xpose.msra.mxu0 0
        %1751 = vmatpush.bf16.xpose.msra.mxu0 0
        %1752 = vmatpush.bf16.xpose.msra.mxu0 0
        %1753 = vmatpush.bf16.xpose.msra.mxu0 0
        %1754 = vmatpush.bf16.xpose.msra.mxu0 0
        %1755 = vmatpush.bf16.xpose.msra.mxu0 0
        %1756 = vmatpush.bf16.xpose.msra.mxu0 0
        %1757 = vmatpush.bf16.xpose.msra.mxu0 %v1748
        %1758 = vmatmul.bf16.gmra.mxu0 %v1747
        %v1759 = vpop.f32.mrf.mxu0
        %v1760 = vadd.f32 0.0, %v1759
        %v1761 = vpop.f32.mrf.mxu0
        %v1762 = vadd.f32 0.0, %v1761
        %1763 = vdwg.mxu0
        %v1764 = vmul.f32 %v1760, 0.088388346
        %v1765 = vmul.f32 %v1762, 0.088388346
        %v1766 = vadd.f32 %v1764, %v987
        %v1767 = vadd.f32 %v1765, %v988
        %vm1768 = vcmask 130048
        %v1769 = vsel %vm1768, %v1766, -inf
        %1770 = vmax.xlane.f32.xlu0 %v1769
        %v1771 = vpop.xlane.xlu0 %1770
        %v1772 = vsel %vm1768, %v1767, -inf
        %1773 = vmax.xlane.f32.xlu0 %v1772
        %v1774 = vpop.xlane.xlu0 %1773
        %v1775 = vsub.f32 %v1766, %v1771
        %v1776 = vsub.f32 %v1767, %v1774
        %v1777 = vmul.f32 %v1775, 1.442695
        %v1778 = vpow.pop %v1777
        %v1779 = vmul.f32 %v1776, 1.442695
        %v1780 = vpow.pop %v1779
        %v1781 = vsel %vm1768, %v1778, 0.0
        %1782 = vadd.xlane.f32.xlu0 %v1781
        %v1783 = vpop.xlane.xlu0 %1782
        %v1784 = vsel %vm1768, %v1780, 0.0
        %1785 = vadd.xlane.f32.xlu0 %v1784
        %v1786 = vpop.xlane.xlu0 %1785
        %v1787 = vrcp.pop %v1783
        %v1788 = vmul.f32 %v1783, %v1787
        %v1789 = vsub.f32 1.0, %v1788
        %v1790 = vmul.f32 %v1787, %v1789
        %v1791 = vadd.f32 %v1787, %v1790
        %vm1792 = vweird.f32 %v1783
        %vm1793 = vweird.f32 %v1787
        %vm1794 = vmor %vm1792, %vm1793
        %v1795 = vsel %vm1794, %v1787, %v1791
        %v1796 = vand.u32 2147483647, %v1783
        %vm1797 = vcmp.eq.f32.partialorder %v1796, 8.507059e+37
        %v1798 = vand.u32 %v1783, 2147483648
        %v1799 = vor.u32 1.1754944e-38, %v1798
        %v1800 = vsel %vm1797, %v1799, %v1795
        %v1801 = vmul.f32 %v1778, %v1800
        %v1802 = vrcp.pop %v1786
        %v1803 = vmul.f32 %v1786, %v1802
        %v1804 = vsub.f32 1.0, %v1803
        %v1805 = vmul.f32 %v1802, %v1804
        %v1806 = vadd.f32 %v1802, %v1805
        %vm1807 = vweird.f32 %v1786
        %vm1808 = vweird.f32 %v1802
        %vm1809 = vmor %vm1807, %vm1808
        %v1810 = vsel %vm1809, %v1802, %v1806
        %v1811 = vand.u32 2147483647, %v1786
        %vm1812 = vcmp.eq.f32.partialorder %v1811, 8.507059e+37
        %v1813 = vand.u32 %v1786, 2147483648
        %v1814 = vor.u32 1.1754944e-38, %v1813
        %v1815 = vsel %vm1812, %v1814, %v1810
        %v1816 = vmul.f32 %v1780, %v1815
        %v1817 = vpack.c.bf16 %v1816, %v1801
        %v1819 = vsel %vm1768, %v1817, 0
        %1821 = vmatpush.bf16.msra.mxu0 0
        %1822 = vmatpush.bf16.msra.mxu0 0
        %1823 = vmatpush.bf16.msra.mxu0 0
        %1824 = vmatpush.bf16.msra.mxu0 0
        %1825 = vmatpush.bf16.msra.mxu0 0
        %1826 = vmatpush.bf16.msra.mxu0 0
        %1827 = vmatpush.bf16.msra.mxu0 0
        %1828 = vmatpush.bf16.msra.mxu0 %v1749
        %1829 = vmatmul.bf16.gmra.mxu0 %v1819
        %v1830 = vpop.f32.mrf.mxu0
        %v1831 = vadd.f32 0.0, %v1830
        %v1832 = vpop.f32.mrf.mxu0
        %v1833 = vadd.f32 0.0, %v1832
        %1834 = vdwg.mxu0
        %v1835 = vpack.c.bf16 %v1633, %v1631
        %v1836 = vpack.c.bf16 %v1689, %v1687
        %v1837 = vpack.c.bf16 %v1745, %v1743
        %1838 = vmatpush.bf16.xpose.msra.mxu0 0
        %1839 = vmatpush.bf16.xpose.msra.mxu0 0
        %1840 = vmatpush.bf16.xpose.msra.mxu0 0
        %1841 = vmatpush.bf16.xpose.msra.mxu0 0
        %1842 = vmatpush.bf16.xpose.msra.mxu0 0
        %1843 = vmatpush.bf16.xpose.msra.mxu0 0
        %1844 = vmatpush.bf16.xpose.msra.mxu0 0
        %1845 = vmatpush.bf16.xpose.msra.mxu0 %v1836
        %1846 = vmatmul.bf16.gmra.mxu0 %v1835
        %v1847 = vpop.f32.mrf.mxu0
        %v1848 = vadd.f32 0.0, %v1847
        %v1849 = vpop.f32.mrf.mxu0
        %v1850 = vadd.f32 0.0, %v1849
        %1851 = vdwg.mxu0
        %v1852 = vmul.f32 %v1848, 0.088388346
        %v1853 = vmul.f32 %v1850, 0.088388346
        %v1854 = vadd.f32 %v1852, %v987
        %v1855 = vadd.f32 %v1853, %v988
        %v1856 = vsel %vm1768, %v1854, -inf
        %1857 = vmax.xlane.f32.xlu0 %v1856
        %v1858 = vpop.xlane.xlu0 %1857
        %v1859 = vsel %vm1768, %v1855, -inf
        %1860 = vmax.xlane.f32.xlu0 %v1859
        %v1861 = vpop.xlane.xlu0 %1860
        %v1862 = vsub.f32 %v1854, %v1858
        %v1863 = vsub.f32 %v1855, %v1861
        %v1864 = vmul.f32 %v1862, 1.442695
        %v1865 = vpow.pop %v1864
        %v1866 = vmul.f32 %v1863, 1.442695
        %v1867 = vpow.pop %v1866
        %v1868 = vsel %vm1768, %v1865, 0.0
        %1869 = vadd.xlane.f32.xlu0 %v1868
        %v1870 = vpop.xlane.xlu0 %1869
        %v1871 = vsel %vm1768, %v1867, 0.0
        %1872 = vadd.xlane.f32.xlu0 %v1871
        %v1873 = vpop.xlane.xlu0 %1872
        %v1874 = vrcp.pop %v1870
        %v1875 = vmul.f32 %v1870, %v1874
        %v1876 = vsub.f32 1.0, %v1875
        %v1877 = vmul.f32 %v1874, %v1876
        %v1878 = vadd.f32 %v1874, %v1877
        %vm1879 = vweird.f32 %v1870
        %vm1880 = vweird.f32 %v1874
        %vm1881 = vmor %vm1879, %vm1880
        %v1882 = vsel %vm1881, %v1874, %v1878
        %v1883 = vand.u32 2147483647, %v1870
        %vm1884 = vcmp.eq.f32.partialorder %v1883, 8.507059e+37
        %v1885 = vand.u32 %v1870, 2147483648
        %v1886 = vor.u32 1.1754944e-38, %v1885
        %v1887 = vsel %vm1884, %v1886, %v1882
        %v1888 = vmul.f32 %v1865, %v1887
        %v1889 = vrcp.pop %v1873
        %v1890 = vmul.f32 %v1873, %v1889
        %v1891 = vsub.f32 1.0, %v1890
        %v1892 = vmul.f32 %v1889, %v1891
        %v1893 = vadd.f32 %v1889, %v1892
        %vm1894 = vweird.f32 %v1873
        %vm1895 = vweird.f32 %v1889
        %vm1896 = vmor %vm1894, %vm1895
        %v1897 = vsel %vm1896, %v1889, %v1893
        %v1898 = vand.u32 2147483647, %v1873
        %vm1899 = vcmp.eq.f32.partialorder %v1898, 8.507059e+37
        %v1900 = vand.u32 %v1873, 2147483648
        %v1901 = vor.u32 1.1754944e-38, %v1900
        %v1902 = vsel %vm1899, %v1901, %v1897
        %v1903 = vmul.f32 %v1867, %v1902
        %v1904 = vpack.c.bf16 %v1903, %v1888
        %v1906 = vsel %vm1768, %v1904, 0
        %1908 = vmatpush.bf16.msra.mxu0 0
        %1909 = vmatpush.bf16.msra.mxu0 0
        %1910 = vmatpush.bf16.msra.mxu0 0
        %1911 = vmatpush.bf16.msra.mxu0 0
        %1912 = vmatpush.bf16.msra.mxu0 0
        %1913 = vmatpush.bf16.msra.mxu0 0
        %1914 = vmatpush.bf16.msra.mxu0 0
        %1915 = vmatpush.bf16.msra.mxu0 %v1837
        %1916 = vmatmul.bf16.gmra.mxu0 %v1906
        %v1917 = vpop.f32.mrf.mxu0
        %v1918 = vadd.f32 0.0, %v1917
        %v1919 = vpop.f32.mrf.mxu0
        %v1920 = vadd.f32 0.0, %v1919
        %1921 = vdwg.mxu0
        %v1922 = vpack.c.bf16 %v1833, %v1831
        %v1923 = vpack.c.bf16 %v1920, %v1918
        %v1924 = vld [vmem:[%s862] sm:$0xff]
        %v1925 = vld [vmem:[%s862 + $0x8] sm:$0xff]
        %v1926 = vld [vmem:[%s862 + $0x10] sm:$0xff]
        %v1927 = vld [vmem:[%s862 + $0x18] sm:$0xff]
        %v1928 = vld [vmem:[%s862 + $0x20] sm:$0xff]
        %v1929 = vld [vmem:[%s862 + $0x28] sm:$0xff]
        %v1930 = vld [vmem:[%s862 + $0x30] sm:$0xff]
        %v1931 = vld [vmem:[%s862 + $0x38] sm:$0xff]
        %v1932 = vld [vmem:[%s862 + $0x40] sm:$0xff]
        %v1933 = vld [vmem:[%s862 + $0x48] sm:$0xff]
        %v1934 = vld [vmem:[%s862 + $0x50] sm:$0xff]
        %v1935 = vld [vmem:[%s862 + $0x58] sm:$0xff]
        %v1936 = vld [vmem:[%s862 + $0x60] sm:$0xff]
        %v1937 = vld [vmem:[%s862 + $0x68] sm:$0xff]
        %v1938 = vld [vmem:[%s862 + $0x70] sm:$0xff]
        %v1939 = vld [vmem:[%s862 + $0x78] sm:$0xff]
        %v1940 = vld [vmem:[%s862 + $0x80] sm:$0xff]
        %v1941 = vld [vmem:[%s862 + $0x88] sm:$0xff]
        %v1942 = vld [vmem:[%s862 + $0x90] sm:$0xff]
        %v1943 = vld [vmem:[%s862 + $0x98] sm:$0xff]
        %v1944 = vld [vmem:[%s862 + $0xa0] sm:$0xff]
        %v1945 = vld [vmem:[%s862 + $0xa8] sm:$0xff]
        %v1946 = vld [vmem:[%s862 + $0xb0] sm:$0xff]
        %v1947 = vld [vmem:[%s862 + $0xb8] sm:$0xff]
        %v1948 = vld [vmem:[%s862 + $0xc0] sm:$0xff]
        %v1949 = vld [vmem:[%s862 + $0xc8] sm:$0xff]
        %v1950 = vld [vmem:[%s862 + $0xd0] sm:$0xff]
        %v1951 = vld [vmem:[%s862 + $0xd8] sm:$0xff]
        %v1952 = vld [vmem:[%s862 + $0xe0] sm:$0xff]
        %v1953 = vld [vmem:[%s862 + $0xe8] sm:$0xff]
        %v1954 = vld [vmem:[%s862 + $0xf0] sm:$0xff]
        %v1955 = vld [vmem:[%s862 + $0xf8] sm:$0xff]
        %v1956 = vld [vmem:[%s866] sm:$0x3]
        %v1958 = vperm.slane %v1956, 0
        %v1959 = vperm.slane %v1956, 1
        %v1994 = vunpack.c.l.b16 %v1924
        %v1995 = vunpack.c.h.b16 %v1924
        %v1996 = vunpack.c.l.b16 %v1925
        %v1997 = vunpack.c.h.b16 %v1925
        %v1998 = vunpack.c.l.b16 %v1926
        %v1999 = vunpack.c.h.b16 %v1926
        %v2000 = vunpack.c.l.b16 %v1927
        %v2001 = vunpack.c.h.b16 %v1927
        %v2002 = vunpack.c.l.b16 %v1928
        %v2003 = vunpack.c.h.b16 %v1928
        %v2004 = vunpack.c.l.b16 %v1929
        %v2005 = vunpack.c.h.b16 %v1929
        %v2006 = vunpack.c.l.b16 %v1930
        %v2007 = vunpack.c.h.b16 %v1930
        %v2008 = vunpack.c.l.b16 %v1931
        %v2009 = vunpack.c.h.b16 %v1931
        %v2010 = vunpack.c.l.b16 %v1932
        %v2011 = vunpack.c.h.b16 %v1932
        %v2012 = vunpack.c.l.b16 %v1933
        %v2013 = vunpack.c.h.b16 %v1933
        %v2014 = vunpack.c.l.b16 %v1934
        %v2015 = vunpack.c.h.b16 %v1934
        %v2016 = vunpack.c.l.b16 %v1935
        %v2017 = vunpack.c.h.b16 %v1935
        %v2018 = vunpack.c.l.b16 %v1936
        %v2019 = vunpack.c.h.b16 %v1936
        %v2020 = vunpack.c.l.b16 %v1937
        %v2021 = vunpack.c.h.b16 %v1937
        %v2022 = vunpack.c.l.b16 %v1938
        %v2023 = vunpack.c.h.b16 %v1938
        %v2024 = vunpack.c.l.b16 %v1939
        %v2025 = vunpack.c.h.b16 %v1939
        %v2026 = vunpack.c.l.b16 %v1940
        %v2027 = vunpack.c.h.b16 %v1940
        %v2028 = vunpack.c.l.b16 %v1941
        %v2029 = vunpack.c.h.b16 %v1941
        %v2030 = vunpack.c.l.b16 %v1942
        %v2031 = vunpack.c.h.b16 %v1942
        %v2032 = vunpack.c.l.b16 %v1943
        %v2033 = vunpack.c.h.b16 %v1943
        %v2034 = vunpack.c.l.b16 %v1944
        %v2035 = vunpack.c.h.b16 %v1944
        %v2036 = vunpack.c.l.b16 %v1945
        %v2037 = vunpack.c.h.b16 %v1945
        %v2038 = vunpack.c.l.b16 %v1946
        %v2039 = vunpack.c.h.b16 %v1946
        %v2040 = vunpack.c.l.b16 %v1947
        %v2041 = vunpack.c.h.b16 %v1947
        %v2042 = vunpack.c.l.b16 %v1948
        %v2043 = vunpack.c.h.b16 %v1948
        %v2044 = vunpack.c.l.b16 %v1949
        %v2045 = vunpack.c.h.b16 %v1949
        %v2046 = vunpack.c.l.b16 %v1950
        %v2047 = vunpack.c.h.b16 %v1950
        %v2048 = vunpack.c.l.b16 %v1951
        %v2049 = vunpack.c.h.b16 %v1951
        %v2050 = vunpack.c.l.b16 %v1952
        %v2051 = vunpack.c.h.b16 %v1952
        %v2052 = vunpack.c.l.b16 %v1953
        %v2053 = vunpack.c.h.b16 %v1953
        %v2054 = vunpack.c.l.b16 %v1954
        %v2055 = vunpack.c.h.b16 %v1954
        %v2056 = vunpack.c.l.b16 %v1955
        %v2057 = vunpack.c.h.b16 %v1955
        %v2058 = vpack.c.b16 %v1996, %v1994
        %v2059 = vpack.c.b16 %v1997, %v1995
        %v2060 = vpack.c.b16 %v2000, %v1998
        %v2061 = vpack.c.b16 %v2001, %v1999
        %v2062 = vpack.c.b16 %v2004, %v2002
        %v2063 = vpack.c.b16 %v2005, %v2003
        %v2064 = vpack.c.b16 %v2008, %v2006
        %v2065 = vpack.c.b16 %v2009, %v2007
        %v2066 = vpack.c.b16 %v2012, %v2010
        %v2067 = vpack.c.b16 %v2013, %v2011
        %v2068 = vpack.c.b16 %v2016, %v2014
        %v2069 = vpack.c.b16 %v2017, %v2015
        %v2070 = vpack.c.b16 %v2020, %v2018
        %v2071 = vpack.c.b16 %v2021, %v2019
        %v2072 = vpack.c.b16 %v2024, %v2022
        %v2073 = vpack.c.b16 %v2025, %v2023
        %v2074 = vpack.c.b16 %v2028, %v2026
        %v2075 = vpack.c.b16 %v2029, %v2027
        %v2076 = vpack.c.b16 %v2032, %v2030
        %v2077 = vpack.c.b16 %v2033, %v2031
        %v2078 = vpack.c.b16 %v2036, %v2034
        %v2079 = vpack.c.b16 %v2037, %v2035
        %v2080 = vpack.c.b16 %v2040, %v2038
        %v2081 = vpack.c.b16 %v2041, %v2039
        %v2082 = vpack.c.b16 %v2044, %v2042
        %v2083 = vpack.c.b16 %v2045, %v2043
        %v2084 = vpack.c.b16 %v2048, %v2046
        %v2085 = vpack.c.b16 %v2049, %v2047
        %v2086 = vpack.c.b16 %v2052, %v2050
        %v2087 = vpack.c.b16 %v2053, %v2051
        %v2088 = vpack.c.b16 %v2056, %v2054
        %v2089 = vpack.c.b16 %v2057, %v2055
        %2122 = vmatpush.bf16.msra.mxu0 %v2072
        %2123 = vmatpush.bf16.msra.mxu0 %v2070
        %2124 = vmatpush.bf16.msra.mxu0 %v2068
        %2125 = vmatpush.bf16.msra.mxu0 %v2066
        %2126 = vmatpush.bf16.msra.mxu0 %v2064
        %2127 = vmatpush.bf16.msra.mxu0 %v2062
        %2128 = vmatpush.bf16.msra.mxu0 %v2060
        %2129 = vmatpush.bf16.msra.mxu0 %v2058
        %2130 = vmatmul.bf16.gmra.mxu0 %v1922
        %v2131 = vpop.f32.mrf.mxu0
        %v2132 = vadd.f32 %v1958, %v2131
        %v2133 = vpop.f32.mrf.mxu0
        %v2134 = vadd.f32 %v1958, %v2133
        %2135 = vdwg.mxu0
        %2136 = vmatpush.bf16.msra.mxu0 %v2088
        %2137 = vmatpush.bf16.msra.mxu0 %v2086
        %2138 = vmatpush.bf16.msra.mxu0 %v2084
        %2139 = vmatpush.bf16.msra.mxu0 %v2082
        %2140 = vmatpush.bf16.msra.mxu0 %v2080
        %2141 = vmatpush.bf16.msra.mxu0 %v2078
        %2142 = vmatpush.bf16.msra.mxu0 %v2076
        %2143 = vmatpush.bf16.msra.mxu0 %v2074
        %2144 = vmatmul.bf16.gmra.mxu0 %v1923
        %v2145 = vpop.f32.mrf.mxu0
        %v2146 = vadd.f32 %v2132, %v2145
        %v2147 = vpop.f32.mrf.mxu0
        %v2148 = vadd.f32 %v2134, %v2147
        %2149 = vdwg.mxu0
        %2150 = vmatpush.bf16.msra.mxu0 %v2073
        %2151 = vmatpush.bf16.msra.mxu0 %v2071
        %2152 = vmatpush.bf16.msra.mxu0 %v2069
        %2153 = vmatpush.bf16.msra.mxu0 %v2067
        %2154 = vmatpush.bf16.msra.mxu0 %v2065
        %2155 = vmatpush.bf16.msra.mxu0 %v2063
        %2156 = vmatpush.bf16.msra.mxu0 %v2061
        %2157 = vmatpush.bf16.msra.mxu0 %v2059
        %2158 = vmatmul.bf16.gmra.mxu0 %v1922
        %v2159 = vpop.f32.mrf.mxu0
        %v2160 = vadd.f32 %v1959, %v2159
        %v2161 = vpop.f32.mrf.mxu0
        %v2162 = vadd.f32 %v1959, %v2161
        %2163 = vdwg.mxu0
        %2164 = vmatpush.bf16.msra.mxu0 %v2089
        %2165 = vmatpush.bf16.msra.mxu0 %v2087
        %2166 = vmatpush.bf16.msra.mxu0 %v2085
        %2167 = vmatpush.bf16.msra.mxu0 %v2083
        %2168 = vmatpush.bf16.msra.mxu0 %v2081
        %2169 = vmatpush.bf16.msra.mxu0 %v2079
        %2170 = vmatpush.bf16.msra.mxu0 %v2077
        %2171 = vmatpush.bf16.msra.mxu0 %v2075
        %2172 = vmatmul.bf16.gmra.mxu0 %v1923
        %v2173 = vpop.f32.mrf.mxu0
        %v2174 = vadd.f32 %v2160, %v2173
        %v2175 = vpop.f32.mrf.mxu0
        %v2176 = vadd.f32 %v2162, %v2175
        %2177 = vdwg.mxu0
        %v2178 = vadd.f32 %v2146, %v981
        %v2179 = vadd.f32 %v2174, %v982
        %v2180 = vadd.f32 %v2148, %v983
        %v2181 = vadd.f32 %v2176, %v984
        %v2182 = vld [vmem:[%s870] sm:$0x3]
        %v2183 = vld [vmem:[%s874] sm:$0x3]
        %v2184 = vadd.f32 %v2178, %v2179
        %2185 = vadd.xlane.f32.xlu0 %v2184
        %v2186 = vpop.xlane.xlu0 %2185
        %v2187 = vadd.f32 %v2180, %v2181
        %2188 = vadd.xlane.f32.xlu0 %v2187
        %v2189 = vpop.xlane.xlu0 %2188
        %v2190 = vrcp.pop 256.0
        %v2191 = vmul.f32 256.0, %v2190
        %v2192 = vsub.f32 1.0, %v2191
        %v2193 = vmul.f32 %v2190, %v2192
        %v2194 = vadd.f32 %v2190, %v2193
        %vm2195 = vweird.f32 %v2190
        %v2196 = vsel %vm2195, %v2190, %v2194
        %v2197 = vmul.f32 %v2186, %v2196
        %v2198 = vmul.f32 %v2189, %v2196
        %v2199 = vsub.f32 %v2178, %v2197
        %v2200 = vsub.f32 %v2179, %v2197
        %v2201 = vsub.f32 %v2180, %v2198
        %v2202 = vsub.f32 %v2181, %v2198
        %v2203 = vmul.f32 %v2199, %v2199
        %v2204 = vmul.f32 %v2200, %v2200
        %v2205 = vmul.f32 %v2201, %v2201
        %v2206 = vmul.f32 %v2202, %v2202
        %v2207 = vadd.f32 %v2203, %v2204
        %2208 = vadd.xlane.f32.xlu0 %v2207
        %v2209 = vpop.xlane.xlu0 %2208
        %v2210 = vadd.f32 %v2205, %v2206
        %2211 = vadd.xlane.f32.xlu0 %v2210
        %v2212 = vpop.xlane.xlu0 %2211
        %v2213 = vmul.f32 %v2209, %v2196
        %v2214 = vmul.f32 %v2212, %v2196
        %v2215 = vadd.f32 %v2213, 1e-12
        %v2216 = vadd.f32 %v2214, 1e-12
        %v2217 = vrsqrt.pop %v2215
        %v2218 = vmul.f32 %v2217, %v2215
        %v2219 = vmul.f32 %v2218, %v2217
        %v2220 = vmul.f32 0.5, %v2219
        %v2221 = vsub.f32 1.5, %v2220
        %v2222 = vmul.f32 %v2217, %v2221
        %vm2223 = vweird.f32 %v2215
        %vm2224 = vweird.f32 %v2217
        %vm2225 = vmor %vm2223, %vm2224
        %v2226 = vsel %vm2225, %v2217, %v2222
        %v2227 = vrsqrt.pop %v2216
        %v2228 = vmul.f32 %v2227, %v2216
        %v2229 = vmul.f32 %v2228, %v2227
        %v2230 = vmul.f32 0.5, %v2229
        %v2231 = vsub.f32 1.5, %v2230
        %v2232 = vmul.f32 %v2227, %v2231
        %vm2233 = vweird.f32 %v2216
        %vm2234 = vweird.f32 %v2227
        %vm2235 = vmor %vm2233, %vm2234
        %v2236 = vsel %vm2235, %v2227, %v2232
        %v2237 = vmul.f32 %v2199, %v2226
        %v2238 = vmul.f32 %v2200, %v2226
        %v2239 = vmul.f32 %v2201, %v2236
        %v2240 = vmul.f32 %v2202, %v2236
        %v2242 = vperm.slane %v2182, 0
        %v2243 = vperm.slane %v2182, 1
        %v2246 = vmul.f32 %v2237, %v2242
        %v2247 = vmul.f32 %v2238, %v2243
        %v2248 = vmul.f32 %v2239, %v2242
        %v2249 = vmul.f32 %v2240, %v2243
        %v2251 = vperm.slane %v2183, 0
        %v2252 = vperm.slane %v2183, 1
        %v2255 = vadd.f32 %v2246, %v2251
        %v2256 = vadd.f32 %v2247, %v2252
        %v2257 = vadd.f32 %v2248, %v2251
        %v2258 = vadd.f32 %v2249, %v2252
        %v2259 = vpack.c.bf16 %v2257, %v2255
        %v2260 = vpack.c.bf16 %v2258, %v2256
        %v2261 = vld [vmem:[%s739] sm:$0xff]
        %v2262 = vld [vmem:[%s739 + $0x8] sm:$0xff]
        %v2263 = vld [vmem:[%s739 + $0x10] sm:$0xff]
        %v2264 = vld [vmem:[%s739 + $0x18] sm:$0xff]
        %v2265 = vld [vmem:[%s739 + $0x20] sm:$0xff]
        %v2266 = vld [vmem:[%s739 + $0x28] sm:$0xff]
        %v2267 = vld [vmem:[%s739 + $0x30] sm:$0xff]
        %v2268 = vld [vmem:[%s739 + $0x38] sm:$0xff]
        %v2269 = vld [vmem:[%s739 + $0x40] sm:$0xff]
        %v2270 = vld [vmem:[%s739 + $0x48] sm:$0xff]
        %v2271 = vld [vmem:[%s739 + $0x50] sm:$0xff]
        %v2272 = vld [vmem:[%s739 + $0x58] sm:$0xff]
        %v2273 = vld [vmem:[%s739 + $0x60] sm:$0xff]
        %v2274 = vld [vmem:[%s739 + $0x68] sm:$0xff]
        %v2275 = vld [vmem:[%s739 + $0x70] sm:$0xff]
        %v2276 = vld [vmem:[%s739 + $0x78] sm:$0xff]
        %v2277 = vld [vmem:[%s739 + $0x80] sm:$0xff]
        %v2278 = vld [vmem:[%s739 + $0x88] sm:$0xff]
        %v2279 = vld [vmem:[%s739 + $0x90] sm:$0xff]
        %v2280 = vld [vmem:[%s739 + $0x98] sm:$0xff]
        %v2281 = vld [vmem:[%s739 + $0xa0] sm:$0xff]
        %v2282 = vld [vmem:[%s739 + $0xa8] sm:$0xff]
        %v2283 = vld [vmem:[%s739 + $0xb0] sm:$0xff]
        %v2284 = vld [vmem:[%s739 + $0xb8] sm:$0xff]
        %v2285 = vld [vmem:[%s739 + $0xc0] sm:$0xff]
        %v2286 = vld [vmem:[%s739 + $0xc8] sm:$0xff]
        %v2287 = vld [vmem:[%s739 + $0xd0] sm:$0xff]
        %v2288 = vld [vmem:[%s739 + $0xd8] sm:$0xff]
        %v2289 = vld [vmem:[%s739 + $0xe0] sm:$0xff]
        %v2290 = vld [vmem:[%s739 + $0xe8] sm:$0xff]
        %v2291 = vld [vmem:[%s739 + $0xf0] sm:$0xff]
        %v2292 = vld [vmem:[%s739 + $0xf8] sm:$0xff]
        %v2293 = vld [vmem:[%s739 + $0x100] sm:$0xff]
        %v2294 = vld [vmem:[%s739 + $0x108] sm:$0xff]
        %v2295 = vld [vmem:[%s739 + $0x110] sm:$0xff]
        %v2296 = vld [vmem:[%s739 + $0x118] sm:$0xff]
        %v2297 = vld [vmem:[%s739 + $0x120] sm:$0xff]
        %v2298 = vld [vmem:[%s739 + $0x128] sm:$0xff]
        %v2299 = vld [vmem:[%s739 + $0x130] sm:$0xff]
        %v2300 = vld [vmem:[%s739 + $0x138] sm:$0xff]
        %v2301 = vld [vmem:[%s739 + $0x140] sm:$0xff]
        %v2302 = vld [vmem:[%s739 + $0x148] sm:$0xff]
        %v2303 = vld [vmem:[%s739 + $0x150] sm:$0xff]
        %v2304 = vld [vmem:[%s739 + $0x158] sm:$0xff]
        %v2305 = vld [vmem:[%s739 + $0x160] sm:$0xff]
        %v2306 = vld [vmem:[%s739 + $0x168] sm:$0xff]
        %v2307 = vld [vmem:[%s739 + $0x170] sm:$0xff]
        %v2308 = vld [vmem:[%s739 + $0x178] sm:$0xff]
        %v2309 = vld [vmem:[%s739 + $0x180] sm:$0xff]
        %v2310 = vld [vmem:[%s739 + $0x188] sm:$0xff]
        %v2311 = vld [vmem:[%s739 + $0x190] sm:$0xff]
        %v2312 = vld [vmem:[%s739 + $0x198] sm:$0xff]
        %v2313 = vld [vmem:[%s739 + $0x1a0] sm:$0xff]
        %v2314 = vld [vmem:[%s739 + $0x1a8] sm:$0xff]
        %v2315 = vld [vmem:[%s739 + $0x1b0] sm:$0xff]
        %v2316 = vld [vmem:[%s739 + $0x1b8] sm:$0xff]
        %v2317 = vld [vmem:[%s739 + $0x1c0] sm:$0xff]
        %v2318 = vld [vmem:[%s739 + $0x1c8] sm:$0xff]
        %v2319 = vld [vmem:[%s739 + $0x1d0] sm:$0xff]
        %v2320 = vld [vmem:[%s739 + $0x1d8] sm:$0xff]
        %v2321 = vld [vmem:[%s739 + $0x1e0] sm:$0xff]
        %v2322 = vld [vmem:[%s739 + $0x1e8] sm:$0xff]
        %v2323 = vld [vmem:[%s739 + $0x1f0] sm:$0xff]
        %v2324 = vld [vmem:[%s739 + $0x1f8] sm:$0xff]
        %v2325 = vld [vmem:[%s878] sm:$0xf]
        %v2327 = vperm.slane %v2325, 0
        %v2328 = vperm.slane %v2325, 1
        %v2329 = vperm.slane %v2325, 2
        %v2330 = vperm.slane %v2325, 3
        %v2399 = vunpack.c.l.b16 %v2261
        %v2400 = vunpack.c.h.b16 %v2261
        %v2401 = vunpack.c.l.b16 %v2262
        %v2402 = vunpack.c.h.b16 %v2262
        %v2403 = vunpack.c.l.b16 %v2263
        %v2404 = vunpack.c.h.b16 %v2263
        %v2405 = vunpack.c.l.b16 %v2264
        %v2406 = vunpack.c.h.b16 %v2264
        %v2407 = vunpack.c.l.b16 %v2265
        %v2408 = vunpack.c.h.b16 %v2265
        %v2409 = vunpack.c.l.b16 %v2266
        %v2410 = vunpack.c.h.b16 %v2266
        %v2411 = vunpack.c.l.b16 %v2267
        %v2412 = vunpack.c.h.b16 %v2267
        %v2413 = vunpack.c.l.b16 %v2268
        %v2414 = vunpack.c.h.b16 %v2268
        %v2415 = vunpack.c.l.b16 %v2269
        %v2416 = vunpack.c.h.b16 %v2269
        %v2417 = vunpack.c.l.b16 %v2270
        %v2418 = vunpack.c.h.b16 %v2270
        %v2419 = vunpack.c.l.b16 %v2271
        %v2420 = vunpack.c.h.b16 %v2271
        %v2421 = vunpack.c.l.b16 %v2272
        %v2422 = vunpack.c.h.b16 %v2272
        %v2423 = vunpack.c.l.b16 %v2273
        %v2424 = vunpack.c.h.b16 %v2273
        %v2425 = vunpack.c.l.b16 %v2274
        %v2426 = vunpack.c.h.b16 %v2274
        %v2427 = vunpack.c.l.b16 %v2275
        %v2428 = vunpack.c.h.b16 %v2275
        %v2429 = vunpack.c.l.b16 %v2276
        %v2430 = vunpack.c.h.b16 %v2276
        %v2431 = vunpack.c.l.b16 %v2277
        %v2432 = vunpack.c.h.b16 %v2277
        %v2433 = vunpack.c.l.b16 %v2278
        %v2434 = vunpack.c.h.b16 %v2278
        %v2435 = vunpack.c.l.b16 %v2279
        %v2436 = vunpack.c.h.b16 %v2279
        %v2437 = vunpack.c.l.b16 %v2280
        %v2438 = vunpack.c.h.b16 %v2280
        %v2439 = vunpack.c.l.b16 %v2281
        %v2440 = vunpack.c.h.b16 %v2281
        %v2441 = vunpack.c.l.b16 %v2282
        %v2442 = vunpack.c.h.b16 %v2282
        %v2443 = vunpack.c.l.b16 %v2283
        %v2444 = vunpack.c.h.b16 %v2283
        %v2445 = vunpack.c.l.b16 %v2284
        %v2446 = vunpack.c.h.b16 %v2284
        %v2447 = vunpack.c.l.b16 %v2285
        %v2448 = vunpack.c.h.b16 %v2285
        %v2449 = vunpack.c.l.b16 %v2286
        %v2450 = vunpack.c.h.b16 %v2286
        %v2451 = vunpack.c.l.b16 %v2287
        %v2452 = vunpack.c.h.b16 %v2287
        %v2453 = vunpack.c.l.b16 %v2288
        %v2454 = vunpack.c.h.b16 %v2288
        %v2455 = vunpack.c.l.b16 %v2289
        %v2456 = vunpack.c.h.b16 %v2289
        %v2457 = vunpack.c.l.b16 %v2290
        %v2458 = vunpack.c.h.b16 %v2290
        %v2459 = vunpack.c.l.b16 %v2291
        %v2460 = vunpack.c.h.b16 %v2291
        %v2461 = vunpack.c.l.b16 %v2292
        %v2462 = vunpack.c.h.b16 %v2292
        %v2463 = vunpack.c.l.b16 %v2293
        %v2464 = vunpack.c.h.b16 %v2293
        %v2465 = vunpack.c.l.b16 %v2294
        %v2466 = vunpack.c.h.b16 %v2294
        %v2467 = vunpack.c.l.b16 %v2295
        %v2468 = vunpack.c.h.b16 %v2295
        %v2469 = vunpack.c.l.b16 %v2296
        %v2470 = vunpack.c.h.b16 %v2296
        %v2471 = vunpack.c.l.b16 %v2297
        %v2472 = vunpack.c.h.b16 %v2297
        %v2473 = vunpack.c.l.b16 %v2298
        %v2474 = vunpack.c.h.b16 %v2298
        %v2475 = vunpack.c.l.b16 %v2299
        %v2476 = vunpack.c.h.b16 %v2299
        %v2477 = vunpack.c.l.b16 %v2300
        %v2478 = vunpack.c.h.b16 %v2300
        %v2479 = vunpack.c.l.b16 %v2301
        %v2480 = vunpack.c.h.b16 %v2301
        %v2481 = vunpack.c.l.b16 %v2302
        %v2482 = vunpack.c.h.b16 %v2302
        %v2483 = vunpack.c.l.b16 %v2303
        %v2484 = vunpack.c.h.b16 %v2303
        %v2485 = vunpack.c.l.b16 %v2304
        %v2486 = vunpack.c.h.b16 %v2304
        %v2487 = vunpack.c.l.b16 %v2305
        %v2488 = vunpack.c.h.b16 %v2305
        %v2489 = vunpack.c.l.b16 %v2306
        %v2490 = vunpack.c.h.b16 %v2306
        %v2491 = vunpack.c.l.b16 %v2307
        %v2492 = vunpack.c.h.b16 %v2307
        %v2493 = vunpack.c.l.b16 %v2308
        %v2494 = vunpack.c.h.b16 %v2308
        %v2495 = vunpack.c.l.b16 %v2309
        %v2496 = vunpack.c.h.b16 %v2309
        %v2497 = vunpack.c.l.b16 %v2310
        %v2498 = vunpack.c.h.b16 %v2310
        %v2499 = vunpack.c.l.b16 %v2311
        %v2500 = vunpack.c.h.b16 %v2311
        %v2501 = vunpack.c.l.b16 %v2312
        %v2502 = vunpack.c.h.b16 %v2312
        %v2503 = vunpack.c.l.b16 %v2313
        %v2504 = vunpack.c.h.b16 %v2313
        %v2505 = vunpack.c.l.b16 %v2314
        %v2506 = vunpack.c.h.b16 %v2314
        %v2507 = vunpack.c.l.b16 %v2315
        %v2508 = vunpack.c.h.b16 %v2315
        %v2509 = vunpack.c.l.b16 %v2316
        %v2510 = vunpack.c.h.b16 %v2316
        %v2511 = vunpack.c.l.b16 %v2317
        %v2512 = vunpack.c.h.b16 %v2317
        %v2513 = vunpack.c.l.b16 %v2318
        %v2514 = vunpack.c.h.b16 %v2318
        %v2515 = vunpack.c.l.b16 %v2319
        %v2516 = vunpack.c.h.b16 %v2319
        %v2517 = vunpack.c.l.b16 %v2320
        %v2518 = vunpack.c.h.b16 %v2320
        %v2519 = vunpack.c.l.b16 %v2321
        %v2520 = vunpack.c.h.b16 %v2321
        %v2521 = vunpack.c.l.b16 %v2322
        %v2522 = vunpack.c.h.b16 %v2322
        %v2523 = vunpack.c.l.b16 %v2323
        %v2524 = vunpack.c.h.b16 %v2323
        %v2525 = vunpack.c.l.b16 %v2324
        %v2526 = vunpack.c.h.b16 %v2324
        %v2527 = vpack.c.b16 %v2403, %v2399
        %v2528 = vpack.c.b16 %v2404, %v2400
        %v2529 = vpack.c.b16 %v2405, %v2401
        %v2530 = vpack.c.b16 %v2406, %v2402
        %v2531 = vpack.c.b16 %v2411, %v2407
        %v2532 = vpack.c.b16 %v2412, %v2408
        %v2533 = vpack.c.b16 %v2413, %v2409
        %v2534 = vpack.c.b16 %v2414, %v2410
        %v2535 = vpack.c.b16 %v2419, %v2415
        %v2536 = vpack.c.b16 %v2420, %v2416
        %v2537 = vpack.c.b16 %v2421, %v2417
        %v2538 = vpack.c.b16 %v2422, %v2418
        %v2539 = vpack.c.b16 %v2427, %v2423
        %v2540 = vpack.c.b16 %v2428, %v2424
        %v2541 = vpack.c.b16 %v2429, %v2425
        %v2542 = vpack.c.b16 %v2430, %v2426
        %v2543 = vpack.c.b16 %v2435, %v2431
        %v2544 = vpack.c.b16 %v2436, %v2432
        %v2545 = vpack.c.b16 %v2437, %v2433
        %v2546 = vpack.c.b16 %v2438, %v2434
        %v2547 = vpack.c.b16 %v2443, %v2439
        %v2548 = vpack.c.b16 %v2444, %v2440
        %v2549 = vpack.c.b16 %v2445, %v2441
        %v2550 = vpack.c.b16 %v2446, %v2442
        %v2551 = vpack.c.b16 %v2451, %v2447
        %v2552 = vpack.c.b16 %v2452, %v2448
        %v2553 = vpack.c.b16 %v2453, %v2449
        %v2554 = vpack.c.b16 %v2454, %v2450
        %v2555 = vpack.c.b16 %v2459, %v2455
        %v2556 = vpack.c.b16 %v2460, %v2456
        %v2557 = vpack.c.b16 %v2461, %v2457
        %v2558 = vpack.c.b16 %v2462, %v2458
        %v2559 = vpack.c.b16 %v2467, %v2463
        %v2560 = vpack.c.b16 %v2468, %v2464
        %v2561 = vpack.c.b16 %v2469, %v2465
        %v2562 = vpack.c.b16 %v2470, %v2466
        %v2563 = vpack.c.b16 %v2475, %v2471
        %v2564 = vpack.c.b16 %v2476, %v2472
        %v2565 = vpack.c.b16 %v2477, %v2473
        %v2566 = vpack.c.b16 %v2478, %v2474
        %v2567 = vpack.c.b16 %v2483, %v2479
        %v2568 = vpack.c.b16 %v2484, %v2480
        %v2569 = vpack.c.b16 %v2485, %v2481
        %v2570 = vpack.c.b16 %v2486, %v2482
        %v2571 = vpack.c.b16 %v2491, %v2487
        %v2572 = vpack.c.b16 %v2492, %v2488
        %v2573 = vpack.c.b16 %v2493, %v2489
        %v2574 = vpack.c.b16 %v2494, %v2490
        %v2575 = vpack.c.b16 %v2499, %v2495
        %v2576 = vpack.c.b16 %v2500, %v2496
        %v2577 = vpack.c.b16 %v2501, %v2497
        %v2578 = vpack.c.b16 %v2502, %v2498
        %v2579 = vpack.c.b16 %v2507, %v2503
        %v2580 = vpack.c.b16 %v2508, %v2504
        %v2581 = vpack.c.b16 %v2509, %v2505
        %v2582 = vpack.c.b16 %v2510, %v2506
        %v2583 = vpack.c.b16 %v2515, %v2511
        %v2584 = vpack.c.b16 %v2516, %v2512
        %v2585 = vpack.c.b16 %v2517, %v2513
        %v2586 = vpack.c.b16 %v2518, %v2514
        %v2587 = vpack.c.b16 %v2523, %v2519
        %v2588 = vpack.c.b16 %v2524, %v2520
        %v2589 = vpack.c.b16 %v2525, %v2521
        %v2590 = vpack.c.b16 %v2526, %v2522
        %2655 = vmatpush.bf16.msra.mxu0 %v2555
        %2656 = vmatpush.bf16.msra.mxu0 %v2551
        %2657 = vmatpush.bf16.msra.mxu0 %v2547
        %2658 = vmatpush.bf16.msra.mxu0 %v2543
        %2659 = vmatpush.bf16.msra.mxu0 %v2539
        %2660 = vmatpush.bf16.msra.mxu0 %v2535
        %2661 = vmatpush.bf16.msra.mxu0 %v2531
        %2662 = vmatpush.bf16.msra.mxu0 %v2527
        %2663 = vmatmul.bf16.gmra.mxu0 %v2259
        %v2664 = vpop.f32.mrf.mxu0
        %v2665 = vadd.f32 %v2327, %v2664
        %v2666 = vpop.f32.mrf.mxu0
        %v2667 = vadd.f32 %v2327, %v2666
        %2668 = vdwg.mxu0
        %2669 = vmatpush.bf16.msra.mxu0 %v2587
        %2670 = vmatpush.bf16.msra.mxu0 %v2583
        %2671 = vmatpush.bf16.msra.mxu0 %v2579
        %2672 = vmatpush.bf16.msra.mxu0 %v2575
        %2673 = vmatpush.bf16.msra.mxu0 %v2571
        %2674 = vmatpush.bf16.msra.mxu0 %v2567
        %2675 = vmatpush.bf16.msra.mxu0 %v2563
        %2676 = vmatpush.bf16.msra.mxu0 %v2559
        %2677 = vmatmul.bf16.gmra.mxu0 %v2260
        %v2678 = vpop.f32.mrf.mxu0
        %v2679 = vadd.f32 %v2665, %v2678
        %v2680 = vpop.f32.mrf.mxu0
        %v2681 = vadd.f32 %v2667, %v2680
        %2682 = vdwg.mxu0
        %2683 = vmatpush.bf16.msra.mxu0 %v2556
        %2684 = vmatpush.bf16.msra.mxu0 %v2552
        %2685 = vmatpush.bf16.msra.mxu0 %v2548
        %2686 = vmatpush.bf16.msra.mxu0 %v2544
        %2687 = vmatpush.bf16.msra.mxu0 %v2540
        %2688 = vmatpush.bf16.msra.mxu0 %v2536
        %2689 = vmatpush.bf16.msra.mxu0 %v2532
        %2690 = vmatpush.bf16.msra.mxu0 %v2528
        %2691 = vmatmul.bf16.gmra.mxu0 %v2259
        %v2692 = vpop.f32.mrf.mxu0
        %v2693 = vadd.f32 %v2328, %v2692
        %v2694 = vpop.f32.mrf.mxu0
        %v2695 = vadd.f32 %v2328, %v2694
        %2696 = vdwg.mxu0
        %2697 = vmatpush.bf16.msra.mxu0 %v2588
        %2698 = vmatpush.bf16.msra.mxu0 %v2584
        %2699 = vmatpush.bf16.msra.mxu0 %v2580
        %2700 = vmatpush.bf16.msra.mxu0 %v2576
        %2701 = vmatpush.bf16.msra.mxu0 %v2572
        %2702 = vmatpush.bf16.msra.mxu0 %v2568
        %2703 = vmatpush.bf16.msra.mxu0 %v2564
        %2704 = vmatpush.bf16.msra.mxu0 %v2560
        %2705 = vmatmul.bf16.gmra.mxu0 %v2260
        %v2706 = vpop.f32.mrf.mxu0
        %v2707 = vadd.f32 %v2693, %v2706
        %v2708 = vpop.f32.mrf.mxu0
        %v2709 = vadd.f32 %v2695, %v2708
        %2710 = vdwg.mxu0
        %2711 = vmatpush.bf16.msra.mxu0 %v2557
        %2712 = vmatpush.bf16.msra.mxu0 %v2553
        %2713 = vmatpush.bf16.msra.mxu0 %v2549
        %2714 = vmatpush.bf16.msra.mxu0 %v2545
        %2715 = vmatpush.bf16.msra.mxu0 %v2541
        %2716 = vmatpush.bf16.msra.mxu0 %v2537
        %2717 = vmatpush.bf16.msra.mxu0 %v2533
        %2718 = vmatpush.bf16.msra.mxu0 %v2529
        %2719 = vmatmul.bf16.gmra.mxu0 %v2259
        %v2720 = vpop.f32.mrf.mxu0
        %v2721 = vadd.f32 %v2329, %v2720
        %v2722 = vpop.f32.mrf.mxu0
        %v2723 = vadd.f32 %v2329, %v2722
        %2724 = vdwg.mxu0
        %2725 = vmatpush.bf16.msra.mxu0 %v2589
        %2726 = vmatpush.bf16.msra.mxu0 %v2585
        %2727 = vmatpush.bf16.msra.mxu0 %v2581
        %2728 = vmatpush.bf16.msra.mxu0 %v2577
        %2729 = vmatpush.bf16.msra.mxu0 %v2573
        %2730 = vmatpush.bf16.msra.mxu0 %v2569
        %2731 = vmatpush.bf16.msra.mxu0 %v2565
        %2732 = vmatpush.bf16.msra.mxu0 %v2561
        %2733 = vmatmul.bf16.gmra.mxu0 %v2260
        %v2734 = vpop.f32.mrf.mxu0
        %v2735 = vadd.f32 %v2721, %v2734
        %v2736 = vpop.f32.mrf.mxu0
        %v2737 = vadd.f32 %v2723, %v2736
        %2738 = vdwg.mxu0
        %2739 = vmatpush.bf16.msra.mxu0 %v2558
        %2740 = vmatpush.bf16.msra.mxu0 %v2554
        %2741 = vmatpush.bf16.msra.mxu0 %v2550
        %2742 = vmatpush.bf16.msra.mxu0 %v2546
        %2743 = vmatpush.bf16.msra.mxu0 %v2542
        %2744 = vmatpush.bf16.msra.mxu0 %v2538
        %2745 = vmatpush.bf16.msra.mxu0 %v2534
        %2746 = vmatpush.bf16.msra.mxu0 %v2530
        %2747 = vmatmul.bf16.gmra.mxu0 %v2259
        %v2748 = vpop.f32.mrf.mxu0
        %v2749 = vadd.f32 %v2330, %v2748
        %v2750 = vpop.f32.mrf.mxu0
        %v2751 = vadd.f32 %v2330, %v2750
        %2752 = vdwg.mxu0
        %2753 = vmatpush.bf16.msra.mxu0 %v2590
        %2754 = vmatpush.bf16.msra.mxu0 %v2586
        %2755 = vmatpush.bf16.msra.mxu0 %v2582
        %2756 = vmatpush.bf16.msra.mxu0 %v2578
        %2757 = vmatpush.bf16.msra.mxu0 %v2574
        %2758 = vmatpush.bf16.msra.mxu0 %v2570
        %2759 = vmatpush.bf16.msra.mxu0 %v2566
        %2760 = vmatpush.bf16.msra.mxu0 %v2562
        %2761 = vmatmul.bf16.gmra.mxu0 %v2260
        %v2762 = vpop.f32.mrf.mxu0
        %v2763 = vadd.f32 %v2749, %v2762
        %v2764 = vpop.f32.mrf.mxu0
        %v2765 = vadd.f32 %v2751, %v2764
        %2766 = vdwg.mxu0
        %v2767 = vmul.f32 %v2679, 0.5
        %v2768 = vmul.f32 %v2707, 0.5
        %v2769 = vmul.f32 %v2735, 0.5
        %v2770 = vmul.f32 %v2763, 0.5
        %v2771 = vmul.f32 %v2681, 0.5
        %v2772 = vmul.f32 %v2709, 0.5
        %v2773 = vmul.f32 %v2737, 0.5
        %v2774 = vmul.f32 %v2765, 0.5
        %v2775 = vmul.f32 %v2679, 0.044715
        %v2776 = vmul.f32 %v2707, 0.044715
        %v2777 = vmul.f32 %v2735, 0.044715
        %v2778 = vmul.f32 %v2763, 0.044715
        %v2779 = vmul.f32 %v2681, 0.044715
        %v2780 = vmul.f32 %v2709, 0.044715
        %v2781 = vmul.f32 %v2737, 0.044715
        %v2782 = vmul.f32 %v2765, 0.044715
        %v2783 = vmul.f32 %v2775, %v2679
        %v2784 = vmul.f32 %v2776, %v2707
        %v2785 = vmul.f32 %v2777, %v2735
        %v2786 = vmul.f32 %v2778, %v2763
        %v2787 = vmul.f32 %v2779, %v2681
        %v2788 = vmul.f32 %v2780, %v2709
        %v2789 = vmul.f32 %v2781, %v2737
        %v2790 = vmul.f32 %v2782, %v2765
        %v2791 = vmul.f32 %v2783, %v2679
        %v2792 = vmul.f32 %v2784, %v2707
        %v2793 = vmul.f32 %v2785, %v2735
        %v2794 = vmul.f32 %v2786, %v2763
        %v2795 = vmul.f32 %v2787, %v2681
        %v2796 = vmul.f32 %v2788, %v2709
        %v2797 = vmul.f32 %v2789, %v2737
        %v2798 = vmul.f32 %v2790, %v2765
        %v2799 = vadd.f32 %v2679, %v2791
        %v2800 = vadd.f32 %v2707, %v2792
        %v2801 = vadd.f32 %v2735, %v2793
        %v2802 = vadd.f32 %v2763, %v2794
        %v2803 = vadd.f32 %v2681, %v2795
        %v2804 = vadd.f32 %v2709, %v2796
        %v2805 = vadd.f32 %v2737, %v2797
        %v2806 = vadd.f32 %v2765, %v2798
        %v2807 = vmul.f32 %v2799, 0.7978846
        %v2808 = vmul.f32 %v2800, 0.7978846
        %v2809 = vmul.f32 %v2801, 0.7978846
        %v2810 = vmul.f32 %v2802, 0.7978846
        %v2811 = vmul.f32 %v2803, 0.7978846
        %v2812 = vmul.f32 %v2804, 0.7978846
        %v2813 = vmul.f32 %v2805, 0.7978846
        %v2814 = vmul.f32 %v2806, 0.7978846
        %v2815 = vtanh.pop %v2807
        %v2816 = vtanh.pop %v2808
        %v2817 = vtanh.pop %v2809
        %v2818 = vtanh.pop %v2810
        %v2819 = vtanh.pop %v2811
        %v2820 = vtanh.pop %v2812
        %v2821 = vtanh.pop %v2813
        %v2822 = vtanh.pop %v2814
        %v2823 = vadd.f32 %v2815, 1.0
        %v2824 = vadd.f32 %v2816, 1.0
        %v2825 = vadd.f32 %v2817, 1.0
        %v2826 = vadd.f32 %v2818, 1.0
        %v2827 = vadd.f32 %v2819, 1.0
        %v2828 = vadd.f32 %v2820, 1.0
        %v2829 = vadd.f32 %v2821, 1.0
        %v2830 = vadd.f32 %v2822, 1.0
        %v2831 = vmul.f32 %v2767, %v2823
        %v2832 = vmul.f32 %v2768, %v2824
        %v2833 = vmul.f32 %v2769, %v2825
        %v2834 = vmul.f32 %v2770, %v2826
        %v2835 = vmul.f32 %v2771, %v2827
        %v2836 = vmul.f32 %v2772, %v2828
        %v2837 = vmul.f32 %v2773, %v2829
        %v2838 = vmul.f32 %v2774, %v2830
        %v2839 = vpack.c.bf16 %v2835, %v2831
        %v2840 = vpack.c.bf16 %v2836, %v2832
        %v2841 = vpack.c.bf16 %v2837, %v2833
        %v2842 = vpack.c.bf16 %v2838, %v2834
        %v2843 = vld [vmem:[%s749] sm:$0xff]
        %v2844 = vld [vmem:[%s749 + $0x8] sm:$0xff]
        %v2845 = vld [vmem:[%s749 + $0x10] sm:$0xff]
        %v2846 = vld [vmem:[%s749 + $0x18] sm:$0xff]
        %v2847 = vld [vmem:[%s749 + $0x20] sm:$0xff]
        %v2848 = vld [vmem:[%s749 + $0x28] sm:$0xff]
        %v2849 = vld [vmem:[%s749 + $0x30] sm:$0xff]
        %v2850 = vld [vmem:[%s749 + $0x38] sm:$0xff]
        %v2851 = vld [vmem:[%s749 + $0x40] sm:$0xff]
        %v2852 = vld [vmem:[%s749 + $0x48] sm:$0xff]
        %v2853 = vld [vmem:[%s749 + $0x50] sm:$0xff]
        %v2854 = vld [vmem:[%s749 + $0x58] sm:$0xff]
        %v2855 = vld [vmem:[%s749 + $0x60] sm:$0xff]
        %v2856 = vld [vmem:[%s749 + $0x68] sm:$0xff]
        %v2857 = vld [vmem:[%s749 + $0x70] sm:$0xff]
        %v2858 = vld [vmem:[%s749 + $0x78] sm:$0xff]
        %v2859 = vld [vmem:[%s749 + $0x80] sm:$0xff]
        %v2860 = vld [vmem:[%s749 + $0x88] sm:$0xff]
        %v2861 = vld [vmem:[%s749 + $0x90] sm:$0xff]
        %v2862 = vld [vmem:[%s749 + $0x98] sm:$0xff]
        %v2863 = vld [vmem:[%s749 + $0xa0] sm:$0xff]
        %v2864 = vld [vmem:[%s749 + $0xa8] sm:$0xff]
        %v2865 = vld [vmem:[%s749 + $0xb0] sm:$0xff]
        %v2866 = vld [vmem:[%s749 + $0xb8] sm:$0xff]
        %v2867 = vld [vmem:[%s749 + $0xc0] sm:$0xff]
        %v2868 = vld [vmem:[%s749 + $0xc8] sm:$0xff]
        %v2869 = vld [vmem:[%s749 + $0xd0] sm:$0xff]
        %v2870 = vld [vmem:[%s749 + $0xd8] sm:$0xff]
        %v2871 = vld [vmem:[%s749 + $0xe0] sm:$0xff]
        %v2872 = vld [vmem:[%s749 + $0xe8] sm:$0xff]
        %v2873 = vld [vmem:[%s749 + $0xf0] sm:$0xff]
        %v2874 = vld [vmem:[%s749 + $0xf8] sm:$0xff]
        %v2875 = vld [vmem:[%s749 + $0x100] sm:$0xff]
        %v2876 = vld [vmem:[%s749 + $0x108] sm:$0xff]
        %v2877 = vld [vmem:[%s749 + $0x110] sm:$0xff]
        %v2878 = vld [vmem:[%s749 + $0x118] sm:$0xff]
        %v2879 = vld [vmem:[%s749 + $0x120] sm:$0xff]
        %v2880 = vld [vmem:[%s749 + $0x128] sm:$0xff]
        %v2881 = vld [vmem:[%s749 + $0x130] sm:$0xff]
        %v2882 = vld [vmem:[%s749 + $0x138] sm:$0xff]
        %v2883 = vld [vmem:[%s749 + $0x140] sm:$0xff]
        %v2884 = vld [vmem:[%s749 + $0x148] sm:$0xff]
        %v2885 = vld [vmem:[%s749 + $0x150] sm:$0xff]
        %v2886 = vld [vmem:[%s749 + $0x158] sm:$0xff]
        %v2887 = vld [vmem:[%s749 + $0x160] sm:$0xff]
        %v2888 = vld [vmem:[%s749 + $0x168] sm:$0xff]
        %v2889 = vld [vmem:[%s749 + $0x170] sm:$0xff]
        %v2890 = vld [vmem:[%s749 + $0x178] sm:$0xff]
        %v2891 = vld [vmem:[%s749 + $0x180] sm:$0xff]
        %v2892 = vld [vmem:[%s749 + $0x188] sm:$0xff]
        %v2893 = vld [vmem:[%s749 + $0x190] sm:$0xff]
        %v2894 = vld [vmem:[%s749 + $0x198] sm:$0xff]
        %v2895 = vld [vmem:[%s749 + $0x1a0] sm:$0xff]
        %v2896 = vld [vmem:[%s749 + $0x1a8] sm:$0xff]
        %v2897 = vld [vmem:[%s749 + $0x1b0] sm:$0xff]
        %v2898 = vld [vmem:[%s749 + $0x1b8] sm:$0xff]
        %v2899 = vld [vmem:[%s749 + $0x1c0] sm:$0xff]
        %v2900 = vld [vmem:[%s749 + $0x1c8] sm:$0xff]
        %v2901 = vld [vmem:[%s749 + $0x1d0] sm:$0xff]
        %v2902 = vld [vmem:[%s749 + $0x1d8] sm:$0xff]
        %v2903 = vld [vmem:[%s749 + $0x1e0] sm:$0xff]
        %v2904 = vld [vmem:[%s749 + $0x1e8] sm:$0xff]
        %v2905 = vld [vmem:[%s749 + $0x1f0] sm:$0xff]
        %v2906 = vld [vmem:[%s749 + $0x1f8] sm:$0xff]
        %v2907 = vld [vmem:[%s882] sm:$0x3]
        %v2909 = vperm.slane %v2907, 0
        %v2910 = vperm.slane %v2907, 1
        %v2977 = vunpack.c.l.b16 %v2843
        %v2978 = vunpack.c.h.b16 %v2843
        %v2979 = vunpack.c.l.b16 %v2844
        %v2980 = vunpack.c.h.b16 %v2844
        %v2981 = vunpack.c.l.b16 %v2845
        %v2982 = vunpack.c.h.b16 %v2845
        %v2983 = vunpack.c.l.b16 %v2846
        %v2984 = vunpack.c.h.b16 %v2846
        %v2985 = vunpack.c.l.b16 %v2847
        %v2986 = vunpack.c.h.b16 %v2847
        %v2987 = vunpack.c.l.b16 %v2848
        %v2988 = vunpack.c.h.b16 %v2848
        %v2989 = vunpack.c.l.b16 %v2849
        %v2990 = vunpack.c.h.b16 %v2849
        %v2991 = vunpack.c.l.b16 %v2850
        %v2992 = vunpack.c.h.b16 %v2850
        %v2993 = vunpack.c.l.b16 %v2851
        %v2994 = vunpack.c.h.b16 %v2851
        %v2995 = vunpack.c.l.b16 %v2852
        %v2996 = vunpack.c.h.b16 %v2852
        %v2997 = vunpack.c.l.b16 %v2853
        %v2998 = vunpack.c.h.b16 %v2853
        %v2999 = vunpack.c.l.b16 %v2854
        %v3000 = vunpack.c.h.b16 %v2854
        %v3001 = vunpack.c.l.b16 %v2855
        %v3002 = vunpack.c.h.b16 %v2855
        %v3003 = vunpack.c.l.b16 %v2856
        %v3004 = vunpack.c.h.b16 %v2856
        %v3005 = vunpack.c.l.b16 %v2857
        %v3006 = vunpack.c.h.b16 %v2857
        %v3007 = vunpack.c.l.b16 %v2858
        %v3008 = vunpack.c.h.b16 %v2858
        %v3009 = vunpack.c.l.b16 %v2859
        %v3010 = vunpack.c.h.b16 %v2859
        %v3011 = vunpack.c.l.b16 %v2860
        %v3012 = vunpack.c.h.b16 %v2860
        %v3013 = vunpack.c.l.b16 %v2861
        %v3014 = vunpack.c.h.b16 %v2861
        %v3015 = vunpack.c.l.b16 %v2862
        %v3016 = vunpack.c.h.b16 %v2862
        %v3017 = vunpack.c.l.b16 %v2863
        %v3018 = vunpack.c.h.b16 %v2863
        %v3019 = vunpack.c.l.b16 %v2864
        %v3020 = vunpack.c.h.b16 %v2864
        %v3021 = vunpack.c.l.b16 %v2865
        %v3022 = vunpack.c.h.b16 %v2865
        %v3023 = vunpack.c.l.b16 %v2866
        %v3024 = vunpack.c.h.b16 %v2866
        %v3025 = vunpack.c.l.b16 %v2867
        %v3026 = vunpack.c.h.b16 %v2867
        %v3027 = vunpack.c.l.b16 %v2868
        %v3028 = vunpack.c.h.b16 %v2868
        %v3029 = vunpack.c.l.b16 %v2869
        %v3030 = vunpack.c.h.b16 %v2869
        %v3031 = vunpack.c.l.b16 %v2870
        %v3032 = vunpack.c.h.b16 %v2870
        %v3033 = vunpack.c.l.b16 %v2871
        %v3034 = vunpack.c.h.b16 %v2871
        %v3035 = vunpack.c.l.b16 %v2872
        %v3036 = vunpack.c.h.b16 %v2872
        %v3037 = vunpack.c.l.b16 %v2873
        %v3038 = vunpack.c.h.b16 %v2873
        %v3039 = vunpack.c.l.b16 %v2874
        %v3040 = vunpack.c.h.b16 %v2874
        %v3041 = vunpack.c.l.b16 %v2875
        %v3042 = vunpack.c.h.b16 %v2875
        %v3043 = vunpack.c.l.b16 %v2876
        %v3044 = vunpack.c.h.b16 %v2876
        %v3045 = vunpack.c.l.b16 %v2877
        %v3046 = vunpack.c.h.b16 %v2877
        %v3047 = vunpack.c.l.b16 %v2878
        %v3048 = vunpack.c.h.b16 %v2878
        %v3049 = vunpack.c.l.b16 %v2879
        %v3050 = vunpack.c.h.b16 %v2879
        %v3051 = vunpack.c.l.b16 %v2880
        %v3052 = vunpack.c.h.b16 %v2880
        %v3053 = vunpack.c.l.b16 %v2881
        %v3054 = vunpack.c.h.b16 %v2881
        %v3055 = vunpack.c.l.b16 %v2882
        %v3056 = vunpack.c.h.b16 %v2882
        %v3057 = vunpack.c.l.b16 %v2883
        %v3058 = vunpack.c.h.b16 %v2883
        %v3059 = vunpack.c.l.b16 %v2884
        %v3060 = vunpack.c.h.b16 %v2884
        %v3061 = vunpack.c.l.b16 %v2885
        %v3062 = vunpack.c.h.b16 %v2885
        %v3063 = vunpack.c.l.b16 %v2886
        %v3064 = vunpack.c.h.b16 %v2886
        %v3065 = vunpack.c.l.b16 %v2887
        %v3066 = vunpack.c.h.b16 %v2887
        %v3067 = vunpack.c.l.b16 %v2888
        %v3068 = vunpack.c.h.b16 %v2888
        %v3069 = vunpack.c.l.b16 %v2889
        %v3070 = vunpack.c.h.b16 %v2889
        %v3071 = vunpack.c.l.b16 %v2890
        %v3072 = vunpack.c.h.b16 %v2890
        %v3073 = vunpack.c.l.b16 %v2891
        %v3074 = vunpack.c.h.b16 %v2891
        %v3075 = vunpack.c.l.b16 %v2892
        %v3076 = vunpack.c.h.b16 %v2892
        %v3077 = vunpack.c.l.b16 %v2893
        %v3078 = vunpack.c.h.b16 %v2893
        %v3079 = vunpack.c.l.b16 %v2894
        %v3080 = vunpack.c.h.b16 %v2894
        %v3081 = vunpack.c.l.b16 %v2895
        %v3082 = vunpack.c.h.b16 %v2895
        %v3083 = vunpack.c.l.b16 %v2896
        %v3084 = vunpack.c.h.b16 %v2896
        %v3085 = vunpack.c.l.b16 %v2897
        %v3086 = vunpack.c.h.b16 %v2897
        %v3087 = vunpack.c.l.b16 %v2898
        %v3088 = vunpack.c.h.b16 %v2898
        %v3089 = vunpack.c.l.b16 %v2899
        %v3090 = vunpack.c.h.b16 %v2899
        %v3091 = vunpack.c.l.b16 %v2900
        %v3092 = vunpack.c.h.b16 %v2900
        %v3093 = vunpack.c.l.b16 %v2901
        %v3094 = vunpack.c.h.b16 %v2901
        %v3095 = vunpack.c.l.b16 %v2902
        %v3096 = vunpack.c.h.b16 %v2902
        %v3097 = vunpack.c.l.b16 %v2903
        %v3098 = vunpack.c.h.b16 %v2903
        %v3099 = vunpack.c.l.b16 %v2904
        %v3100 = vunpack.c.h.b16 %v2904
        %v3101 = vunpack.c.l.b16 %v2905
        %v3102 = vunpack.c.h.b16 %v2905
        %v3103 = vunpack.c.l.b16 %v2906
        %v3104 = vunpack.c.h.b16 %v2906
        %v3105 = vpack.c.b16 %v2979, %v2977
        %v3106 = vpack.c.b16 %v2980, %v2978
        %v3107 = vpack.c.b16 %v2983, %v2981
        %v3108 = vpack.c.b16 %v2984, %v2982
        %v3109 = vpack.c.b16 %v2987, %v2985
        %v3110 = vpack.c.b16 %v2988, %v2986
        %v3111 = vpack.c.b16 %v2991, %v2989
        %v3112 = vpack.c.b16 %v2992, %v2990
        %v3113 = vpack.c.b16 %v2995, %v2993
        %v3114 = vpack.c.b16 %v2996, %v2994
        %v3115 = vpack.c.b16 %v2999, %v2997
        %v3116 = vpack.c.b16 %v3000, %v2998
        %v3117 = vpack.c.b16 %v3003, %v3001
        %v3118 = vpack.c.b16 %v3004, %v3002
        %v3119 = vpack.c.b16 %v3007, %v3005
        %v3120 = vpack.c.b16 %v3008, %v3006
        %v3121 = vpack.c.b16 %v3011, %v3009
        %v3122 = vpack.c.b16 %v3012, %v3010
        %v3123 = vpack.c.b16 %v3015, %v3013
        %v3124 = vpack.c.b16 %v3016, %v3014
        %v3125 = vpack.c.b16 %v3019, %v3017
        %v3126 = vpack.c.b16 %v3020, %v3018
        %v3127 = vpack.c.b16 %v3023, %v3021
        %v3128 = vpack.c.b16 %v3024, %v3022
        %v3129 = vpack.c.b16 %v3027, %v3025
        %v3130 = vpack.c.b16 %v3028, %v3026
        %v3131 = vpack.c.b16 %v3031, %v3029
        %v3132 = vpack.c.b16 %v3032, %v3030
        %v3133 = vpack.c.b16 %v3035, %v3033
        %v3134 = vpack.c.b16 %v3036, %v3034
        %v3135 = vpack.c.b16 %v3039, %v3037
        %v3136 = vpack.c.b16 %v3040, %v3038
        %v3137 = vpack.c.b16 %v3043, %v3041
        %v3138 = vpack.c.b16 %v3044, %v3042
        %v3139 = vpack.c.b16 %v3047, %v3045
        %v3140 = vpack.c.b16 %v3048, %v3046
        %v3141 = vpack.c.b16 %v3051, %v3049
        %v3142 = vpack.c.b16 %v3052, %v3050
        %v3143 = vpack.c.b16 %v3055, %v3053
        %v3144 = vpack.c.b16 %v3056, %v3054
        %v3145 = vpack.c.b16 %v3059, %v3057
        %v3146 = vpack.c.b16 %v3060, %v3058
        %v3147 = vpack.c.b16 %v3063, %v3061
        %v3148 = vpack.c.b16 %v3064, %v3062
        %v3149 = vpack.c.b16 %v3067, %v3065
        %v3150 = vpack.c.b16 %v3068, %v3066
        %v3151 = vpack.c.b16 %v3071, %v3069
        %v3152 = vpack.c.b16 %v3072, %v3070
        %v3153 = vpack.c.b16 %v3075, %v3073
        %v3154 = vpack.c.b16 %v3076, %v3074
        %v3155 = vpack.c.b16 %v3079, %v3077
        %v3156 = vpack.c.b16 %v3080, %v3078
        %v3157 = vpack.c.b16 %v3083, %v3081
        %v3158 = vpack.c.b16 %v3084, %v3082
        %v3159 = vpack.c.b16 %v3087, %v3085
        %v3160 = vpack.c.b16 %v3088, %v3086
        %v3161 = vpack.c.b16 %v3091, %v3089
        %v3162 = vpack.c.b16 %v3092, %v3090
        %v3163 = vpack.c.b16 %v3095, %v3093
        %v3164 = vpack.c.b16 %v3096, %v3094
        %v3165 = vpack.c.b16 %v3099, %v3097
        %v3166 = vpack.c.b16 %v3100, %v3098
        %v3167 = vpack.c.b16 %v3103, %v3101
        %v3168 = vpack.c.b16 %v3104, %v3102
        %3233 = vmatpush.bf16.msra.mxu0 %v3119
        %3234 = vmatpush.bf16.msra.mxu0 %v3117
        %3235 = vmatpush.bf16.msra.mxu0 %v3115
        %3236 = vmatpush.bf16.msra.mxu0 %v3113
        %3237 = vmatpush.bf16.msra.mxu0 %v3111
        %3238 = vmatpush.bf16.msra.mxu0 %v3109
        %3239 = vmatpush.bf16.msra.mxu0 %v3107
        %3240 = vmatpush.bf16.msra.mxu0 %v3105
        %3241 = vmatmul.bf16.gmra.mxu0 %v2839
        %v3242 = vpop.f32.mrf.mxu0
        %v3243 = vadd.f32 %v2909, %v3242
        %v3244 = vpop.f32.mrf.mxu0
        %v3245 = vadd.f32 %v2909, %v3244
        %3246 = vdwg.mxu0
        %3247 = vmatpush.bf16.msra.mxu0 %v3135
        %3248 = vmatpush.bf16.msra.mxu0 %v3133
        %3249 = vmatpush.bf16.msra.mxu0 %v3131
        %3250 = vmatpush.bf16.msra.mxu0 %v3129
        %3251 = vmatpush.bf16.msra.mxu0 %v3127
        %3252 = vmatpush.bf16.msra.mxu0 %v3125
        %3253 = vmatpush.bf16.msra.mxu0 %v3123
        %3254 = vmatpush.bf16.msra.mxu0 %v3121
        %3255 = vmatmul.bf16.gmra.mxu0 %v2840
        %v3256 = vpop.f32.mrf.mxu0
        %v3257 = vadd.f32 %v3243, %v3256
        %v3258 = vpop.f32.mrf.mxu0
        %v3259 = vadd.f32 %v3245, %v3258
        %3260 = vdwg.mxu0
        %3261 = vmatpush.bf16.msra.mxu0 %v3151
        %3262 = vmatpush.bf16.msra.mxu0 %v3149
        %3263 = vmatpush.bf16.msra.mxu0 %v3147
        %3264 = vmatpush.bf16.msra.mxu0 %v3145
        %3265 = vmatpush.bf16.msra.mxu0 %v3143
        %3266 = vmatpush.bf16.msra.mxu0 %v3141
        %3267 = vmatpush.bf16.msra.mxu0 %v3139
        %3268 = vmatpush.bf16.msra.mxu0 %v3137
        %3269 = vmatmul.bf16.gmra.mxu0 %v2841
        %v3270 = vpop.f32.mrf.mxu0
        %v3271 = vadd.f32 %v3257, %v3270
        %v3272 = vpop.f32.mrf.mxu0
        %v3273 = vadd.f32 %v3259, %v3272
        %3274 = vdwg.mxu0
        %3275 = vmatpush.bf16.msra.mxu0 %v3167
        %3276 = vmatpush.bf16.msra.mxu0 %v3165
        %3277 = vmatpush.bf16.msra.mxu0 %v3163
        %3278 = vmatpush.bf16.msra.mxu0 %v3161
        %3279 = vmatpush.bf16.msra.mxu0 %v3159
        %3280 = vmatpush.bf16.msra.mxu0 %v3157
        %3281 = vmatpush.bf16.msra.mxu0 %v3155
        %3282 = vmatpush.bf16.msra.mxu0 %v3153
        %3283 = vmatmul.bf16.gmra.mxu0 %v2842
        %v3284 = vpop.f32.mrf.mxu0
        %v3285 = vadd.f32 %v3271, %v3284
        %v3286 = vpop.f32.mrf.mxu0
        %v3287 = vadd.f32 %v3273, %v3286
        %3288 = vdwg.mxu0
        %3289 = vmatpush.bf16.msra.mxu0 %v3120
        %3290 = vmatpush.bf16.msra.mxu0 %v3118
        %3291 = vmatpush.bf16.msra.mxu0 %v3116
        %3292 = vmatpush.bf16.msra.mxu0 %v3114
        %3293 = vmatpush.bf16.msra.mxu0 %v3112
        %3294 = vmatpush.bf16.msra.mxu0 %v3110
        %3295 = vmatpush.bf16.msra.mxu0 %v3108
        %3296 = vmatpush.bf16.msra.mxu0 %v3106
        %3297 = vmatmul.bf16.gmra.mxu0 %v2839
        %v3298 = vpop.f32.mrf.mxu0
        %v3299 = vadd.f32 %v2910, %v3298
        %v3300 = vpop.f32.mrf.mxu0
        %v3301 = vadd.f32 %v2910, %v3300
        %3302 = vdwg.mxu0
        %3303 = vmatpush.bf16.msra.mxu0 %v3136
        %3304 = vmatpush.bf16.msra.mxu0 %v3134
        %3305 = vmatpush.bf16.msra.mxu0 %v3132
        %3306 = vmatpush.bf16.msra.mxu0 %v3130
        %3307 = vmatpush.bf16.msra.mxu0 %v3128
        %3308 = vmatpush.bf16.msra.mxu0 %v3126
        %3309 = vmatpush.bf16.msra.mxu0 %v3124
        %3310 = vmatpush.bf16.msra.mxu0 %v3122
        %3311 = vmatmul.bf16.gmra.mxu0 %v2840
        %v3312 = vpop.f32.mrf.mxu0
        %v3313 = vadd.f32 %v3299, %v3312
        %v3314 = vpop.f32.mrf.mxu0
        %v3315 = vadd.f32 %v3301, %v3314
        %3316 = vdwg.mxu0
        %3317 = vmatpush.bf16.msra.mxu0 %v3152
        %3318 = vmatpush.bf16.msra.mxu0 %v3150
        %3319 = vmatpush.bf16.msra.mxu0 %v3148
        %3320 = vmatpush.bf16.msra.mxu0 %v3146
        %3321 = vmatpush.bf16.msra.mxu0 %v3144
        %3322 = vmatpush.bf16.msra.mxu0 %v3142
        %3323 = vmatpush.bf16.msra.mxu0 %v3140
        %3324 = vmatpush.bf16.msra.mxu0 %v3138
        %3325 = vmatmul.bf16.gmra.mxu0 %v2841
        %v3326 = vpop.f32.mrf.mxu0
        %v3327 = vadd.f32 %v3313, %v3326
        %v3328 = vpop.f32.mrf.mxu0
        %v3329 = vadd.f32 %v3315, %v3328
        %3330 = vdwg.mxu0
        %3331 = vmatpush.bf16.msra.mxu0 %v3168
        %3332 = vmatpush.bf16.msra.mxu0 %v3166
        %3333 = vmatpush.bf16.msra.mxu0 %v3164
        %3334 = vmatpush.bf16.msra.mxu0 %v3162
        %3335 = vmatpush.bf16.msra.mxu0 %v3160
        %3336 = vmatpush.bf16.msra.mxu0 %v3158
        %3337 = vmatpush.bf16.msra.mxu0 %v3156
        %3338 = vmatpush.bf16.msra.mxu0 %v3154
        %3339 = vmatmul.bf16.gmra.mxu0 %v2842
        %v3340 = vpop.f32.mrf.mxu0
        %v3341 = vadd.f32 %v3327, %v3340
        %v3342 = vpop.f32.mrf.mxu0
        %v3343 = vadd.f32 %v3329, %v3342
        %3344 = vdwg.mxu0
        %v3345 = vadd.f32 %v3285, %v2255
        %v3346 = vadd.f32 %v3341, %v2256
        %v3347 = vadd.f32 %v3287, %v2257
        %v3348 = vadd.f32 %v3343, %v2258
        %v3349 = vld [vmem:[%s886] sm:$0x3]
        %v3350 = vld [vmem:[%s890] sm:$0x3]
        %v3351 = vadd.f32 %v3345, %v3346
        %3352 = vadd.xlane.f32.xlu0 %v3351
        %v3353 = vpop.xlane.xlu0 %3352
        %v3354 = vadd.f32 %v3347, %v3348
        %3355 = vadd.xlane.f32.xlu0 %v3354
        %v3356 = vpop.xlane.xlu0 %3355
        %v3357 = vmul.f32 %v3353, %v2196
        %v3358 = vmul.f32 %v3356, %v2196
        %v3359 = vsub.f32 %v3345, %v3357
        %v3360 = vsub.f32 %v3346, %v3357
        %v3361 = vsub.f32 %v3347, %v3358
        %v3362 = vsub.f32 %v3348, %v3358
        %v3363 = vmul.f32 %v3359, %v3359
        %v3364 = vmul.f32 %v3360, %v3360
        %v3365 = vmul.f32 %v3361, %v3361
        %v3366 = vmul.f32 %v3362, %v3362
        %v3367 = vadd.f32 %v3363, %v3364
        %3368 = vadd.xlane.f32.xlu0 %v3367
        %v3369 = vpop.xlane.xlu0 %3368
        %v3370 = vadd.f32 %v3365, %v3366
        %3371 = vadd.xlane.f32.xlu0 %v3370
        %v3372 = vpop.xlane.xlu0 %3371
        %v3373 = vmul.f32 %v3369, %v2196
        %v3374 = vmul.f32 %v3372, %v2196
        %v3375 = vadd.f32 %v3373, 1e-12
        %v3376 = vadd.f32 %v3374, 1e-12
        %v3377 = vrsqrt.pop %v3375
        %v3378 = vmul.f32 %v3377, %v3375
        %v3379 = vmul.f32 %v3378, %v3377
        %v3380 = vmul.f32 0.5, %v3379
        %v3381 = vsub.f32 1.5, %v3380
        %v3382 = vmul.f32 %v3377, %v3381
        %vm3383 = vweird.f32 %v3375
        %vm3384 = vweird.f32 %v3377
        %vm3385 = vmor %vm3383, %vm3384
        %v3386 = vsel %vm3385, %v3377, %v3382
        %v3387 = vrsqrt.pop %v3376
        %v3388 = vmul.f32 %v3387, %v3376
        %v3389 = vmul.f32 %v3388, %v3387
        %v3390 = vmul.f32 0.5, %v3389
        %v3391 = vsub.f32 1.5, %v3390
        %v3392 = vmul.f32 %v3387, %v3391
        %vm3393 = vweird.f32 %v3376
        %vm3394 = vweird.f32 %v3387
        %vm3395 = vmor %vm3393, %vm3394
        %v3396 = vsel %vm3395, %v3387, %v3392
        %v3397 = vmul.f32 %v3359, %v3386
        %v3398 = vmul.f32 %v3360, %v3386
        %v3399 = vmul.f32 %v3361, %v3396
        %v3400 = vmul.f32 %v3362, %v3396
        %v3402 = vperm.slane %v3349, 0
        %v3403 = vperm.slane %v3349, 1
        %v3406 = vmul.f32 %v3397, %v3402
        %v3407 = vmul.f32 %v3398, %v3403
        %v3408 = vmul.f32 %v3399, %v3402
        %v3409 = vmul.f32 %v3400, %v3403
        %v3411 = vperm.slane %v3350, 0
        %v3412 = vperm.slane %v3350, 1
        %v3415 = vadd.f32 %v3406, %v3411
        %v3416 = vadd.f32 %v3407, %v3412
        %v3417 = vadd.f32 %v3408, %v3411
        %v3418 = vadd.f32 %v3409, %v3412
        %3419 = vst [vmem:[#allocation2] sm:$0xff] %v3415
        %3420 = vst [vmem:[#allocation2 + $0x8] sm:$0xff] %v3416
        %3421 = vst [vmem:[#allocation2 + $0x10] sm:$0xff] %v3417
        %3422 = vst [vmem:[#allocation2 + $0x18] sm:$0xff] %v3418
        %p3423 = scmp.eq.s32.totalorder %s38, 1
        // Predicated region
        $region121: #{roberta_classification_forward.1} parent=99 // pred_check
          %p3424 = pneg %p3423
        $region122: #{roberta_classification_forward.1} parent=99 // pred_check_branch
          %3426 = sbr.rel (%p3424) target = $region124
        $region123: #{roberta_classification_forward.1} parent=99 // pred_region
          %v3429 = vrot.slane %v3417, 7
          %v3430 = vrot.slane %v3418, 7
          %vm3433 = vcmask 1040384
          %v3434 = vsel %vm3433, %v3415, %v3429
          %v3435 = vsel %vm3433, %v3416, %v3430
          %v3436 = vpack.c.bf16 %v3434, %v3434
          %v3437 = vpack.c.bf16 %v3435, %v3435
          %v3438 = vld [vmem:[%s16] sm:$0xff]
          %v3439 = vld [vmem:[%s16 + $0x8] sm:$0xff]
          %v3440 = vld [vmem:[%s16 + $0x10] sm:$0xff]
          %v3441 = vld [vmem:[%s16 + $0x18] sm:$0xff]
          %v3442 = vld [vmem:[%s16 + $0x20] sm:$0xff]
          %v3443 = vld [vmem:[%s16 + $0x28] sm:$0xff]
          %v3444 = vld [vmem:[%s16 + $0x30] sm:$0xff]
          %v3445 = vld [vmem:[%s16 + $0x38] sm:$0xff]
          %v3446 = vld [vmem:[%s16 + $0x40] sm:$0xff]
          %v3447 = vld [vmem:[%s16 + $0x48] sm:$0xff]
          %v3448 = vld [vmem:[%s16 + $0x50] sm:$0xff]
          %v3449 = vld [vmem:[%s16 + $0x58] sm:$0xff]
          %v3450 = vld [vmem:[%s16 + $0x60] sm:$0xff]
          %v3451 = vld [vmem:[%s16 + $0x68] sm:$0xff]
          %v3452 = vld [vmem:[%s16 + $0x70] sm:$0xff]
          %v3453 = vld [vmem:[%s16 + $0x78] sm:$0xff]
          %v3454 = vld [vmem:[%s16 + $0x80] sm:$0xff]
          %v3455 = vld [vmem:[%s16 + $0x88] sm:$0xff]
          %v3456 = vld [vmem:[%s16 + $0x90] sm:$0xff]
          %v3457 = vld [vmem:[%s16 + $0x98] sm:$0xff]
          %v3458 = vld [vmem:[%s16 + $0xa0] sm:$0xff]
          %v3459 = vld [vmem:[%s16 + $0xa8] sm:$0xff]
          %v3460 = vld [vmem:[%s16 + $0xb0] sm:$0xff]
          %v3461 = vld [vmem:[%s16 + $0xb8] sm:$0xff]
          %v3462 = vld [vmem:[%s16 + $0xc0] sm:$0xff]
          %v3463 = vld [vmem:[%s16 + $0xc8] sm:$0xff]
          %v3464 = vld [vmem:[%s16 + $0xd0] sm:$0xff]
          %v3465 = vld [vmem:[%s16 + $0xd8] sm:$0xff]
          %v3466 = vld [vmem:[%s16 + $0xe0] sm:$0xff]
          %v3467 = vld [vmem:[%s16 + $0xe8] sm:$0xff]
          %v3468 = vld [vmem:[%s16 + $0xf0] sm:$0xff]
          %v3469 = vld [vmem:[%s16 + $0xf8] sm:$0xff]
          %v3470 = vld [vmem:[%s17] sm:$0x3]
          %v3472 = vperm.slane %v3470, 0
          %v3473 = vperm.slane %v3470, 1
          %v3508 = vunpack.c.l.b16 %v3438
          %v3509 = vunpack.c.h.b16 %v3438
          %v3510 = vunpack.c.l.b16 %v3439
          %v3511 = vunpack.c.h.b16 %v3439
          %v3512 = vunpack.c.l.b16 %v3440
          %v3513 = vunpack.c.h.b16 %v3440
          %v3514 = vunpack.c.l.b16 %v3441
          %v3515 = vunpack.c.h.b16 %v3441
          %v3516 = vunpack.c.l.b16 %v3442
          %v3517 = vunpack.c.h.b16 %v3442
          %v3518 = vunpack.c.l.b16 %v3443
          %v3519 = vunpack.c.h.b16 %v3443
          %v3520 = vunpack.c.l.b16 %v3444
          %v3521 = vunpack.c.h.b16 %v3444
          %v3522 = vunpack.c.l.b16 %v3445
          %v3523 = vunpack.c.h.b16 %v3445
          %v3524 = vunpack.c.l.b16 %v3446
          %v3525 = vunpack.c.h.b16 %v3446
          %v3526 = vunpack.c.l.b16 %v3447
          %v3527 = vunpack.c.h.b16 %v3447
          %v3528 = vunpack.c.l.b16 %v3448
          %v3529 = vunpack.c.h.b16 %v3448
          %v3530 = vunpack.c.l.b16 %v3449
          %v3531 = vunpack.c.h.b16 %v3449
          %v3532 = vunpack.c.l.b16 %v3450
          %v3533 = vunpack.c.h.b16 %v3450
          %v3534 = vunpack.c.l.b16 %v3451
          %v3535 = vunpack.c.h.b16 %v3451
          %v3536 = vunpack.c.l.b16 %v3452
          %v3537 = vunpack.c.h.b16 %v3452
          %v3538 = vunpack.c.l.b16 %v3453
          %v3539 = vunpack.c.h.b16 %v3453
          %v3540 = vunpack.c.l.b16 %v3454
          %v3541 = vunpack.c.h.b16 %v3454
          %v3542 = vunpack.c.l.b16 %v3455
          %v3543 = vunpack.c.h.b16 %v3455
          %v3544 = vunpack.c.l.b16 %v3456
          %v3545 = vunpack.c.h.b16 %v3456
          %v3546 = vunpack.c.l.b16 %v3457
          %v3547 = vunpack.c.h.b16 %v3457
          %v3548 = vunpack.c.l.b16 %v3458
          %v3549 = vunpack.c.h.b16 %v3458
          %v3550 = vunpack.c.l.b16 %v3459
          %v3551 = vunpack.c.h.b16 %v3459
          %v3552 = vunpack.c.l.b16 %v3460
          %v3553 = vunpack.c.h.b16 %v3460
          %v3554 = vunpack.c.l.b16 %v3461
          %v3555 = vunpack.c.h.b16 %v3461
          %v3556 = vunpack.c.l.b16 %v3462
          %v3557 = vunpack.c.h.b16 %v3462
          %v3558 = vunpack.c.l.b16 %v3463
          %v3559 = vunpack.c.h.b16 %v3463
          %v3560 = vunpack.c.l.b16 %v3464
          %v3561 = vunpack.c.h.b16 %v3464
          %v3562 = vunpack.c.l.b16 %v3465
          %v3563 = vunpack.c.h.b16 %v3465
          %v3564 = vunpack.c.l.b16 %v3466
          %v3565 = vunpack.c.h.b16 %v3466
          %v3566 = vunpack.c.l.b16 %v3467
          %v3567 = vunpack.c.h.b16 %v3467
          %v3568 = vunpack.c.l.b16 %v3468
          %v3569 = vunpack.c.h.b16 %v3468
          %v3570 = vunpack.c.l.b16 %v3469
          %v3571 = vunpack.c.h.b16 %v3469
          %v3572 = vpack.c.b16 %v3510, %v3508
          %v3573 = vpack.c.b16 %v3511, %v3509
          %v3574 = vpack.c.b16 %v3514, %v3512
          %v3575 = vpack.c.b16 %v3515, %v3513
          %v3576 = vpack.c.b16 %v3518, %v3516
          %v3577 = vpack.c.b16 %v3519, %v3517
          %v3578 = vpack.c.b16 %v3522, %v3520
          %v3579 = vpack.c.b16 %v3523, %v3521
          %v3580 = vpack.c.b16 %v3526, %v3524
          %v3581 = vpack.c.b16 %v3527, %v3525
          %v3582 = vpack.c.b16 %v3530, %v3528
          %v3583 = vpack.c.b16 %v3531, %v3529
          %v3584 = vpack.c.b16 %v3534, %v3532
          %v3585 = vpack.c.b16 %v3535, %v3533
          %v3586 = vpack.c.b16 %v3538, %v3536
          %v3587 = vpack.c.b16 %v3539, %v3537
          %v3588 = vpack.c.b16 %v3542, %v3540
          %v3589 = vpack.c.b16 %v3543, %v3541
          %v3590 = vpack.c.b16 %v3546, %v3544
          %v3591 = vpack.c.b16 %v3547, %v3545
          %v3592 = vpack.c.b16 %v3550, %v3548
          %v3593 = vpack.c.b16 %v3551, %v3549
          %v3594 = vpack.c.b16 %v3554, %v3552
          %v3595 = vpack.c.b16 %v3555, %v3553
          %v3596 = vpack.c.b16 %v3558, %v3556
          %v3597 = vpack.c.b16 %v3559, %v3557
          %v3598 = vpack.c.b16 %v3562, %v3560
          %v3599 = vpack.c.b16 %v3563, %v3561
          %v3600 = vpack.c.b16 %v3566, %v3564
          %v3601 = vpack.c.b16 %v3567, %v3565
          %v3602 = vpack.c.b16 %v3570, %v3568
          %v3603 = vpack.c.b16 %v3571, %v3569
          %3636 = vmatpush.bf16.msra.mxu0 %v3586
          %3637 = vmatpush.bf16.msra.mxu0 %v3584
          %3638 = vmatpush.bf16.msra.mxu0 %v3582
          %3639 = vmatpush.bf16.msra.mxu0 %v3580
          %3640 = vmatpush.bf16.msra.mxu0 %v3578
          %3641 = vmatpush.bf16.msra.mxu0 %v3576
          %3642 = vmatpush.bf16.msra.mxu0 %v3574
          %3643 = vmatpush.bf16.msra.mxu0 %v3572
          %3644 = vmatmul.bf16.gmra.mxu0 %v3436
          %v3645 = vpop.f32.mrf.mxu0
          %v3646 = vadd.f32 %v3472, %v3645
          %v3647 = vpop.f32.mrf.mxu0
          %3648 = vdwg.mxu0
          %3649 = vmatpush.bf16.msra.mxu0 %v3602
          %3650 = vmatpush.bf16.msra.mxu0 %v3600
          %3651 = vmatpush.bf16.msra.mxu0 %v3598
          %3652 = vmatpush.bf16.msra.mxu0 %v3596
          %3653 = vmatpush.bf16.msra.mxu0 %v3594
          %3654 = vmatpush.bf16.msra.mxu0 %v3592
          %3655 = vmatpush.bf16.msra.mxu0 %v3590
          %3656 = vmatpush.bf16.msra.mxu0 %v3588
          %3657 = vmatmul.bf16.gmra.mxu0 %v3437
          %v3658 = vpop.f32.mrf.mxu0
          %v3659 = vadd.f32 %v3646, %v3658
          %v3660 = vpop.f32.mrf.mxu0
          %3661 = vdwg.mxu0
          %3662 = vmatpush.bf16.msra.mxu0 %v3587
          %3663 = vmatpush.bf16.msra.mxu0 %v3585
          %3664 = vmatpush.bf16.msra.mxu0 %v3583
          %3665 = vmatpush.bf16.msra.mxu0 %v3581
          %3666 = vmatpush.bf16.msra.mxu0 %v3579
          %3667 = vmatpush.bf16.msra.mxu0 %v3577
          %3668 = vmatpush.bf16.msra.mxu0 %v3575
          %3669 = vmatpush.bf16.msra.mxu0 %v3573
          %3670 = vmatmul.bf16.gmra.mxu0 %v3436
          %v3671 = vpop.f32.mrf.mxu0
          %v3672 = vadd.f32 %v3473, %v3671
          %v3673 = vpop.f32.mrf.mxu0
          %3674 = vdwg.mxu0
          %3675 = vmatpush.bf16.msra.mxu0 %v3603
          %3676 = vmatpush.bf16.msra.mxu0 %v3601
          %3677 = vmatpush.bf16.msra.mxu0 %v3599
          %3678 = vmatpush.bf16.msra.mxu0 %v3597
          %3679 = vmatpush.bf16.msra.mxu0 %v3595
          %3680 = vmatpush.bf16.msra.mxu0 %v3593
          %3681 = vmatpush.bf16.msra.mxu0 %v3591
          %3682 = vmatpush.bf16.msra.mxu0 %v3589
          %3683 = vmatmul.bf16.gmra.mxu0 %v3437
          %v3684 = vpop.f32.mrf.mxu0
          %v3685 = vadd.f32 %v3672, %v3684
          %v3686 = vpop.f32.mrf.mxu0
          %3687 = vdwg.mxu0
          %v3688 = vtanh.pop %v3659
          %v3689 = vtanh.pop %v3685
          %v3690 = vpack.c.bf16 %v3688, %v3688
          %v3691 = vpack.c.bf16 %v3689, %v3689
          %v3692 = vld [vmem:[#allocation8] sm:$0xf]
          %v3693 = vld [vmem:[#allocation8 + $0x4] sm:$0xf]
          %v3694 = vld [vmem:[#allocation8 + $0x8] sm:$0xf]
          %v3695 = vld [vmem:[#allocation8 + $0xc] sm:$0xf]
          %v3696 = vld [vmem:[#allocation8 + $0x10] sm:$0xf]
          %v3697 = vld [vmem:[#allocation8 + $0x14] sm:$0xf]
          %v3698 = vld [vmem:[#allocation8 + $0x18] sm:$0xf]
          %v3699 = vld [vmem:[#allocation8 + $0x1c] sm:$0xf]
          %v3700 = vld [vmem:[#allocation8 + $0x20] sm:$0xf]
          %v3701 = vld [vmem:[#allocation8 + $0x24] sm:$0xf]
          %v3702 = vld [vmem:[#allocation8 + $0x28] sm:$0xf]
          %v3703 = vld [vmem:[#allocation8 + $0x2c] sm:$0xf]
          %v3704 = vld [vmem:[#allocation8 + $0x30] sm:$0xf]
          %v3705 = vld [vmem:[#allocation8 + $0x34] sm:$0xf]
          %v3706 = vld [vmem:[#allocation8 + $0x38] sm:$0xf]
          %v3707 = vld [vmem:[#allocation8 + $0x3c] sm:$0xf]
          %v3708 = vld [vmem:[#allocation8 + $0x40] sm:$0xf]
          %v3709 = vld [vmem:[#allocation8 + $0x44] sm:$0xf]
          %v3710 = vld [vmem:[#allocation8 + $0x48] sm:$0xf]
          %v3711 = vld [vmem:[#allocation8 + $0x4c] sm:$0xf]
          %v3712 = vld [vmem:[#allocation8 + $0x50] sm:$0xf]
          %v3713 = vld [vmem:[#allocation8 + $0x54] sm:$0xf]
          %v3714 = vld [vmem:[#allocation8 + $0x58] sm:$0xf]
          %v3715 = vld [vmem:[#allocation8 + $0x5c] sm:$0xf]
          %v3716 = vld [vmem:[#allocation8 + $0x60] sm:$0xf]
          %v3717 = vld [vmem:[#allocation8 + $0x64] sm:$0xf]
          %v3718 = vld [vmem:[#allocation8 + $0x68] sm:$0xf]
          %v3719 = vld [vmem:[#allocation8 + $0x6c] sm:$0xf]
          %v3720 = vld [vmem:[#allocation8 + $0x70] sm:$0xf]
          %v3721 = vld [vmem:[#allocation8 + $0x74] sm:$0xf]
          %v3722 = vld [vmem:[#allocation8 + $0x78] sm:$0xf]
          %v3723 = vld [vmem:[#allocation8 + $0x7c] sm:$0xf]
          %v3724 = vld [vmem:[%s19] sm:$0x1]
          %v3726 = vperm.slane %v3724, 0
          %v3760 = vunpack.c.l.b16 %v3692
          %v3761 = vunpack.c.l.b16 %v3693
          %v3762 = vunpack.c.l.b16 %v3694
          %v3763 = vunpack.c.l.b16 %v3695
          %v3764 = vunpack.c.l.b16 %v3696
          %v3765 = vunpack.c.l.b16 %v3697
          %v3766 = vunpack.c.l.b16 %v3698
          %v3767 = vunpack.c.l.b16 %v3699
          %v3768 = vunpack.c.l.b16 %v3700
          %v3769 = vunpack.c.l.b16 %v3701
          %v3770 = vunpack.c.l.b16 %v3702
          %v3771 = vunpack.c.l.b16 %v3703
          %v3772 = vunpack.c.l.b16 %v3704
          %v3773 = vunpack.c.l.b16 %v3705
          %v3774 = vunpack.c.l.b16 %v3706
          %v3775 = vunpack.c.l.b16 %v3707
          %v3776 = vunpack.c.l.b16 %v3708
          %v3777 = vunpack.c.l.b16 %v3709
          %v3778 = vunpack.c.l.b16 %v3710
          %v3779 = vunpack.c.l.b16 %v3711
          %v3780 = vunpack.c.l.b16 %v3712
          %v3781 = vunpack.c.l.b16 %v3713
          %v3782 = vunpack.c.l.b16 %v3714
          %v3783 = vunpack.c.l.b16 %v3715
          %v3784 = vunpack.c.l.b16 %v3716
          %v3785 = vunpack.c.l.b16 %v3717
          %v3786 = vunpack.c.l.b16 %v3718
          %v3787 = vunpack.c.l.b16 %v3719
          %v3788 = vunpack.c.l.b16 %v3720
          %v3789 = vunpack.c.l.b16 %v3721
          %v3790 = vunpack.c.l.b16 %v3722
          %v3791 = vunpack.c.l.b16 %v3723
          %v3792 = vpack.c.b16 %v3761, %v3760
          %v3793 = vpack.c.b16 %v3763, %v3762
          %v3794 = vpack.c.b16 %v3765, %v3764
          %v3795 = vpack.c.b16 %v3767, %v3766
          %v3796 = vpack.c.b16 %v3769, %v3768
          %v3797 = vpack.c.b16 %v3771, %v3770
          %v3798 = vpack.c.b16 %v3773, %v3772
          %v3799 = vpack.c.b16 %v3775, %v3774
          %v3800 = vpack.c.b16 %v3777, %v3776
          %v3801 = vpack.c.b16 %v3779, %v3778
          %v3802 = vpack.c.b16 %v3781, %v3780
          %v3803 = vpack.c.b16 %v3783, %v3782
          %v3804 = vpack.c.b16 %v3785, %v3784
          %v3805 = vpack.c.b16 %v3787, %v3786
          %v3806 = vpack.c.b16 %v3789, %v3788
          %v3807 = vpack.c.b16 %v3791, %v3790
          %3824 = vmatpush.bf16.msra.mxu0 %v3799
          %3825 = vmatpush.bf16.msra.mxu0 %v3798
          %3826 = vmatpush.bf16.msra.mxu0 %v3797
          %3827 = vmatpush.bf16.msra.mxu0 %v3796
          %3828 = vmatpush.bf16.msra.mxu0 %v3795
          %3829 = vmatpush.bf16.msra.mxu0 %v3794
          %3830 = vmatpush.bf16.msra.mxu0 %v3793
          %3831 = vmatpush.bf16.msra.mxu0 %v3792
          %3832 = vmatmul.bf16.gmra.mxu0 %v3690
          %v3833 = vpop.f32.mrf.mxu0
          %v3834 = vadd.f32 %v3726, %v3833
          %v3835 = vpop.f32.mrf.mxu0
          %3836 = vdwg.mxu0
          %3837 = vmatpush.bf16.msra.mxu0 %v3807
          %3838 = vmatpush.bf16.msra.mxu0 %v3806
          %3839 = vmatpush.bf16.msra.mxu0 %v3805
          %3840 = vmatpush.bf16.msra.mxu0 %v3804
          %3841 = vmatpush.bf16.msra.mxu0 %v3803
          %3842 = vmatpush.bf16.msra.mxu0 %v3802
          %3843 = vmatpush.bf16.msra.mxu0 %v3801
          %3844 = vmatpush.bf16.msra.mxu0 %v3800
          %3845 = vmatmul.bf16.gmra.mxu0 %v3691
          %v3846 = vpop.f32.mrf.mxu0
          %v3847 = vadd.f32 %v3834, %v3846
          %v3848 = vpop.f32.mrf.mxu0
          %3849 = vdwg.mxu0
          %3850 = vst [vmem:[%s20] sm:$0x3] %v3847
        $region124: #{roberta_classification_forward.1} parent=99 // pred_fallthru
          _
        // Predicated region
        $region125: #{roberta_classification_forward.1} parent=99 // pred_check
          %p3851 = pneg %p531
        $region126: #{roberta_classification_forward.1} parent=99 // pred_check_branch
          %3853 = sbr.rel (%p3851) target = $region128
        $region127: #{roberta_classification_forward.1} parent=99 // pred_region
          _
        $region128: #{roberta_classification_forward.1} parent=99 // pred_fallthru
          _
        // Predicated region
        $region129: #{roberta_classification_forward.1} parent=99 // pred_check
          %p3854 = pneg %p531
        $region130: #{roberta_classification_forward.1} parent=99 // pred_check_branch
          %3856 = sbr.rel (%p3854) target = $region132
        $region131: #{roberta_classification_forward.1} parent=99 // pred_region
          _
        $region132: #{roberta_classification_forward.1} parent=99 // pred_fallthru
          _
      $region100: #{roberta_classification_forward.1} parent=5 // pred_fallthru
        _
      %p3857 = scmp.le.s32.totalorder 2, %s33
      // Predicated region
      $region133: #{roberta_classification_forward.1} parent=5 // pred_check
        %p3858 = pneg %p3857
      $region134: #{roberta_classification_forward.1} parent=5 // pred_check_branch
        %3860 = sbr.rel (%p3858) target = $region136
      $region135: #{roberta_classification_forward.1} parent=5 // pred_region
        %s3861 = ssub.s32 %s33, 2
      $region136: #{roberta_classification_forward.1} parent=5 // pred_fallthru
        _
    $region6: #{roberta_classification_forward.1} parent=1 // loop_footer
      %s37 = sadd.s32 1, %s33
    $region7: #{roberta_classification_forward.1} parent=1 // loop_footer_branch
      %32 = sbr.rel target = $region3
    $region8: #{roberta_classification_forward.1} parent=1 // loop_exit
      _
    %3862 = vsyncpa [#allocation4], 1
    %s3863 = scalar_lea.sflag [#allocation4], 1
    %3864 = vsyncpa %s3863, 1
    %3865 = vsyncpa [#allocation6], 1
    %s3866 = scalar_lea.sflag [#allocation6], 1
    %3867 = vsyncpa %s3866, 1
    %3868 = vsyncpa [#allocation9], 1

</llo_original>
